<compile_context>
chip_gen: v7x
topology: tpu7x:2x2x1
jax: 0.10.0
libtpu: 0.0.40
codegen_flags: <defaults>
</compile_context>

<pallas_src>
import jax
import jax.numpy as jnp
from jax.experimental import pallas as pl
from jax.experimental.pallas import tpu as pltpu

_LANE = 128
_VMEM_LIMIT = 32 * 1024 * 1024   # safe on v5e / v6e / v7x scoped VMEM


def _round_up(x, m):
    return (x + m - 1) // m * m


def _pad2d(a, rows, cols, fill=0.0):
    r, c = a.shape
    return jnp.pad(a, ((0, rows - r), (0, cols - c)), constant_values=fill)


# ----------------------------- Pallas kernels ------------------------------

def _conv_relu_pool_kernel(x0_ref, x1_ref, x2_ref, x3_ref, w_ref, b_ref, o_ref):
    """4 im2col slabs (one per 2x2 pool offset): relu(dot+bias) then 4-way max.

    Inputs are bf16 (MXU), accumulation and epilogue are f32, output is lane-dense.
    """
    w = w_ref[...]
    b = b_ref[...]

    def branch(x_ref):
        y = jnp.dot(x_ref[...], w, preferred_element_type=jnp.float32)
        return jnp.maximum(y + b, 0.0)

    o_ref[...] = jnp.maximum(jnp.maximum(branch(x0_ref), branch(x1_ref)),
                             jnp.maximum(branch(x2_ref), branch(x3_ref)))


def _mlp_head_kernel(x_ref, w1_ref, b1_ref, w2_ref, b2_ref, o_ref):
    """Fused fc1 + ReLU + fc2 + log_softmax.  Padded fc2 columns carry bias=-1e30."""
    h = jnp.dot(x_ref[...], w1_ref[...], preferred_element_type=jnp.float32)
    h = jnp.maximum(h + b1_ref[...], 0.0)
    z = jnp.dot(h.astype(jnp.bfloat16), w2_ref[...],
                preferred_element_type=jnp.float32)
    z = z + b2_ref[...]
    m = jnp.max(z, axis=-1, keepdims=True)
    s = z - m
    lse = jnp.log(jnp.sum(jnp.exp(s), axis=-1, keepdims=True))
    o_ref[...] = s - lse


def _compiler_params():
    return pltpu.CompilerParams(dimension_semantics=("parallel",),
                                vmem_limit_bytes=_VMEM_LIMIT)


# ------------------------------ Pallas wrappers -----------------------------

def conv_relu_pool(x_nhwc, w_pad, b_pad, n_out):
    """valid 5x5 conv (stride 1) + ReLU + 2x2/2 max-pool; NHWC in -> NHWC out."""
    B, H, W, C = x_nhwc.shape
    kh = kw = 5
    Ho, Wo = H - kh + 1, W - kw + 1
    Hp, Wp = Ho // 2, Wo // 2
    K = C * kh * kw
    Kp, Np = w_pad.shape

    # One fused XLA op builds all patches; feature ordering is (c, ki, kj), which
    # matches torch's OIHW weight reshape used in prepare_params.
    patches = jax.lax.conv_general_dilated_patches(
        x_nhwc, (kh, kw), (1, 1), "VALID",
        dimension_numbers=("NHWC", "HWIO", "NHWC"))            # [B, Ho, Wo, K]
    pr = patches.reshape(B, Hp, 2, Wp, 2, K)

    M = B * Hp * Wp
    tm = min(512, _round_up(M, 8))
    Mp = _round_up(M, tm)

    slabs = []
    for di in (0, 1):
        for dj in (0, 1):
            s = pr[:, :, di, :, dj, :].reshape(M, K)
            slabs.append(_pad2d(s, Mp, Kp).astype(jnp.bfloat16))

    slab_spec = pl.BlockSpec((tm, Kp), lambda i: (i, 0))
    out = pl.pallas_call(
        _conv_relu_pool_kernel,
        out_shape=jax.ShapeDtypeStruct((Mp, Np), jnp.float32),
        grid=(Mp // tm,),
        in_specs=[slab_spec, slab_spec, slab_spec, slab_spec,
                  pl.BlockSpec((Kp, Np), lambda i: (0, 0)),     # weight, constant
                  pl.BlockSpec((1, Np), lambda i: (0, 0))],     # bias, constant
        out_specs=pl.BlockSpec((tm, Np), lambda i: (i, 0)),
        compiler_params=_compiler_params(),
    )(*slabs, w_pad, b_pad)

    return out[:M, :n_out].reshape(B, Hp, Wp, n_out)


def mlp_head(x, w1_pad, b1_pad, w2_pad, b2_pad):
    M, K = x.shape
    K1, N1 = w1_pad.shape
    _, N2 = w2_pad.shape
    assert K == K1
    tm = min(256, _round_up(M, 8))
    Mp = _round_up(M, tm)
    xp = _pad2d(x, Mp, K).astype(jnp.bfloat16)

    out = pl.pallas_call(
        _mlp_head_kernel,
        out_shape=jax.ShapeDtypeStruct((Mp, N2), jnp.float32),
        grid=(Mp // tm,),
        in_specs=[pl.BlockSpec((tm, K), lambda i: (i, 0)),
                  pl.BlockSpec((K, N1), lambda i: (0, 0)),
                  pl.BlockSpec((1, N1), lambda i: (0, 0)),
                  pl.BlockSpec((N1, N2), lambda i: (0, 0)),
                  pl.BlockSpec((1, N2), lambda i: (0, 0))],
        out_specs=pl.BlockSpec((tm, N2), lambda i: (i, 0)),
        compiler_params=_compiler_params(),
    )(xp, w1_pad, b1_pad, w2_pad, b2_pad)
    return out[:M]


# ------------------------------- forward pass -------------------------------

def net_forward(x_nchw, prep):
    B = x_nchw.shape[0]
    x = jnp.transpose(x_nchw, (0, 2, 3, 1)).astype(jnp.float32)        # NHWC
    x = conv_relu_pool(x, prep["conv1_w"], prep["conv1_b"], 20)        # [B,12,12,20]
    x = conv_relu_pool(x, prep["conv2_w"], prep["conv2_b"], 50)        # [B, 4, 4,50]
    x = x.reshape(B, 4 * 4 * 50)     # NHWC flatten; fc1_w rows were pre-permuted to match
    logp = mlp_head(x, prep["fc1_w"], prep["fc1_b"],
                    prep["fc2_w"], prep["fc2_b"])                      # [B,128]
    return logp[:, :10]


# -------------------------- params & pure-JAX reference ----------------------

def init_params(key):
    ks = jax.random.split(key, 8)
    s = 0.05
    return {
        "conv1_w": s * jax.random.normal(ks[0], (20, 1, 5, 5), jnp.float32),
        "conv1_b": s * jax.random.normal(ks[1], (20,), jnp.float32),
        "conv2_w": s * jax.random.normal(ks[2], (50, 20, 5, 5), jnp.float32),
        "conv2_b": s * jax.random.normal(ks[3], (50,), jnp.float32),
        "fc1_w": s * jax.random.normal(ks[4], (500, 800), jnp.float32),
        "fc1_b": s * jax.random.normal(ks[5], (500,), jnp.float32),
        "fc2_w": s * jax.random.normal(ks[6], (10, 500), jnp.float32),
        "fc2_b": s * jax.random.normal(ks[7], (10,), jnp.float32),
    }


def prepare_params(params):
    """One-time conversion of torch-layout params to padded bf16 kernel layout."""
    # conv weights: OIHW -> [C*kh*kw, O]; K and N zero-padded to lane multiples.
    c1w = _pad2d(params["conv1_w"].reshape(20, 25).T, 128, _LANE).astype(jnp.bfloat16)
    c1b = _pad2d(params["conv1_b"].reshape(1, 20), 1, _LANE).astype(jnp.float32)
    c2w = _pad2d(params["conv2_w"].reshape(50, 500).T, 512, _LANE).astype(jnp.bfloat16)
    c2b = _pad2d(params["conv2_b"].reshape(1, 50), 1, _LANE).astype(jnp.float32)
    # fc1: permute rows from torch's (c,h,w) flatten order to NHWC (h,w,c) order.
    f1w = params["fc1_w"].reshape(500, 50, 4, 4).transpose(2, 3, 1, 0).reshape(800, 500)
    f1w = _pad2d(f1w, 800, 512).astype(jnp.bfloat16)
    f1b = _pad2d(params["fc1_b"].reshape(1, 500), 1, 512).astype(jnp.float32)
    # fc2: K 500->512 (zero rows line up with fc1's zero-padded outputs), N 10->128;
    # padded bias columns = -1e30 so padded logits vanish in the log-softmax.
    f2w = _pad2d(params["fc2_w"].T, 512, _LANE).astype(jnp.bfloat16)
    f2b = _pad2d(params["fc2_b"].reshape(1, 10), 1, _LANE, fill=-1e30).astype(jnp.float32)
    return {"conv1_w": c1w, "conv1_b": c1b, "conv2_w": c2w, "conv2_b": c2b,
            "fc1_w": f1w, "fc1_b": f1b, "fc2_w": f2w, "fc2_b": f2b}


def reference_forward(x_nchw, params):
    """Pure-JAX f32 reference mirroring the PyTorch module exactly."""
    dn = ("NCHW", "OIHW", "NCHW")
    y = jax.lax.conv_general_dilated(x_nchw, params["conv1_w"], (1, 1), "VALID",
                                     dimension_numbers=dn)
    y = jnp.maximum(y + params["conv1_b"][None, :, None, None], 0.0)
    y = jax.lax.reduce_window(y, -jnp.inf, jax.lax.max, (1, 1, 2, 2), (1, 1, 2, 2), "VALID")
    y = jax.lax.conv_general_dilated(y, params["conv2_w"], (1, 1), "VALID",
                                     dimension_numbers=dn)
    y = jnp.maximum(y + params["conv2_b"][None, :, None, None], 0.0)
    y = jax.lax.reduce_window(y, -jnp.inf, jax.lax.max, (1, 1, 2, 2), (1, 1, 2, 2), "VALID")
    y = y.reshape(y.shape[0], -1)                       # torch view order (c, h, w)
    y = jnp.maximum(y @ params["fc1_w"].T + params["fc1_b"], 0.0)
    z = y @ params["fc2_w"].T + params["fc2_b"]
    return jax.nn.log_softmax(z, axis=-1)


if __name__ == "__main__":
    key = jax.random.PRNGKey(0)
    pkey, xkey = jax.random.split(key)
    params = init_params(pkey)
    prep = prepare_params(params)        # one-time permutation / padding / bf16 cast

    # 28x28 input is implied by the module's view(-1, 4*4*50); batch = 2.
    x = jax.random.normal(xkey, (2, 1, 28, 28), jnp.float32)

    fwd = jax.jit(net_forward)
    out = jax.block_until_ready(fwd(x, prep))

    assert out.shape == (2, 10) and out.dtype == jnp.float32
    row_sums = jnp.exp(out).sum(axis=1)              # log_softmax rows sum to 1
    assert bool(jnp.all(jnp.abs(row_sums - 1.0) < 1e-3))

    ref = reference_forward(x, params)               # f32 reference vs bf16-MXU kernels
    max_diff = float(jnp.max(jnp.abs(out - ref)))
    assert max_diff < 0.1, f"mismatch vs reference: {max_diff}"

    print("KERNEL_OK")
</pallas_src>

<mosaic_0001>
module attributes {stable_mosaic.version = 11 : i64} {
  func.func @_conv_relu_pool_kernel(%arg0: i32, %arg1: memref<288x128xbf16, #tpu.memory_space<vmem>>, %arg2: memref<288x128xbf16, #tpu.memory_space<vmem>>, %arg3: memref<288x128xbf16, #tpu.memory_space<vmem>>, %arg4: memref<288x128xbf16, #tpu.memory_space<vmem>>, %arg5: memref<128x128xbf16, #tpu.memory_space<vmem>>, %arg6: memref<1x128xf32, #tpu.memory_space<vmem>>, %arg7: memref<288x128xf32, #tpu.memory_space<vmem>>) attributes {dimension_semantics = [#tpu.dimension_semantics<parallel>], iteration_bounds = array<i64: 1>, scalar_prefetch = 0 : i64, scratch_operands = 0 : i64, tpu.core_type = #tpu.core_type<tc>, window_params = [{transform_indices = @transform_0, window_bounds = array<i64: 288, 128>}, {transform_indices = @transform_1, window_bounds = array<i64: 288, 128>}, {transform_indices = @transform_2, window_bounds = array<i64: 288, 128>}, {transform_indices = @transform_3, window_bounds = array<i64: 288, 128>}, {pipeline_mode = #tpu.pipeline_mode<synchronous>, transform_indices = @transform_4, window_bounds = array<i64: 128, 128>}, {pipeline_mode = #tpu.pipeline_mode<synchronous>, transform_indices = @transform_5, window_bounds = array<i64: 1, 128>}, {transform_indices = @transform_6, window_bounds = array<i64: 288, 128>}]} {
    %c0 = arith.constant 0 : index
    %c0_0 = arith.constant 0 : index
    %0 = vector.load %arg5[%c0, %c0_0] : memref<128x128xbf16, #tpu.memory_space<vmem>>, vector<128x128xbf16>
    %c0_1 = arith.constant 0 : index
    %c0_2 = arith.constant 0 : index
    %1 = vector.load %arg6[%c0_1, %c0_2] : memref<1x128xf32, #tpu.memory_space<vmem>>, vector<1x128xf32>
    %c0_3 = arith.constant 0 : index
    %c0_4 = arith.constant 0 : index
    %2 = vector.load %arg1[%c0_3, %c0_4] : memref<288x128xbf16, #tpu.memory_space<vmem>>, vector<288x128xbf16>
    %cst = arith.constant dense<0.000000e+00> : vector<288x128xf32>
    %3 = tpu.matmul %2, %0, %cst {dimension_numbers = #tpu.dot_dimension_numbers<[1], [0], [0], [1], [0, 0, 1, 1], [], []>} : vector<288x128xbf16>, vector<128x128xbf16>, vector<288x128xf32> -> vector<288x128xf32>
    %4 = vector.broadcast %1 : vector<1x128xf32> to vector<288x128xf32>
    %5 = arith.addf %3, %4 : vector<288x128xf32>
    %cst_5 = arith.constant 0.000000e+00 : f32
    %6 = vector.broadcast %cst_5 : f32 to vector<288x128xf32>
    %7 = arith.maximumf %5, %6 : vector<288x128xf32>
    %c0_6 = arith.constant 0 : index
    %c0_7 = arith.constant 0 : index
    %8 = vector.load %arg2[%c0_6, %c0_7] : memref<288x128xbf16, #tpu.memory_space<vmem>>, vector<288x128xbf16>
    %cst_8 = arith.constant dense<0.000000e+00> : vector<288x128xf32>
    %9 = tpu.matmul %8, %0, %cst_8 {dimension_numbers = #tpu.dot_dimension_numbers<[1], [0], [0], [1], [0, 0, 1, 1], [], []>} : vector<288x128xbf16>, vector<128x128xbf16>, vector<288x128xf32> -> vector<288x128xf32>
    %10 = vector.broadcast %1 : vector<1x128xf32> to vector<288x128xf32>
    %11 = arith.addf %9, %10 : vector<288x128xf32>
    %cst_9 = arith.constant 0.000000e+00 : f32
    %12 = vector.broadcast %cst_9 : f32 to vector<288x128xf32>
    %13 = arith.maximumf %11, %12 : vector<288x128xf32>
    %14 = arith.maximumf %7, %13 : vector<288x128xf32>
    %c0_10 = arith.constant 0 : index
    %c0_11 = arith.constant 0 : index
    %15 = vector.load %arg3[%c0_10, %c0_11] : memref<288x128xbf16, #tpu.memory_space<vmem>>, vector<288x128xbf16>
    %cst_12 = arith.constant dense<0.000000e+00> : vector<288x128xf32>
    %16 = tpu.matmul %15, %0, %cst_12 {dimension_numbers = #tpu.dot_dimension_numbers<[1], [0], [0], [1], [0, 0, 1, 1], [], []>} : vector<288x128xbf16>, vector<128x128xbf16>, vector<288x128xf32> -> vector<288x128xf32>
    %17 = vector.broadcast %1 : vector<1x128xf32> to vector<288x128xf32>
    %18 = arith.addf %16, %17 : vector<288x128xf32>
    %cst_13 = arith.constant 0.000000e+00 : f32
    %19 = vector.broadcast %cst_13 : f32 to vector<288x128xf32>
    %20 = arith.maximumf %18, %19 : vector<288x128xf32>
    %c0_14 = arith.constant 0 : index
    %c0_15 = arith.constant 0 : index
    %21 = vector.load %arg4[%c0_14, %c0_15] : memref<288x128xbf16, #tpu.memory_space<vmem>>, vector<288x128xbf16>
    %cst_16 = arith.constant dense<0.000000e+00> : vector<288x128xf32>
    %22 = tpu.matmul %21, %0, %cst_16 {dimension_numbers = #tpu.dot_dimension_numbers<[1], [0], [0], [1], [0, 0, 1, 1], [], []>} : vector<288x128xbf16>, vector<128x128xbf16>, vector<288x128xf32> -> vector<288x128xf32>
    %23 = vector.broadcast %1 : vector<1x128xf32> to vector<288x128xf32>
    %24 = arith.addf %22, %23 : vector<288x128xf32>
    %cst_17 = arith.constant 0.000000e+00 : f32
    %25 = vector.broadcast %cst_17 : f32 to vector<288x128xf32>
    %26 = arith.maximumf %24, %25 : vector<288x128xf32>
    %27 = arith.maximumf %20, %26 : vector<288x128xf32>
    %28 = arith.maximumf %14, %27 : vector<288x128xf32>
    %c0_18 = arith.constant 0 : index
    %c0_19 = arith.constant 0 : index
    %29 = vector.load %arg7[%c0_18, %c0_19] : memref<288x128xf32, #tpu.memory_space<vmem>>, vector<288x128xf32>
    tpu.vector_store %arg7[%c0_18, %c0_19], %28 {strides = array<i32>} : memref<288x128xf32, #tpu.memory_space<vmem>>, vector<288x128xf32>,
    return
  }
  func.func @transform_0(%arg0: i32) -> (i32, i32) {
    %c0_i32 = arith.constant 0 : i32
    %c0_i32_0 = arith.constant 0 : i32
    return %arg0, %c0_i32 : i32, i32
  }
  func.func @transform_1(%arg0: i32) -> (i32, i32) {
    %c0_i32 = arith.constant 0 : i32
    %c0_i32_0 = arith.constant 0 : i32
    return %arg0, %c0_i32 : i32, i32
  }
  func.func @transform_2(%arg0: i32) -> (i32, i32) {
    %c0_i32 = arith.constant 0 : i32
    %c0_i32_0 = arith.constant 0 : i32
    return %arg0, %c0_i32 : i32, i32
  }
  func.func @transform_3(%arg0: i32) -> (i32, i32) {
    %c0_i32 = arith.constant 0 : i32
    %c0_i32_0 = arith.constant 0 : i32
    return %arg0, %c0_i32 : i32, i32
  }
  func.func @transform_4(%arg0: i32) -> (i32, i32) {
    %c0_i32 = arith.constant 0 : i32
    %c0_i32_0 = arith.constant 0 : i32
    %c0_i32_1 = arith.constant 0 : i32
    return %c0_i32, %c0_i32_0 : i32, i32
  }
  func.func @transform_5(%arg0: i32) -> (i32, i32) {
    %c0_i32 = arith.constant 0 : i32
    %c0_i32_0 = arith.constant 0 : i32
    %c0_i32_1 = arith.constant 0 : i32
    return %c0_i32, %c0_i32_0 : i32, i32
  }
  func.func @transform_6(%arg0: i32) -> (i32, i32) {
    %c0_i32 = arith.constant 0 : i32
    %c0_i32_0 = arith.constant 0 : i32
    return %arg0, %c0_i32 : i32, i32
  }
}

module attributes {stable_mosaic.version = 11 : i64} {
  func.func @_conv_relu_pool_kernel(%arg0: i32, %arg1: memref<32x512xbf16, #tpu.memory_space<vmem>>, %arg2: memref<32x512xbf16, #tpu.memory_space<vmem>>, %arg3: memref<32x512xbf16, #tpu.memory_space<vmem>>, %arg4: memref<32x512xbf16, #tpu.memory_space<vmem>>, %arg5: memref<512x128xbf16, #tpu.memory_space<vmem>>, %arg6: memref<1x128xf32, #tpu.memory_space<vmem>>, %arg7: memref<32x128xf32, #tpu.memory_space<vmem>>) attributes {dimension_semantics = [#tpu.dimension_semantics<parallel>], iteration_bounds = array<i64: 1>, scalar_prefetch = 0 : i64, scratch_operands = 0 : i64, tpu.core_type = #tpu.core_type<tc>, window_params = [{transform_indices = @transform_0, window_bounds = array<i64: 32, 512>}, {transform_indices = @transform_1, window_bounds = array<i64: 32, 512>}, {transform_indices = @transform_2, window_bounds = array<i64: 32, 512>}, {transform_indices = @transform_3, window_bounds = array<i64: 32, 512>}, {pipeline_mode = #tpu.pipeline_mode<synchronous>, transform_indices = @transform_4, window_bounds = array<i64: 512, 128>}, {pipeline_mode = #tpu.pipeline_mode<synchronous>, transform_indices = @transform_5, window_bounds = array<i64: 1, 128>}, {transform_indices = @transform_6, window_bounds = array<i64: 32, 128>}]} {
    %c0 = arith.constant 0 : index
    %c0_0 = arith.constant 0 : index
    %0 = vector.load %arg5[%c0, %c0_0] : memref<512x128xbf16, #tpu.memory_space<vmem>>, vector<512x128xbf16>
    %c0_1 = arith.constant 0 : index
    %c0_2 = arith.constant 0 : index
    %1 = vector.load %arg6[%c0_1, %c0_2] : memref<1x128xf32, #tpu.memory_space<vmem>>, vector<1x128xf32>
    %c0_3 = arith.constant 0 : index
    %c0_4 = arith.constant 0 : index
    %2 = vector.load %arg1[%c0_3, %c0_4] : memref<32x512xbf16, #tpu.memory_space<vmem>>, vector<32x512xbf16>
    %cst = arith.constant dense<0.000000e+00> : vector<32x128xf32>
    %3 = tpu.matmul %2, %0, %cst {dimension_numbers = #tpu.dot_dimension_numbers<[1], [0], [0], [1], [0, 0, 1, 1], [], []>} : vector<32x512xbf16>, vector<512x128xbf16>, vector<32x128xf32> -> vector<32x128xf32>
    %4 = vector.broadcast %1 : vector<1x128xf32> to vector<32x128xf32>
    %5 = arith.addf %3, %4 : vector<32x128xf32>
    %cst_5 = arith.constant 0.000000e+00 : f32
    %6 = vector.broadcast %cst_5 : f32 to vector<32x128xf32>
    %7 = arith.maximumf %5, %6 : vector<32x128xf32>
    %c0_6 = arith.constant 0 : index
    %c0_7 = arith.constant 0 : index
    %8 = vector.load %arg2[%c0_6, %c0_7] : memref<32x512xbf16, #tpu.memory_space<vmem>>, vector<32x512xbf16>
    %cst_8 = arith.constant dense<0.000000e+00> : vector<32x128xf32>
    %9 = tpu.matmul %8, %0, %cst_8 {dimension_numbers = #tpu.dot_dimension_numbers<[1], [0], [0], [1], [0, 0, 1, 1], [], []>} : vector<32x512xbf16>, vector<512x128xbf16>, vector<32x128xf32> -> vector<32x128xf32>
    %10 = vector.broadcast %1 : vector<1x128xf32> to vector<32x128xf32>
    %11 = arith.addf %9, %10 : vector<32x128xf32>
    %cst_9 = arith.constant 0.000000e+00 : f32
    %12 = vector.broadcast %cst_9 : f32 to vector<32x128xf32>
    %13 = arith.maximumf %11, %12 : vector<32x128xf32>
    %14 = arith.maximumf %7, %13 : vector<32x128xf32>
    %c0_10 = arith.constant 0 : index
    %c0_11 = arith.constant 0 : index
    %15 = vector.load %arg3[%c0_10, %c0_11] : memref<32x512xbf16, #tpu.memory_space<vmem>>, vector<32x512xbf16>
    %cst_12 = arith.constant dense<0.000000e+00> : vector<32x128xf32>
    %16 = tpu.matmul %15, %0, %cst_12 {dimension_numbers = #tpu.dot_dimension_numbers<[1], [0], [0], [1], [0, 0, 1, 1], [], []>} : vector<32x512xbf16>, vector<512x128xbf16>, vector<32x128xf32> -> vector<32x128xf32>
    %17 = vector.broadcast %1 : vector<1x128xf32> to vector<32x128xf32>
    %18 = arith.addf %16, %17 : vector<32x128xf32>
    %cst_13 = arith.constant 0.000000e+00 : f32
    %19 = vector.broadcast %cst_13 : f32 to vector<32x128xf32>
    %20 = arith.maximumf %18, %19 : vector<32x128xf32>
    %c0_14 = arith.constant 0 : index
    %c0_15 = arith.constant 0 : index
    %21 = vector.load %arg4[%c0_14, %c0_15] : memref<32x512xbf16, #tpu.memory_space<vmem>>, vector<32x512xbf16>
    %cst_16 = arith.constant dense<0.000000e+00> : vector<32x128xf32>
    %22 = tpu.matmul %21, %0, %cst_16 {dimension_numbers = #tpu.dot_dimension_numbers<[1], [0], [0], [1], [0, 0, 1, 1], [], []>} : vector<32x512xbf16>, vector<512x128xbf16>, vector<32x128xf32> -> vector<32x128xf32>
    %23 = vector.broadcast %1 : vector<1x128xf32> to vector<32x128xf32>
    %24 = arith.addf %22, %23 : vector<32x128xf32>
    %cst_17 = arith.constant 0.000000e+00 : f32
    %25 = vector.broadcast %cst_17 : f32 to vector<32x128xf32>
    %26 = arith.maximumf %24, %25 : vector<32x128xf32>
    %27 = arith.maximumf %20, %26 : vector<32x128xf32>
    %28 = arith.maximumf %14, %27 : vector<32x128xf32>
    %c0_18 = arith.constant 0 : index
    %c0_19 = arith.constant 0 : index
    %29 = vector.load %arg7[%c0_18, %c0_19] : memref<32x128xf32, #tpu.memory_space<vmem>>, vector<32x128xf32>
    tpu.vector_store %arg7[%c0_18, %c0_19], %28 {strides = array<i32>} : memref<32x128xf32, #tpu.memory_space<vmem>>, vector<32x128xf32>,
    return
  }
  func.func @transform_0(%arg0: i32) -> (i32, i32) {
    %c0_i32 = arith.constant 0 : i32
    %c0_i32_0 = arith.constant 0 : i32
    return %arg0, %c0_i32 : i32, i32
  }
  func.func @transform_1(%arg0: i32) -> (i32, i32) {
    %c0_i32 = arith.constant 0 : i32
    %c0_i32_0 = arith.constant 0 : i32
    return %arg0, %c0_i32 : i32, i32
  }
  func.func @transform_2(%arg0: i32) -> (i32, i32) {
    %c0_i32 = arith.constant 0 : i32
    %c0_i32_0 = arith.constant 0 : i32
    return %arg0, %c0_i32 : i32, i32
  }
  func.func @transform_3(%arg0: i32) -> (i32, i32) {
    %c0_i32 = arith.constant 0 : i32
    %c0_i32_0 = arith.constant 0 : i32
    return %arg0, %c0_i32 : i32, i32
  }
  func.func @transform_4(%arg0: i32) -> (i32, i32) {
    %c0_i32 = arith.constant 0 : i32
    %c0_i32_0 = arith.constant 0 : i32
    %c0_i32_1 = arith.constant 0 : i32
    return %c0_i32, %c0_i32_0 : i32, i32
  }
  func.func @transform_5(%arg0: i32) -> (i32, i32) {
    %c0_i32 = arith.constant 0 : i32
    %c0_i32_0 = arith.constant 0 : i32
    %c0_i32_1 = arith.constant 0 : i32
    return %c0_i32, %c0_i32_0 : i32, i32
  }
  func.func @transform_6(%arg0: i32) -> (i32, i32) {
    %c0_i32 = arith.constant 0 : i32
    %c0_i32_0 = arith.constant 0 : i32
    return %arg0, %c0_i32 : i32, i32
  }
}

module attributes {stable_mosaic.version = 11 : i64} {
  func.func @_mlp_head_kernel(%arg0: i32, %arg1: memref<8x800xbf16, #tpu.memory_space<vmem>>, %arg2: memref<800x512xbf16, #tpu.memory_space<vmem>>, %arg3: memref<1x512xf32, #tpu.memory_space<vmem>>, %arg4: memref<512x128xbf16, #tpu.memory_space<vmem>>, %arg5: memref<1x128xf32, #tpu.memory_space<vmem>>, %arg6: memref<8x128xf32, #tpu.memory_space<vmem>>) attributes {dimension_semantics = [#tpu.dimension_semantics<parallel>], iteration_bounds = array<i64: 1>, scalar_prefetch = 0 : i64, scratch_operands = 0 : i64, tpu.core_type = #tpu.core_type<tc>, window_params = [{transform_indices = @transform_0, window_bounds = array<i64: 8, 800>}, {pipeline_mode = #tpu.pipeline_mode<synchronous>, transform_indices = @transform_1, window_bounds = array<i64: 800, 512>}, {pipeline_mode = #tpu.pipeline_mode<synchronous>, transform_indices = @transform_2, window_bounds = array<i64: 1, 512>}, {pipeline_mode = #tpu.pipeline_mode<synchronous>, transform_indices = @transform_3, window_bounds = array<i64: 512, 128>}, {pipeline_mode = #tpu.pipeline_mode<synchronous>, transform_indices = @transform_4, window_bounds = array<i64: 1, 128>}, {transform_indices = @transform_5, window_bounds = array<i64: 8, 128>}]} {
    %c0 = arith.constant 0 : index
    %c0_0 = arith.constant 0 : index
    %0 = vector.load %arg1[%c0, %c0_0] : memref<8x800xbf16, #tpu.memory_space<vmem>>, vector<8x800xbf16>
    %c0_1 = arith.constant 0 : index
    %c0_2 = arith.constant 0 : index
    %1 = vector.load %arg2[%c0_1, %c0_2] : memref<800x512xbf16, #tpu.memory_space<vmem>>, vector<800x512xbf16>
    %cst = arith.constant dense<0.000000e+00> : vector<8x512xf32>
    %2 = tpu.matmul %0, %1, %cst {dimension_numbers = #tpu.dot_dimension_numbers<[1], [0], [0], [1], [0, 0, 1, 1], [], []>} : vector<8x800xbf16>, vector<800x512xbf16>, vector<8x512xf32> -> vector<8x512xf32>
    %c0_3 = arith.constant 0 : index
    %c0_4 = arith.constant 0 : index
    %3 = vector.load %arg3[%c0_3, %c0_4] : memref<1x512xf32, #tpu.memory_space<vmem>>, vector<1x512xf32>
    %4 = vector.broadcast %3 : vector<1x512xf32> to vector<8x512xf32>
    %5 = arith.addf %2, %4 : vector<8x512xf32>
    %cst_5 = arith.constant 0.000000e+00 : f32
    %6 = vector.broadcast %cst_5 : f32 to vector<8x512xf32>
    %7 = arith.maximumf %5, %6 : vector<8x512xf32>
    %8 = arith.truncf %7 : vector<8x512xf32> to vector<8x512xbf16>
    %c0_6 = arith.constant 0 : index
    %c0_7 = arith.constant 0 : index
    %9 = vector.load %arg4[%c0_6, %c0_7] : memref<512x128xbf16, #tpu.memory_space<vmem>>, vector<512x128xbf16>
    %cst_8 = arith.constant dense<0.000000e+00> : vector<8x128xf32>
    %10 = tpu.matmul %8, %9, %cst_8 {dimension_numbers = #tpu.dot_dimension_numbers<[1], [0], [0], [1], [0, 0, 1, 1], [], []>} : vector<8x512xbf16>, vector<512x128xbf16>, vector<8x128xf32> -> vector<8x128xf32>
    %c0_9 = arith.constant 0 : index
    %c0_10 = arith.constant 0 : index
    %11 = vector.load %arg5[%c0_9, %c0_10] : memref<1x128xf32, #tpu.memory_space<vmem>>, vector<1x128xf32>
    %12 = vector.broadcast %11 : vector<1x128xf32> to vector<8x128xf32>
    %13 = arith.addf %10, %12 : vector<8x128xf32>
    %cst_11 = arith.constant dense<0xFF800000> : vector<8xf32>
    %14 = vector.multi_reduction <maximumf>, %13, %cst_11 [1] : vector<8x128xf32> to vector<8xf32>
    %15 = vector.shape_cast %14 : vector<8xf32> to vector<8x1xf32>
    %16 = vector.broadcast %15 : vector<8x1xf32> to vector<8x128xf32>
    %17 = arith.subf %13, %16 : vector<8x128xf32>
    %18 = math.exp %17 : vector<8x128xf32>
    %cst_12 = arith.constant dense<0.000000e+00> : vector<8xf32>
    %19 = vector.multi_reduction <add>, %18, %cst_12 [1] : vector<8x128xf32> to vector<8xf32>
    %20 = vector.shape_cast %19 : vector<8xf32> to vector<8x1xf32>
    %21 = math.log %20 : vector<8x1xf32>
    %22 = vector.broadcast %21 : vector<8x1xf32> to vector<8x128xf32>
    %23 = arith.subf %17, %22 : vector<8x128xf32>
    %c0_13 = arith.constant 0 : index
    %c0_14 = arith.constant 0 : index
    %24 = vector.load %arg6[%c0_13, %c0_14] : memref<8x128xf32, #tpu.memory_space<vmem>>, vector<8x128xf32>
    tpu.vector_store %arg6[%c0_13, %c0_14], %23 {strides = array<i32>} : memref<8x128xf32, #tpu.memory_space<vmem>>, vector<8x128xf32>,
    return
  }
  func.func @transform_0(%arg0: i32) -> (i32, i32) {
    %c0_i32 = arith.constant 0 : i32
    %c0_i32_0 = arith.constant 0 : i32
    return %arg0, %c0_i32 : i32, i32
  }
  func.func @transform_1(%arg0: i32) -> (i32, i32) {
    %c0_i32 = arith.constant 0 : i32
    %c0_i32_0 = arith.constant 0 : i32
    %c0_i32_1 = arith.constant 0 : i32
    return %c0_i32, %c0_i32_0 : i32, i32
  }
  func.func @transform_2(%arg0: i32) -> (i32, i32) {
    %c0_i32 = arith.constant 0 : i32
    %c0_i32_0 = arith.constant 0 : i32
    %c0_i32_1 = arith.constant 0 : i32
    return %c0_i32, %c0_i32_0 : i32, i32
  }
  func.func @transform_3(%arg0: i32) -> (i32, i32) {
    %c0_i32 = arith.constant 0 : i32
    %c0_i32_0 = arith.constant 0 : i32
    %c0_i32_1 = arith.constant 0 : i32
    return %c0_i32, %c0_i32_0 : i32, i32
  }
  func.func @transform_4(%arg0: i32) -> (i32, i32) {
    %c0_i32 = arith.constant 0 : i32
    %c0_i32_0 = arith.constant 0 : i32
    %c0_i32_1 = arith.constant 0 : i32
    return %c0_i32, %c0_i32_0 : i32, i32
  }
  func.func @transform_5(%arg0: i32) -> (i32, i32) {
    %c0_i32 = arith.constant 0 : i32
    %c0_i32_0 = arith.constant 0 : i32
    return %arg0, %c0_i32 : i32, i32
  }
}

</mosaic_0001>

<llo_original>
// kernel: squeeze.4
$region0: #{squeeze.4}
  %s0 = inlined_call_operand.vmem [shape: bf16[2,12,1,12,1,25], index: 0, kind: input, shape index: {}]
  %s1 = inlined_call_operand.vmem [shape: bf16[288,25], index: 1, kind: output, shape index: {}]
  $region1: #{squeeze.4} parent=0
    #allocation0 [shape = 'u8[147456]{0}', space=vmem, size = 0x24000, scoped, tag = 'scoped mem for output reshape']
    #allocation1 [shape = 'u8[196608]{0}', space=vmem, size = 0x30000, scoped, tag = 'scoped mem for input reshape']
    %s3 = smul.u32 4, 2
    %s4 = sshllo.u32 0, %s3
    %s5 = smul.addr 4, 47
    %s6 = scalar_lea.vmem %s0, %s5
    %s7 = sshrl.u32 %s4, 1
    %s8 = sor.u32 %s4, %s7
    %s9 = sand.u32 %s8, 85
    %s10 = sshrl.u32 %s9, 1
    %s11 = sor.u32 %s9, %s10
    %s12 = sand.u32 51, %s11
    %s13 = sshrl.u32 %s12, 2
    %s14 = sor.u32 %s12, %s13
    %s15 = sand.u32 15, %s14
    %v16 = vld [vmem:[%s6] sm:%s15]
    %v17 = vunpack.c.l.bf16 %v16
    %v18 = vunpack.c.h.bf16 %v16
    %s19 = scalar_lea.vmem [#allocation1], 376
    %20 = vst [vmem:[%s19] sm:%s4] %v17
    %s21 = smul.addr 4, 46
    %s22 = scalar_lea.vmem %s0, %s21
    %s23 = sshrl.u32 %s4, 1
    %s24 = sor.u32 %s4, %s23
    %s25 = sand.u32 %s24, 85
    %s26 = sshrl.u32 %s25, 1
    %s27 = sor.u32 %s25, %s26
    %s28 = sand.u32 51, %s27
    %s29 = sshrl.u32 %s28, 2
    %s30 = sor.u32 %s28, %s29
    %s31 = sand.u32 15, %s30
    %v32 = vld [vmem:[%s22] sm:%s31]
    %v33 = vunpack.c.l.bf16 %v32
    %v34 = vunpack.c.h.bf16 %v32
    %s35 = scalar_lea.vmem [#allocation1], 368
    %36 = vst [vmem:[%s35] sm:%s4] %v33
    %s37 = smul.addr 4, 45
    %s38 = scalar_lea.vmem %s0, %s37
    %s39 = sshrl.u32 %s4, 1
    %s40 = sor.u32 %s4, %s39
    %s41 = sand.u32 %s40, 85
    %s42 = sshrl.u32 %s41, 1
    %s43 = sor.u32 %s41, %s42
    %s44 = sand.u32 51, %s43
    %s45 = sshrl.u32 %s44, 2
    %s46 = sor.u32 %s44, %s45
    %s47 = sand.u32 15, %s46
    %v48 = vld [vmem:[%s38] sm:%s47]
    %v49 = vunpack.c.l.bf16 %v48
    %v50 = vunpack.c.h.bf16 %v48
    %s51 = scalar_lea.vmem [#allocation1], 360
    %52 = vst [vmem:[%s51] sm:%s4] %v49
    %s53 = smul.addr 4, 44
    %s54 = scalar_lea.vmem %s0, %s53
    %s55 = sshrl.u32 %s4, 1
    %s56 = sor.u32 %s4, %s55
    %s57 = sand.u32 %s56, 85
    %s58 = sshrl.u32 %s57, 1
    %s59 = sor.u32 %s57, %s58
    %s60 = sand.u32 51, %s59
    %s61 = sshrl.u32 %s60, 2
    %s62 = sor.u32 %s60, %s61
    %s63 = sand.u32 15, %s62
    %v64 = vld [vmem:[%s54] sm:%s63]
    %v65 = vunpack.c.l.bf16 %v64
    %v66 = vunpack.c.h.bf16 %v64
    %s67 = scalar_lea.vmem [#allocation1], 352
    %68 = vst [vmem:[%s67] sm:%s4] %v65
    %s69 = smul.addr 4, 43
    %s70 = scalar_lea.vmem %s0, %s69
    %s71 = sshrl.u32 %s4, 1
    %s72 = sor.u32 %s4, %s71
    %s73 = sand.u32 %s72, 85
    %s74 = sshrl.u32 %s73, 1
    %s75 = sor.u32 %s73, %s74
    %s76 = sand.u32 51, %s75
    %s77 = sshrl.u32 %s76, 2
    %s78 = sor.u32 %s76, %s77
    %s79 = sand.u32 15, %s78
    %v80 = vld [vmem:[%s70] sm:%s79]
    %v81 = vunpack.c.l.bf16 %v80
    %v82 = vunpack.c.h.bf16 %v80
    %s83 = scalar_lea.vmem [#allocation1], 344
    %84 = vst [vmem:[%s83] sm:%s4] %v81
    %s85 = smul.addr 4, 42
    %s86 = scalar_lea.vmem %s0, %s85
    %s87 = sshrl.u32 %s4, 1
    %s88 = sor.u32 %s4, %s87
    %s89 = sand.u32 %s88, 85
    %s90 = sshrl.u32 %s89, 1
    %s91 = sor.u32 %s89, %s90
    %s92 = sand.u32 51, %s91
    %s93 = sshrl.u32 %s92, 2
    %s94 = sor.u32 %s92, %s93
    %s95 = sand.u32 15, %s94
    %v96 = vld [vmem:[%s86] sm:%s95]
    %v97 = vunpack.c.l.bf16 %v96
    %v98 = vunpack.c.h.bf16 %v96
    %s99 = scalar_lea.vmem [#allocation1], 336
    %100 = vst [vmem:[%s99] sm:%s4] %v97
    %s101 = smul.addr 4, 41
    %s102 = scalar_lea.vmem %s0, %s101
    %s103 = sshrl.u32 %s4, 1
    %s104 = sor.u32 %s4, %s103
    %s105 = sand.u32 %s104, 85
    %s106 = sshrl.u32 %s105, 1
    %s107 = sor.u32 %s105, %s106
    %s108 = sand.u32 51, %s107
    %s109 = sshrl.u32 %s108, 2
    %s110 = sor.u32 %s108, %s109
    %s111 = sand.u32 15, %s110
    %v112 = vld [vmem:[%s102] sm:%s111]
    %v113 = vunpack.c.l.bf16 %v112
    %v114 = vunpack.c.h.bf16 %v112
    %s115 = scalar_lea.vmem [#allocation1], 328
    %116 = vst [vmem:[%s115] sm:%s4] %v113
    %s117 = smul.addr 4, 40
    %s118 = scalar_lea.vmem %s0, %s117
    %s119 = sshrl.u32 %s4, 1
    %s120 = sor.u32 %s4, %s119
    %s121 = sand.u32 %s120, 85
    %s122 = sshrl.u32 %s121, 1
    %s123 = sor.u32 %s121, %s122
    %s124 = sand.u32 51, %s123
    %s125 = sshrl.u32 %s124, 2
    %s126 = sor.u32 %s124, %s125
    %s127 = sand.u32 15, %s126
    %v128 = vld [vmem:[%s118] sm:%s127]
    %v129 = vunpack.c.l.bf16 %v128
    %v130 = vunpack.c.h.bf16 %v128
    %s131 = scalar_lea.vmem [#allocation1], 320
    %132 = vst [vmem:[%s131] sm:%s4] %v129
    %s133 = smul.addr 4, 39
    %s134 = scalar_lea.vmem %s0, %s133
    %s135 = sshrl.u32 %s4, 1
    %s136 = sor.u32 %s4, %s135
    %s137 = sand.u32 %s136, 85
    %s138 = sshrl.u32 %s137, 1
    %s139 = sor.u32 %s137, %s138
    %s140 = sand.u32 51, %s139
    %s141 = sshrl.u32 %s140, 2
    %s142 = sor.u32 %s140, %s141
    %s143 = sand.u32 15, %s142
    %v144 = vld [vmem:[%s134] sm:%s143]
    %v145 = vunpack.c.l.bf16 %v144
    %v146 = vunpack.c.h.bf16 %v144
    %s147 = scalar_lea.vmem [#allocation1], 312
    %148 = vst [vmem:[%s147] sm:%s4] %v145
    %s149 = smul.addr 4, 38
    %s150 = scalar_lea.vmem %s0, %s149
    %s151 = sshrl.u32 %s4, 1
    %s152 = sor.u32 %s4, %s151
    %s153 = sand.u32 %s152, 85
    %s154 = sshrl.u32 %s153, 1
    %s155 = sor.u32 %s153, %s154
    %s156 = sand.u32 51, %s155
    %s157 = sshrl.u32 %s156, 2
    %s158 = sor.u32 %s156, %s157
    %s159 = sand.u32 15, %s158
    %v160 = vld [vmem:[%s150] sm:%s159]
    %v161 = vunpack.c.l.bf16 %v160
    %v162 = vunpack.c.h.bf16 %v160
    %s163 = scalar_lea.vmem [#allocation1], 304
    %164 = vst [vmem:[%s163] sm:%s4] %v161
    %s165 = smul.addr 4, 37
    %s166 = scalar_lea.vmem %s0, %s165
    %s167 = sshrl.u32 %s4, 1
    %s168 = sor.u32 %s4, %s167
    %s169 = sand.u32 %s168, 85
    %s170 = sshrl.u32 %s169, 1
    %s171 = sor.u32 %s169, %s170
    %s172 = sand.u32 51, %s171
    %s173 = sshrl.u32 %s172, 2
    %s174 = sor.u32 %s172, %s173
    %s175 = sand.u32 15, %s174
    %v176 = vld [vmem:[%s166] sm:%s175]
    %v177 = vunpack.c.l.bf16 %v176
    %v178 = vunpack.c.h.bf16 %v176
    %s179 = scalar_lea.vmem [#allocation1], 296
    %180 = vst [vmem:[%s179] sm:%s4] %v177
    %s181 = smul.addr 4, 36
    %s182 = scalar_lea.vmem %s0, %s181
    %s183 = sshrl.u32 %s4, 1
    %s184 = sor.u32 %s4, %s183
    %s185 = sand.u32 %s184, 85
    %s186 = sshrl.u32 %s185, 1
    %s187 = sor.u32 %s185, %s186
    %s188 = sand.u32 51, %s187
    %s189 = sshrl.u32 %s188, 2
    %s190 = sor.u32 %s188, %s189
    %s191 = sand.u32 15, %s190
    %v192 = vld [vmem:[%s182] sm:%s191]
    %v193 = vunpack.c.l.bf16 %v192
    %v194 = vunpack.c.h.bf16 %v192
    %s195 = scalar_lea.vmem [#allocation1], 288
    %196 = vst [vmem:[%s195] sm:%s4] %v193
    %s197 = smul.addr 4, 35
    %s198 = scalar_lea.vmem %s0, %s197
    %s199 = sshrl.u32 %s4, 1
    %s200 = sor.u32 %s4, %s199
    %s201 = sand.u32 %s200, 85
    %s202 = sshrl.u32 %s201, 1
    %s203 = sor.u32 %s201, %s202
    %s204 = sand.u32 51, %s203
    %s205 = sshrl.u32 %s204, 2
    %s206 = sor.u32 %s204, %s205
    %s207 = sand.u32 15, %s206
    %v208 = vld [vmem:[%s198] sm:%s207]
    %v209 = vunpack.c.l.bf16 %v208
    %v210 = vunpack.c.h.bf16 %v208
    %s211 = scalar_lea.vmem [#allocation1], 280
    %212 = vst [vmem:[%s211] sm:%s4] %v209
    %s213 = smul.addr 4, 34
    %s214 = scalar_lea.vmem %s0, %s213
    %s215 = sshrl.u32 %s4, 1
    %s216 = sor.u32 %s4, %s215
    %s217 = sand.u32 %s216, 85
    %s218 = sshrl.u32 %s217, 1
    %s219 = sor.u32 %s217, %s218
    %s220 = sand.u32 51, %s219
    %s221 = sshrl.u32 %s220, 2
    %s222 = sor.u32 %s220, %s221
    %s223 = sand.u32 15, %s222
    %v224 = vld [vmem:[%s214] sm:%s223]
    %v225 = vunpack.c.l.bf16 %v224
    %v226 = vunpack.c.h.bf16 %v224
    %s227 = scalar_lea.vmem [#allocation1], 272
    %228 = vst [vmem:[%s227] sm:%s4] %v225
    %s229 = smul.addr 4, 33
    %s230 = scalar_lea.vmem %s0, %s229
    %s231 = sshrl.u32 %s4, 1
    %s232 = sor.u32 %s4, %s231
    %s233 = sand.u32 %s232, 85
    %s234 = sshrl.u32 %s233, 1
    %s235 = sor.u32 %s233, %s234
    %s236 = sand.u32 51, %s235
    %s237 = sshrl.u32 %s236, 2
    %s238 = sor.u32 %s236, %s237
    %s239 = sand.u32 15, %s238
    %v240 = vld [vmem:[%s230] sm:%s239]
    %v241 = vunpack.c.l.bf16 %v240
    %v242 = vunpack.c.h.bf16 %v240
    %s243 = scalar_lea.vmem [#allocation1], 264
    %244 = vst [vmem:[%s243] sm:%s4] %v241
    %s245 = smul.addr 4, 32
    %s246 = scalar_lea.vmem %s0, %s245
    %s247 = sshrl.u32 %s4, 1
    %s248 = sor.u32 %s4, %s247
    %s249 = sand.u32 %s248, 85
    %s250 = sshrl.u32 %s249, 1
    %s251 = sor.u32 %s249, %s250
    %s252 = sand.u32 51, %s251
    %s253 = sshrl.u32 %s252, 2
    %s254 = sor.u32 %s252, %s253
    %s255 = sand.u32 15, %s254
    %v256 = vld [vmem:[%s246] sm:%s255]
    %v257 = vunpack.c.l.bf16 %v256
    %v258 = vunpack.c.h.bf16 %v256
    %s259 = scalar_lea.vmem [#allocation1], 256
    %260 = vst [vmem:[%s259] sm:%s4] %v257
    %s261 = smul.addr 4, 31
    %s262 = scalar_lea.vmem %s0, %s261
    %s263 = sshrl.u32 %s4, 1
    %s264 = sor.u32 %s4, %s263
    %s265 = sand.u32 %s264, 85
    %s266 = sshrl.u32 %s265, 1
    %s267 = sor.u32 %s265, %s266
    %s268 = sand.u32 51, %s267
    %s269 = sshrl.u32 %s268, 2
    %s270 = sor.u32 %s268, %s269
    %s271 = sand.u32 15, %s270
    %v272 = vld [vmem:[%s262] sm:%s271]
    %v273 = vunpack.c.l.bf16 %v272
    %v274 = vunpack.c.h.bf16 %v272
    %s275 = scalar_lea.vmem [#allocation1], 248
    %276 = vst [vmem:[%s275] sm:%s4] %v273
    %s277 = smul.addr 4, 30
    %s278 = scalar_lea.vmem %s0, %s277
    %s279 = sshrl.u32 %s4, 1
    %s280 = sor.u32 %s4, %s279
    %s281 = sand.u32 %s280, 85
    %s282 = sshrl.u32 %s281, 1
    %s283 = sor.u32 %s281, %s282
    %s284 = sand.u32 51, %s283
    %s285 = sshrl.u32 %s284, 2
    %s286 = sor.u32 %s284, %s285
    %s287 = sand.u32 15, %s286
    %v288 = vld [vmem:[%s278] sm:%s287]
    %v289 = vunpack.c.l.bf16 %v288
    %v290 = vunpack.c.h.bf16 %v288
    %s291 = scalar_lea.vmem [#allocation1], 240
    %292 = vst [vmem:[%s291] sm:%s4] %v289
    %s293 = smul.addr 4, 29
    %s294 = scalar_lea.vmem %s0, %s293
    %s295 = sshrl.u32 %s4, 1
    %s296 = sor.u32 %s4, %s295
    %s297 = sand.u32 %s296, 85
    %s298 = sshrl.u32 %s297, 1
    %s299 = sor.u32 %s297, %s298
    %s300 = sand.u32 51, %s299
    %s301 = sshrl.u32 %s300, 2
    %s302 = sor.u32 %s300, %s301
    %s303 = sand.u32 15, %s302
    %v304 = vld [vmem:[%s294] sm:%s303]
    %v305 = vunpack.c.l.bf16 %v304
    %v306 = vunpack.c.h.bf16 %v304
    %s307 = scalar_lea.vmem [#allocation1], 232
    %308 = vst [vmem:[%s307] sm:%s4] %v305
    %s309 = smul.addr 4, 28
    %s310 = scalar_lea.vmem %s0, %s309
    %s311 = sshrl.u32 %s4, 1
    %s312 = sor.u32 %s4, %s311
    %s313 = sand.u32 %s312, 85
    %s314 = sshrl.u32 %s313, 1
    %s315 = sor.u32 %s313, %s314
    %s316 = sand.u32 51, %s315
    %s317 = sshrl.u32 %s316, 2
    %s318 = sor.u32 %s316, %s317
    %s319 = sand.u32 15, %s318
    %v320 = vld [vmem:[%s310] sm:%s319]
    %v321 = vunpack.c.l.bf16 %v320
    %v322 = vunpack.c.h.bf16 %v320
    %s323 = scalar_lea.vmem [#allocation1], 224
    %324 = vst [vmem:[%s323] sm:%s4] %v321
    %s325 = smul.addr 4, 27
    %s326 = scalar_lea.vmem %s0, %s325
    %s327 = sshrl.u32 %s4, 1
    %s328 = sor.u32 %s4, %s327
    %s329 = sand.u32 %s328, 85
    %s330 = sshrl.u32 %s329, 1
    %s331 = sor.u32 %s329, %s330
    %s332 = sand.u32 51, %s331
    %s333 = sshrl.u32 %s332, 2
    %s334 = sor.u32 %s332, %s333
    %s335 = sand.u32 15, %s334
    %v336 = vld [vmem:[%s326] sm:%s335]
    %v337 = vunpack.c.l.bf16 %v336
    %v338 = vunpack.c.h.bf16 %v336
    %s339 = scalar_lea.vmem [#allocation1], 216
    %340 = vst [vmem:[%s339] sm:%s4] %v337
    %s341 = smul.addr 4, 26
    %s342 = scalar_lea.vmem %s0, %s341
    %s343 = sshrl.u32 %s4, 1
    %s344 = sor.u32 %s4, %s343
    %s345 = sand.u32 %s344, 85
    %s346 = sshrl.u32 %s345, 1
    %s347 = sor.u32 %s345, %s346
    %s348 = sand.u32 51, %s347
    %s349 = sshrl.u32 %s348, 2
    %s350 = sor.u32 %s348, %s349
    %s351 = sand.u32 15, %s350
    %v352 = vld [vmem:[%s342] sm:%s351]
    %v353 = vunpack.c.l.bf16 %v352
    %v354 = vunpack.c.h.bf16 %v352
    %s355 = scalar_lea.vmem [#allocation1], 208
    %356 = vst [vmem:[%s355] sm:%s4] %v353
    %s357 = smul.addr 4, 25
    %s358 = scalar_lea.vmem %s0, %s357
    %s359 = sshrl.u32 %s4, 1
    %s360 = sor.u32 %s4, %s359
    %s361 = sand.u32 %s360, 85
    %s362 = sshrl.u32 %s361, 1
    %s363 = sor.u32 %s361, %s362
    %s364 = sand.u32 51, %s363
    %s365 = sshrl.u32 %s364, 2
    %s366 = sor.u32 %s364, %s365
    %s367 = sand.u32 15, %s366
    %v368 = vld [vmem:[%s358] sm:%s367]
    %v369 = vunpack.c.l.bf16 %v368
    %v370 = vunpack.c.h.bf16 %v368
    %s371 = scalar_lea.vmem [#allocation1], 200
    %372 = vst [vmem:[%s371] sm:%s4] %v369
    %s373 = smul.addr 4, 24
    %s374 = scalar_lea.vmem %s0, %s373
    %s375 = sshrl.u32 %s4, 1
    %s376 = sor.u32 %s4, %s375
    %s377 = sand.u32 %s376, 85
    %s378 = sshrl.u32 %s377, 1
    %s379 = sor.u32 %s377, %s378
    %s380 = sand.u32 51, %s379
    %s381 = sshrl.u32 %s380, 2
    %s382 = sor.u32 %s380, %s381
    %s383 = sand.u32 15, %s382
    %v384 = vld [vmem:[%s374] sm:%s383]
    %v385 = vunpack.c.l.bf16 %v384
    %v386 = vunpack.c.h.bf16 %v384
    %s387 = scalar_lea.vmem [#allocation1], 192
    %388 = vst [vmem:[%s387] sm:%s4] %v385
    %s389 = smul.addr 4, 23
    %s390 = scalar_lea.vmem %s0, %s389
    %s391 = sshrl.u32 %s4, 1
    %s392 = sor.u32 %s4, %s391
    %s393 = sand.u32 %s392, 85
    %s394 = sshrl.u32 %s393, 1
    %s395 = sor.u32 %s393, %s394
    %s396 = sand.u32 51, %s395
    %s397 = sshrl.u32 %s396, 2
    %s398 = sor.u32 %s396, %s397
    %s399 = sand.u32 15, %s398
    %v400 = vld [vmem:[%s390] sm:%s399]
    %v401 = vunpack.c.l.bf16 %v400
    %v402 = vunpack.c.h.bf16 %v400
    %s403 = scalar_lea.vmem [#allocation1], 184
    %404 = vst [vmem:[%s403] sm:%s4] %v401
    %s405 = smul.addr 4, 22
    %s406 = scalar_lea.vmem %s0, %s405
    %s407 = sshrl.u32 %s4, 1
    %s408 = sor.u32 %s4, %s407
    %s409 = sand.u32 %s408, 85
    %s410 = sshrl.u32 %s409, 1
    %s411 = sor.u32 %s409, %s410
    %s412 = sand.u32 51, %s411
    %s413 = sshrl.u32 %s412, 2
    %s414 = sor.u32 %s412, %s413
    %s415 = sand.u32 15, %s414
    %v416 = vld [vmem:[%s406] sm:%s415]
    %v417 = vunpack.c.l.bf16 %v416
    %v418 = vunpack.c.h.bf16 %v416
    %s419 = scalar_lea.vmem [#allocation1], 176
    %420 = vst [vmem:[%s419] sm:%s4] %v417
    %s421 = smul.addr 4, 21
    %s422 = scalar_lea.vmem %s0, %s421
    %s423 = sshrl.u32 %s4, 1
    %s424 = sor.u32 %s4, %s423
    %s425 = sand.u32 %s424, 85
    %s426 = sshrl.u32 %s425, 1
    %s427 = sor.u32 %s425, %s426
    %s428 = sand.u32 51, %s427
    %s429 = sshrl.u32 %s428, 2
    %s430 = sor.u32 %s428, %s429
    %s431 = sand.u32 15, %s430
    %v432 = vld [vmem:[%s422] sm:%s431]
    %v433 = vunpack.c.l.bf16 %v432
    %v434 = vunpack.c.h.bf16 %v432
    %s435 = scalar_lea.vmem [#allocation1], 168
    %436 = vst [vmem:[%s435] sm:%s4] %v433
    %s437 = smul.addr 4, 20
    %s438 = scalar_lea.vmem %s0, %s437
    %s439 = sshrl.u32 %s4, 1
    %s440 = sor.u32 %s4, %s439
    %s441 = sand.u32 %s440, 85
    %s442 = sshrl.u32 %s441, 1
    %s443 = sor.u32 %s441, %s442
    %s444 = sand.u32 51, %s443
    %s445 = sshrl.u32 %s444, 2
    %s446 = sor.u32 %s444, %s445
    %s447 = sand.u32 15, %s446
    %v448 = vld [vmem:[%s438] sm:%s447]
    %v449 = vunpack.c.l.bf16 %v448
    %v450 = vunpack.c.h.bf16 %v448
    %s451 = scalar_lea.vmem [#allocation1], 160
    %452 = vst [vmem:[%s451] sm:%s4] %v449
    %s453 = smul.addr 4, 19
    %s454 = scalar_lea.vmem %s0, %s453
    %s455 = sshrl.u32 %s4, 1
    %s456 = sor.u32 %s4, %s455
    %s457 = sand.u32 %s456, 85
    %s458 = sshrl.u32 %s457, 1
    %s459 = sor.u32 %s457, %s458
    %s460 = sand.u32 51, %s459
    %s461 = sshrl.u32 %s460, 2
    %s462 = sor.u32 %s460, %s461
    %s463 = sand.u32 15, %s462
    %v464 = vld [vmem:[%s454] sm:%s463]
    %v465 = vunpack.c.l.bf16 %v464
    %v466 = vunpack.c.h.bf16 %v464
    %s467 = scalar_lea.vmem [#allocation1], 152
    %468 = vst [vmem:[%s467] sm:%s4] %v465
    %s469 = smul.addr 4, 18
    %s470 = scalar_lea.vmem %s0, %s469
    %s471 = sshrl.u32 %s4, 1
    %s472 = sor.u32 %s4, %s471
    %s473 = sand.u32 %s472, 85
    %s474 = sshrl.u32 %s473, 1
    %s475 = sor.u32 %s473, %s474
    %s476 = sand.u32 51, %s475
    %s477 = sshrl.u32 %s476, 2
    %s478 = sor.u32 %s476, %s477
    %s479 = sand.u32 15, %s478
    %v480 = vld [vmem:[%s470] sm:%s479]
    %v481 = vunpack.c.l.bf16 %v480
    %v482 = vunpack.c.h.bf16 %v480
    %s483 = scalar_lea.vmem [#allocation1], 144
    %484 = vst [vmem:[%s483] sm:%s4] %v481
    %s485 = smul.addr 4, 17
    %s486 = scalar_lea.vmem %s0, %s485
    %s487 = sshrl.u32 %s4, 1
    %s488 = sor.u32 %s4, %s487
    %s489 = sand.u32 %s488, 85
    %s490 = sshrl.u32 %s489, 1
    %s491 = sor.u32 %s489, %s490
    %s492 = sand.u32 51, %s491
    %s493 = sshrl.u32 %s492, 2
    %s494 = sor.u32 %s492, %s493
    %s495 = sand.u32 15, %s494
    %v496 = vld [vmem:[%s486] sm:%s495]
    %v497 = vunpack.c.l.bf16 %v496
    %v498 = vunpack.c.h.bf16 %v496
    %s499 = scalar_lea.vmem [#allocation1], 136
    %500 = vst [vmem:[%s499] sm:%s4] %v497
    %s501 = smul.addr 4, 16
    %s502 = scalar_lea.vmem %s0, %s501
    %s503 = sshrl.u32 %s4, 1
    %s504 = sor.u32 %s4, %s503
    %s505 = sand.u32 %s504, 85
    %s506 = sshrl.u32 %s505, 1
    %s507 = sor.u32 %s505, %s506
    %s508 = sand.u32 51, %s507
    %s509 = sshrl.u32 %s508, 2
    %s510 = sor.u32 %s508, %s509
    %s511 = sand.u32 15, %s510
    %v512 = vld [vmem:[%s502] sm:%s511]
    %v513 = vunpack.c.l.bf16 %v512
    %v514 = vunpack.c.h.bf16 %v512
    %s515 = scalar_lea.vmem [#allocation1], 128
    %516 = vst [vmem:[%s515] sm:%s4] %v513
    %s517 = smul.addr 4, 15
    %s518 = scalar_lea.vmem %s0, %s517
    %s519 = sshrl.u32 %s4, 1
    %s520 = sor.u32 %s4, %s519
    %s521 = sand.u32 %s520, 85
    %s522 = sshrl.u32 %s521, 1
    %s523 = sor.u32 %s521, %s522
    %s524 = sand.u32 51, %s523
    %s525 = sshrl.u32 %s524, 2
    %s526 = sor.u32 %s524, %s525
    %s527 = sand.u32 15, %s526
    %v528 = vld [vmem:[%s518] sm:%s527]
    %v529 = vunpack.c.l.bf16 %v528
    %v530 = vunpack.c.h.bf16 %v528
    %s531 = scalar_lea.vmem [#allocation1], 120
    %532 = vst [vmem:[%s531] sm:%s4] %v529
    %s533 = smul.addr 4, 14
    %s534 = scalar_lea.vmem %s0, %s533
    %s535 = sshrl.u32 %s4, 1
    %s536 = sor.u32 %s4, %s535
    %s537 = sand.u32 %s536, 85
    %s538 = sshrl.u32 %s537, 1
    %s539 = sor.u32 %s537, %s538
    %s540 = sand.u32 51, %s539
    %s541 = sshrl.u32 %s540, 2
    %s542 = sor.u32 %s540, %s541
    %s543 = sand.u32 15, %s542
    %v544 = vld [vmem:[%s534] sm:%s543]
    %v545 = vunpack.c.l.bf16 %v544
    %v546 = vunpack.c.h.bf16 %v544
    %s547 = scalar_lea.vmem [#allocation1], 112
    %548 = vst [vmem:[%s547] sm:%s4] %v545
    %s549 = smul.addr 4, 13
    %s550 = scalar_lea.vmem %s0, %s549
    %s551 = sshrl.u32 %s4, 1
    %s552 = sor.u32 %s4, %s551
    %s553 = sand.u32 %s552, 85
    %s554 = sshrl.u32 %s553, 1
    %s555 = sor.u32 %s553, %s554
    %s556 = sand.u32 51, %s555
    %s557 = sshrl.u32 %s556, 2
    %s558 = sor.u32 %s556, %s557
    %s559 = sand.u32 15, %s558
    %v560 = vld [vmem:[%s550] sm:%s559]
    %v561 = vunpack.c.l.bf16 %v560
    %v562 = vunpack.c.h.bf16 %v560
    %s563 = scalar_lea.vmem [#allocation1], 104
    %564 = vst [vmem:[%s563] sm:%s4] %v561
    %s565 = smul.addr 4, 12
    %s566 = scalar_lea.vmem %s0, %s565
    %s567 = sshrl.u32 %s4, 1
    %s568 = sor.u32 %s4, %s567
    %s569 = sand.u32 %s568, 85
    %s570 = sshrl.u32 %s569, 1
    %s571 = sor.u32 %s569, %s570
    %s572 = sand.u32 51, %s571
    %s573 = sshrl.u32 %s572, 2
    %s574 = sor.u32 %s572, %s573
    %s575 = sand.u32 15, %s574
    %v576 = vld [vmem:[%s566] sm:%s575]
    %v577 = vunpack.c.l.bf16 %v576
    %v578 = vunpack.c.h.bf16 %v576
    %s579 = scalar_lea.vmem [#allocation1], 96
    %580 = vst [vmem:[%s579] sm:%s4] %v577
    %s581 = smul.addr 4, 11
    %s582 = scalar_lea.vmem %s0, %s581
    %s583 = sshrl.u32 %s4, 1
    %s584 = sor.u32 %s4, %s583
    %s585 = sand.u32 %s584, 85
    %s586 = sshrl.u32 %s585, 1
    %s587 = sor.u32 %s585, %s586
    %s588 = sand.u32 51, %s587
    %s589 = sshrl.u32 %s588, 2
    %s590 = sor.u32 %s588, %s589
    %s591 = sand.u32 15, %s590
    %v592 = vld [vmem:[%s582] sm:%s591]
    %v593 = vunpack.c.l.bf16 %v592
    %v594 = vunpack.c.h.bf16 %v592
    %s595 = scalar_lea.vmem [#allocation1], 88
    %596 = vst [vmem:[%s595] sm:%s4] %v593
    %s597 = smul.addr 4, 10
    %s598 = scalar_lea.vmem %s0, %s597
    %s599 = sshrl.u32 %s4, 1
    %s600 = sor.u32 %s4, %s599
    %s601 = sand.u32 %s600, 85
    %s602 = sshrl.u32 %s601, 1
    %s603 = sor.u32 %s601, %s602
    %s604 = sand.u32 51, %s603
    %s605 = sshrl.u32 %s604, 2
    %s606 = sor.u32 %s604, %s605
    %s607 = sand.u32 15, %s606
    %v608 = vld [vmem:[%s598] sm:%s607]
    %v609 = vunpack.c.l.bf16 %v608
    %v610 = vunpack.c.h.bf16 %v608
    %s611 = scalar_lea.vmem [#allocation1], 80
    %612 = vst [vmem:[%s611] sm:%s4] %v609
    %s613 = smul.addr 4, 9
    %s614 = scalar_lea.vmem %s0, %s613
    %s615 = sshrl.u32 %s4, 1
    %s616 = sor.u32 %s4, %s615
    %s617 = sand.u32 %s616, 85
    %s618 = sshrl.u32 %s617, 1
    %s619 = sor.u32 %s617, %s618
    %s620 = sand.u32 51, %s619
    %s621 = sshrl.u32 %s620, 2
    %s622 = sor.u32 %s620, %s621
    %s623 = sand.u32 15, %s622
    %v624 = vld [vmem:[%s614] sm:%s623]
    %v625 = vunpack.c.l.bf16 %v624
    %v626 = vunpack.c.h.bf16 %v624
    %s627 = scalar_lea.vmem [#allocation1], 72
    %628 = vst [vmem:[%s627] sm:%s4] %v625
    %s629 = smul.addr 4, 8
    %s630 = scalar_lea.vmem %s0, %s629
    %s631 = sshrl.u32 %s4, 1
    %s632 = sor.u32 %s4, %s631
    %s633 = sand.u32 %s632, 85
    %s634 = sshrl.u32 %s633, 1
    %s635 = sor.u32 %s633, %s634
    %s636 = sand.u32 51, %s635
    %s637 = sshrl.u32 %s636, 2
    %s638 = sor.u32 %s636, %s637
    %s639 = sand.u32 15, %s638
    %v640 = vld [vmem:[%s630] sm:%s639]
    %v641 = vunpack.c.l.bf16 %v640
    %v642 = vunpack.c.h.bf16 %v640
    %s643 = scalar_lea.vmem [#allocation1], 64
    %644 = vst [vmem:[%s643] sm:%s4] %v641
    %s645 = smul.addr 4, 7
    %s646 = scalar_lea.vmem %s0, %s645
    %s647 = sshrl.u32 %s4, 1
    %s648 = sor.u32 %s4, %s647
    %s649 = sand.u32 %s648, 85
    %s650 = sshrl.u32 %s649, 1
    %s651 = sor.u32 %s649, %s650
    %s652 = sand.u32 51, %s651
    %s653 = sshrl.u32 %s652, 2
    %s654 = sor.u32 %s652, %s653
    %s655 = sand.u32 15, %s654
    %v656 = vld [vmem:[%s646] sm:%s655]
    %v657 = vunpack.c.l.bf16 %v656
    %v658 = vunpack.c.h.bf16 %v656
    %s659 = scalar_lea.vmem [#allocation1], 56
    %660 = vst [vmem:[%s659] sm:%s4] %v657
    %s661 = smul.addr 4, 6
    %s662 = scalar_lea.vmem %s0, %s661
    %s663 = sshrl.u32 %s4, 1
    %s664 = sor.u32 %s4, %s663
    %s665 = sand.u32 %s664, 85
    %s666 = sshrl.u32 %s665, 1
    %s667 = sor.u32 %s665, %s666
    %s668 = sand.u32 51, %s667
    %s669 = sshrl.u32 %s668, 2
    %s670 = sor.u32 %s668, %s669
    %s671 = sand.u32 15, %s670
    %v672 = vld [vmem:[%s662] sm:%s671]
    %v673 = vunpack.c.l.bf16 %v672
    %v674 = vunpack.c.h.bf16 %v672
    %s675 = scalar_lea.vmem [#allocation1], 48
    %676 = vst [vmem:[%s675] sm:%s4] %v673
    %s677 = smul.addr 4, 5
    %s678 = scalar_lea.vmem %s0, %s677
    %s679 = sshrl.u32 %s4, 1
    %s680 = sor.u32 %s4, %s679
    %s681 = sand.u32 %s680, 85
    %s682 = sshrl.u32 %s681, 1
    %s683 = sor.u32 %s681, %s682
    %s684 = sand.u32 51, %s683
    %s685 = sshrl.u32 %s684, 2
    %s686 = sor.u32 %s684, %s685
    %s687 = sand.u32 15, %s686
    %v688 = vld [vmem:[%s678] sm:%s687]
    %v689 = vunpack.c.l.bf16 %v688
    %v690 = vunpack.c.h.bf16 %v688
    %s691 = scalar_lea.vmem [#allocation1], 40
    %692 = vst [vmem:[%s691] sm:%s4] %v689
    %s693 = smul.addr 4, 4
    %s694 = scalar_lea.vmem %s0, %s693
    %s695 = sshrl.u32 %s4, 1
    %s696 = sor.u32 %s4, %s695
    %s697 = sand.u32 %s696, 85
    %s698 = sshrl.u32 %s697, 1
    %s699 = sor.u32 %s697, %s698
    %s700 = sand.u32 51, %s699
    %s701 = sshrl.u32 %s700, 2
    %s702 = sor.u32 %s700, %s701
    %s703 = sand.u32 15, %s702
    %v704 = vld [vmem:[%s694] sm:%s703]
    %v705 = vunpack.c.l.bf16 %v704
    %v706 = vunpack.c.h.bf16 %v704
    %s707 = scalar_lea.vmem [#allocation1], 32
    %708 = vst [vmem:[%s707] sm:%s4] %v705
    %s709 = smul.addr 4, 3
    %s710 = scalar_lea.vmem %s0, %s709
    %s711 = sshrl.u32 %s4, 1
    %s712 = sor.u32 %s4, %s711
    %s713 = sand.u32 %s712, 85
    %s714 = sshrl.u32 %s713, 1
    %s715 = sor.u32 %s713, %s714
    %s716 = sand.u32 51, %s715
    %s717 = sshrl.u32 %s716, 2
    %s718 = sor.u32 %s716, %s717
    %s719 = sand.u32 15, %s718
    %v720 = vld [vmem:[%s710] sm:%s719]
    %v721 = vunpack.c.l.bf16 %v720
    %v722 = vunpack.c.h.bf16 %v720
    %s723 = scalar_lea.vmem [#allocation1], 24
    %724 = vst [vmem:[%s723] sm:%s4] %v721
    %s725 = smul.addr 4, 2
    %s726 = scalar_lea.vmem %s0, %s725
    %s727 = sshrl.u32 %s4, 1
    %s728 = sor.u32 %s4, %s727
    %s729 = sand.u32 %s728, 85
    %s730 = sshrl.u32 %s729, 1
    %s731 = sor.u32 %s729, %s730
    %s732 = sand.u32 51, %s731
    %s733 = sshrl.u32 %s732, 2
    %s734 = sor.u32 %s732, %s733
    %s735 = sand.u32 15, %s734
    %v736 = vld [vmem:[%s726] sm:%s735]
    %v737 = vunpack.c.l.bf16 %v736
    %v738 = vunpack.c.h.bf16 %v736
    %s739 = scalar_lea.vmem [#allocation1], 16
    %740 = vst [vmem:[%s739] sm:%s4] %v737
    %s741 = scalar_lea.vmem %s0, 4
    %s742 = sshrl.u32 %s4, 1
    %s743 = sor.u32 %s4, %s742
    %s744 = sand.u32 %s743, 85
    %s745 = sshrl.u32 %s744, 1
    %s746 = sor.u32 %s744, %s745
    %s747 = sand.u32 51, %s746
    %s748 = sshrl.u32 %s747, 2
    %s749 = sor.u32 %s747, %s748
    %s750 = sand.u32 15, %s749
    %v751 = vld [vmem:[%s741] sm:%s750]
    %v752 = vunpack.c.l.bf16 %v751
    %v753 = vunpack.c.h.bf16 %v751
    %s754 = scalar_lea.vmem [#allocation1], 8
    %755 = vst [vmem:[%s754] sm:%s4] %v752
    %s756 = sshrl.u32 %s4, 1
    %s757 = sor.u32 %s4, %s756
    %s758 = sand.u32 %s757, 85
    %s759 = sshrl.u32 %s758, 1
    %s760 = sor.u32 %s758, %s759
    %s761 = sand.u32 51, %s760
    %s762 = sshrl.u32 %s761, 2
    %s763 = sor.u32 %s761, %s762
    %s764 = sand.u32 15, %s763
    %v765 = vld [vmem:[%s0] sm:%s764]
    %v766 = vunpack.c.l.bf16 %v765
    %v767 = vunpack.c.h.bf16 %v765
    %768 = vst [vmem:[#allocation1] sm:%s4] %v766
    %v769 = vld [vmem:[#allocation1] sm:$0xff]
    %vm770 = vcmask 203776
    %771 = vst.msk [vmem:[#allocation0] sm:$0xff] %vm770, %v769
    %s772 = scalar_lea.vmem [#allocation1], 8
    %v773 = vld [vmem:[%s772] sm:$0xf]
    %vm774 = vcmask 203776
    %s775 = scalar_lea.vmem [#allocation0], 8
    %776 = vst.msk [vmem:[%s775] sm:$0xf] %vm774, %v773
    %s777 = scalar_lea.vmem [#allocation1], 16
    %v778 = vld [vmem:[%s777] sm:$0xff]
    %vm779 = vcmask 203776
    %s780 = scalar_lea.vmem [#allocation0], 12
    %781 = vst.msk [vmem:[%s780] sm:$0xff] %vm779, %v778
    %s782 = scalar_lea.vmem [#allocation1], 24
    %v783 = vld [vmem:[%s782] sm:$0xf]
    %vm784 = vcmask 203776
    %s785 = scalar_lea.vmem [#allocation0], 20
    %786 = vst.msk [vmem:[%s785] sm:$0xf] %vm784, %v783
    %s787 = scalar_lea.vmem [#allocation1], 32
    %v788 = vld [vmem:[%s787] sm:$0xff]
    %vm789 = vcmask 203776
    %s790 = scalar_lea.vmem [#allocation0], 24
    %791 = vst.msk [vmem:[%s790] sm:$0xff] %vm789, %v788
    %s792 = scalar_lea.vmem [#allocation1], 40
    %v793 = vld [vmem:[%s792] sm:$0xf]
    %vm794 = vcmask 203776
    %s795 = scalar_lea.vmem [#allocation0], 32
    %796 = vst.msk [vmem:[%s795] sm:$0xf] %vm794, %v793
    %s797 = scalar_lea.vmem [#allocation1], 48
    %v798 = vld [vmem:[%s797] sm:$0xff]
    %vm799 = vcmask 203776
    %s800 = scalar_lea.vmem [#allocation0], 36
    %801 = vst.msk [vmem:[%s800] sm:$0xff] %vm799, %v798
    %s802 = scalar_lea.vmem [#allocation1], 56
    %v803 = vld [vmem:[%s802] sm:$0xf]
    %vm804 = vcmask 203776
    %s805 = scalar_lea.vmem [#allocation0], 44
    %806 = vst.msk [vmem:[%s805] sm:$0xf] %vm804, %v803
    %s807 = scalar_lea.vmem [#allocation1], 64
    %v808 = vld [vmem:[%s807] sm:$0xff]
    %vm809 = vcmask 203776
    %s810 = scalar_lea.vmem [#allocation0], 48
    %811 = vst.msk [vmem:[%s810] sm:$0xff] %vm809, %v808
    %s812 = scalar_lea.vmem [#allocation1], 72
    %v813 = vld [vmem:[%s812] sm:$0xf]
    %vm814 = vcmask 203776
    %s815 = scalar_lea.vmem [#allocation0], 56
    %816 = vst.msk [vmem:[%s815] sm:$0xf] %vm814, %v813
    %s817 = scalar_lea.vmem [#allocation1], 80
    %v818 = vld [vmem:[%s817] sm:$0xff]
    %vm819 = vcmask 203776
    %s820 = scalar_lea.vmem [#allocation0], 60
    %821 = vst.msk [vmem:[%s820] sm:$0xff] %vm819, %v818
    %s822 = scalar_lea.vmem [#allocation1], 88
    %v823 = vld [vmem:[%s822] sm:$0xf]
    %vm824 = vcmask 203776
    %s825 = scalar_lea.vmem [#allocation0], 68
    %826 = vst.msk [vmem:[%s825] sm:$0xf] %vm824, %v823
    %s827 = scalar_lea.vmem [#allocation1], 96
    %v828 = vld [vmem:[%s827] sm:$0xff]
    %vm829 = vcmask 203776
    %s830 = scalar_lea.vmem [#allocation0], 72
    %831 = vst.msk [vmem:[%s830] sm:$0xff] %vm829, %v828
    %s832 = scalar_lea.vmem [#allocation1], 104
    %v833 = vld [vmem:[%s832] sm:$0xf]
    %vm834 = vcmask 203776
    %s835 = scalar_lea.vmem [#allocation0], 80
    %836 = vst.msk [vmem:[%s835] sm:$0xf] %vm834, %v833
    %s837 = scalar_lea.vmem [#allocation1], 112
    %v838 = vld [vmem:[%s837] sm:$0xff]
    %vm839 = vcmask 203776
    %s840 = scalar_lea.vmem [#allocation0], 84
    %841 = vst.msk [vmem:[%s840] sm:$0xff] %vm839, %v838
    %s842 = scalar_lea.vmem [#allocation1], 120
    %v843 = vld [vmem:[%s842] sm:$0xf]
    %vm844 = vcmask 203776
    %s845 = scalar_lea.vmem [#allocation0], 92
    %846 = vst.msk [vmem:[%s845] sm:$0xf] %vm844, %v843
    %s847 = scalar_lea.vmem [#allocation1], 128
    %v848 = vld [vmem:[%s847] sm:$0xff]
    %vm849 = vcmask 203776
    %s850 = scalar_lea.vmem [#allocation0], 96
    %851 = vst.msk [vmem:[%s850] sm:$0xff] %vm849, %v848
    %s852 = scalar_lea.vmem [#allocation1], 136
    %v853 = vld [vmem:[%s852] sm:$0xf]
    %vm854 = vcmask 203776
    %s855 = scalar_lea.vmem [#allocation0], 104
    %856 = vst.msk [vmem:[%s855] sm:$0xf] %vm854, %v853
    %s857 = scalar_lea.vmem [#allocation1], 144
    %v858 = vld [vmem:[%s857] sm:$0xff]
    %vm859 = vcmask 203776
    %s860 = scalar_lea.vmem [#allocation0], 108
    %861 = vst.msk [vmem:[%s860] sm:$0xff] %vm859, %v858
    %s862 = scalar_lea.vmem [#allocation1], 152
    %v863 = vld [vmem:[%s862] sm:$0xf]
    %vm864 = vcmask 203776
    %s865 = scalar_lea.vmem [#allocation0], 116
    %866 = vst.msk [vmem:[%s865] sm:$0xf] %vm864, %v863
    %s867 = scalar_lea.vmem [#allocation1], 160
    %v868 = vld [vmem:[%s867] sm:$0xff]
    %vm869 = vcmask 203776
    %s870 = scalar_lea.vmem [#allocation0], 120
    %871 = vst.msk [vmem:[%s870] sm:$0xff] %vm869, %v868
    %s872 = scalar_lea.vmem [#allocation1], 168
    %v873 = vld [vmem:[%s872] sm:$0xf]
    %vm874 = vcmask 203776
    %s875 = scalar_lea.vmem [#allocation0], 128
    %876 = vst.msk [vmem:[%s875] sm:$0xf] %vm874, %v873
    %s877 = scalar_lea.vmem [#allocation1], 176
    %v878 = vld [vmem:[%s877] sm:$0xff]
    %vm879 = vcmask 203776
    %s880 = scalar_lea.vmem [#allocation0], 132
    %881 = vst.msk [vmem:[%s880] sm:$0xff] %vm879, %v878
    %s882 = scalar_lea.vmem [#allocation1], 184
    %v883 = vld [vmem:[%s882] sm:$0xf]
    %vm884 = vcmask 203776
    %s885 = scalar_lea.vmem [#allocation0], 140
    %886 = vst.msk [vmem:[%s885] sm:$0xf] %vm884, %v883
    %s887 = scalar_lea.vmem [#allocation1], 192
    %v888 = vld [vmem:[%s887] sm:$0xff]
    %vm889 = vcmask 203776
    %s890 = scalar_lea.vmem [#allocation0], 144
    %891 = vst.msk [vmem:[%s890] sm:$0xff] %vm889, %v888
    %s892 = scalar_lea.vmem [#allocation1], 200
    %v893 = vld [vmem:[%s892] sm:$0xf]
    %vm894 = vcmask 203776
    %s895 = scalar_lea.vmem [#allocation0], 152
    %896 = vst.msk [vmem:[%s895] sm:$0xf] %vm894, %v893
    %s897 = scalar_lea.vmem [#allocation1], 208
    %v898 = vld [vmem:[%s897] sm:$0xff]
    %vm899 = vcmask 203776
    %s900 = scalar_lea.vmem [#allocation0], 156
    %901 = vst.msk [vmem:[%s900] sm:$0xff] %vm899, %v898
    %s902 = scalar_lea.vmem [#allocation1], 216
    %v903 = vld [vmem:[%s902] sm:$0xf]
    %vm904 = vcmask 203776
    %s905 = scalar_lea.vmem [#allocation0], 164
    %906 = vst.msk [vmem:[%s905] sm:$0xf] %vm904, %v903
    %s907 = scalar_lea.vmem [#allocation1], 224
    %v908 = vld [vmem:[%s907] sm:$0xff]
    %vm909 = vcmask 203776
    %s910 = scalar_lea.vmem [#allocation0], 168
    %911 = vst.msk [vmem:[%s910] sm:$0xff] %vm909, %v908
    %s912 = scalar_lea.vmem [#allocation1], 232
    %v913 = vld [vmem:[%s912] sm:$0xf]
    %vm914 = vcmask 203776
    %s915 = scalar_lea.vmem [#allocation0], 176
    %916 = vst.msk [vmem:[%s915] sm:$0xf] %vm914, %v913
    %s917 = scalar_lea.vmem [#allocation1], 240
    %v918 = vld [vmem:[%s917] sm:$0xff]
    %vm919 = vcmask 203776
    %s920 = scalar_lea.vmem [#allocation0], 180
    %921 = vst.msk [vmem:[%s920] sm:$0xff] %vm919, %v918
    %s922 = scalar_lea.vmem [#allocation1], 248
    %v923 = vld [vmem:[%s922] sm:$0xf]
    %vm924 = vcmask 203776
    %s925 = scalar_lea.vmem [#allocation0], 188
    %926 = vst.msk [vmem:[%s925] sm:$0xf] %vm924, %v923
    %s927 = scalar_lea.vmem [#allocation1], 256
    %v928 = vld [vmem:[%s927] sm:$0xff]
    %vm929 = vcmask 203776
    %s930 = scalar_lea.vmem [#allocation0], 192
    %931 = vst.msk [vmem:[%s930] sm:$0xff] %vm929, %v928
    %s932 = scalar_lea.vmem [#allocation1], 264
    %v933 = vld [vmem:[%s932] sm:$0xf]
    %vm934 = vcmask 203776
    %s935 = scalar_lea.vmem [#allocation0], 200
    %936 = vst.msk [vmem:[%s935] sm:$0xf] %vm934, %v933
    %s937 = scalar_lea.vmem [#allocation1], 272
    %v938 = vld [vmem:[%s937] sm:$0xff]
    %vm939 = vcmask 203776
    %s940 = scalar_lea.vmem [#allocation0], 204
    %941 = vst.msk [vmem:[%s940] sm:$0xff] %vm939, %v938
    %s942 = scalar_lea.vmem [#allocation1], 280
    %v943 = vld [vmem:[%s942] sm:$0xf]
    %vm944 = vcmask 203776
    %s945 = scalar_lea.vmem [#allocation0], 212
    %946 = vst.msk [vmem:[%s945] sm:$0xf] %vm944, %v943
    %s947 = scalar_lea.vmem [#allocation1], 288
    %v948 = vld [vmem:[%s947] sm:$0xff]
    %vm949 = vcmask 203776
    %s950 = scalar_lea.vmem [#allocation0], 216
    %951 = vst.msk [vmem:[%s950] sm:$0xff] %vm949, %v948
    %s952 = scalar_lea.vmem [#allocation1], 296
    %v953 = vld [vmem:[%s952] sm:$0xf]
    %vm954 = vcmask 203776
    %s955 = scalar_lea.vmem [#allocation0], 224
    %956 = vst.msk [vmem:[%s955] sm:$0xf] %vm954, %v953
    %s957 = scalar_lea.vmem [#allocation1], 304
    %v958 = vld [vmem:[%s957] sm:$0xff]
    %vm959 = vcmask 203776
    %s960 = scalar_lea.vmem [#allocation0], 228
    %961 = vst.msk [vmem:[%s960] sm:$0xff] %vm959, %v958
    %s962 = scalar_lea.vmem [#allocation1], 312
    %v963 = vld [vmem:[%s962] sm:$0xf]
    %vm964 = vcmask 203776
    %s965 = scalar_lea.vmem [#allocation0], 236
    %966 = vst.msk [vmem:[%s965] sm:$0xf] %vm964, %v963
    %s967 = scalar_lea.vmem [#allocation1], 320
    %v968 = vld [vmem:[%s967] sm:$0xff]
    %vm969 = vcmask 203776
    %s970 = scalar_lea.vmem [#allocation0], 240
    %971 = vst.msk [vmem:[%s970] sm:$0xff] %vm969, %v968
    %s972 = scalar_lea.vmem [#allocation1], 328
    %v973 = vld [vmem:[%s972] sm:$0xf]
    %vm974 = vcmask 203776
    %s975 = scalar_lea.vmem [#allocation0], 248
    %976 = vst.msk [vmem:[%s975] sm:$0xf] %vm974, %v973
    %s977 = scalar_lea.vmem [#allocation1], 336
    %v978 = vld [vmem:[%s977] sm:$0xff]
    %vm979 = vcmask 203776
    %s980 = scalar_lea.vmem [#allocation0], 252
    %981 = vst.msk [vmem:[%s980] sm:$0xff] %vm979, %v978
    %s982 = scalar_lea.vmem [#allocation1], 344
    %v983 = vld [vmem:[%s982] sm:$0xf]
    %vm984 = vcmask 203776
    %s985 = scalar_lea.vmem [#allocation0], 260
    %986 = vst.msk [vmem:[%s985] sm:$0xf] %vm984, %v983
    %s987 = scalar_lea.vmem [#allocation1], 352
    %v988 = vld [vmem:[%s987] sm:$0xff]
    %vm989 = vcmask 203776
    %s990 = scalar_lea.vmem [#allocation0], 264
    %991 = vst.msk [vmem:[%s990] sm:$0xff] %vm989, %v988
    %s992 = scalar_lea.vmem [#allocation1], 360
    %v993 = vld [vmem:[%s992] sm:$0xf]
    %vm994 = vcmask 203776
    %s995 = scalar_lea.vmem [#allocation0], 272
    %996 = vst.msk [vmem:[%s995] sm:$0xf] %vm994, %v993
    %s997 = scalar_lea.vmem [#allocation1], 368
    %v998 = vld [vmem:[%s997] sm:$0xff]
    %vm999 = vcmask 203776
    %s1000 = scalar_lea.vmem [#allocation0], 276
    %1001 = vst.msk [vmem:[%s1000] sm:$0xff] %vm999, %v998
    %s1002 = scalar_lea.vmem [#allocation1], 376
    %v1003 = vld [vmem:[%s1002] sm:$0xf]
    %vm1004 = vcmask 203776
    %s1005 = scalar_lea.vmem [#allocation0], 284
    %1006 = vst.msk [vmem:[%s1005] sm:$0xf] %vm1004, %v1003
    %s1008 = smul.u32 4, 2
    %s1009 = sshllo.u32 0, %s1008
    %s1010 = sshrl.u32 %s1008, 1
    %v1011 = vld [vmem:[#allocation0] sm:%s1009]
    %v1012 = vpack.c.bf16 0.0, %v1011
    %s1013 = sshllo.u32 0, %s1010
    %1014 = vst [vmem:[%s1] sm:%s1013] %v1012
    %s1015 = scalar_lea.vmem [#allocation0], 8
    %v1016 = vld [vmem:[%s1015] sm:%s1009]
    %v1017 = vpack.c.bf16 0.0, %v1016
    %s1018 = sshllo.u32 0, %s1010
    %s1019 = scalar_lea.vmem %s1, 4
    %1020 = vst [vmem:[%s1019] sm:%s1018] %v1017
    %s1021 = scalar_lea.vmem [#allocation0], 16
    %v1022 = vld [vmem:[%s1021] sm:%s1009]
    %v1023 = vpack.c.bf16 0.0, %v1022
    %s1024 = sshllo.u32 0, %s1010
    %s1025 = smul.addr 4, 2
    %s1026 = scalar_lea.vmem %s1, %s1025
    %1027 = vst [vmem:[%s1026] sm:%s1024] %v1023
    %s1028 = scalar_lea.vmem [#allocation0], 24
    %v1029 = vld [vmem:[%s1028] sm:%s1009]
    %v1030 = vpack.c.bf16 0.0, %v1029
    %s1031 = sshllo.u32 0, %s1010
    %s1032 = smul.addr 4, 3
    %s1033 = scalar_lea.vmem %s1, %s1032
    %1034 = vst [vmem:[%s1033] sm:%s1031] %v1030
    %s1035 = scalar_lea.vmem [#allocation0], 32
    %v1036 = vld [vmem:[%s1035] sm:%s1009]
    %v1037 = vpack.c.bf16 0.0, %v1036
    %s1038 = sshllo.u32 0, %s1010
    %s1039 = smul.addr 4, 4
    %s1040 = scalar_lea.vmem %s1, %s1039
    %1041 = vst [vmem:[%s1040] sm:%s1038] %v1037
    %s1042 = scalar_lea.vmem [#allocation0], 40
    %v1043 = vld [vmem:[%s1042] sm:%s1009]
    %v1044 = vpack.c.bf16 0.0, %v1043
    %s1045 = sshllo.u32 0, %s1010
    %s1046 = smul.addr 4, 5
    %s1047 = scalar_lea.vmem %s1, %s1046
    %1048 = vst [vmem:[%s1047] sm:%s1045] %v1044
    %s1049 = scalar_lea.vmem [#allocation0], 48
    %v1050 = vld [vmem:[%s1049] sm:%s1009]
    %v1051 = vpack.c.bf16 0.0, %v1050
    %s1052 = sshllo.u32 0, %s1010
    %s1053 = smul.addr 4, 6
    %s1054 = scalar_lea.vmem %s1, %s1053
    %1055 = vst [vmem:[%s1054] sm:%s1052] %v1051
    %s1056 = scalar_lea.vmem [#allocation0], 56
    %v1057 = vld [vmem:[%s1056] sm:%s1009]
    %v1058 = vpack.c.bf16 0.0, %v1057
    %s1059 = sshllo.u32 0, %s1010
    %s1060 = smul.addr 4, 7
    %s1061 = scalar_lea.vmem %s1, %s1060
    %1062 = vst [vmem:[%s1061] sm:%s1059] %v1058
    %s1063 = scalar_lea.vmem [#allocation0], 64
    %v1064 = vld [vmem:[%s1063] sm:%s1009]
    %v1065 = vpack.c.bf16 0.0, %v1064
    %s1066 = sshllo.u32 0, %s1010
    %s1067 = smul.addr 4, 8
    %s1068 = scalar_lea.vmem %s1, %s1067
    %1069 = vst [vmem:[%s1068] sm:%s1066] %v1065
    %s1070 = scalar_lea.vmem [#allocation0], 72
    %v1071 = vld [vmem:[%s1070] sm:%s1009]
    %v1072 = vpack.c.bf16 0.0, %v1071
    %s1073 = sshllo.u32 0, %s1010
    %s1074 = smul.addr 4, 9
    %s1075 = scalar_lea.vmem %s1, %s1074
    %1076 = vst [vmem:[%s1075] sm:%s1073] %v1072
    %s1077 = scalar_lea.vmem [#allocation0], 80
    %v1078 = vld [vmem:[%s1077] sm:%s1009]
    %v1079 = vpack.c.bf16 0.0, %v1078
    %s1080 = sshllo.u32 0, %s1010
    %s1081 = smul.addr 4, 10
    %s1082 = scalar_lea.vmem %s1, %s1081
    %1083 = vst [vmem:[%s1082] sm:%s1080] %v1079
    %s1084 = scalar_lea.vmem [#allocation0], 88
    %v1085 = vld [vmem:[%s1084] sm:%s1009]
    %v1086 = vpack.c.bf16 0.0, %v1085
    %s1087 = sshllo.u32 0, %s1010
    %s1088 = smul.addr 4, 11
    %s1089 = scalar_lea.vmem %s1, %s1088
    %1090 = vst [vmem:[%s1089] sm:%s1087] %v1086
    %s1091 = scalar_lea.vmem [#allocation0], 96
    %v1092 = vld [vmem:[%s1091] sm:%s1009]
    %v1093 = vpack.c.bf16 0.0, %v1092
    %s1094 = sshllo.u32 0, %s1010
    %s1095 = smul.addr 4, 12
    %s1096 = scalar_lea.vmem %s1, %s1095
    %1097 = vst [vmem:[%s1096] sm:%s1094] %v1093
    %s1098 = scalar_lea.vmem [#allocation0], 104
    %v1099 = vld [vmem:[%s1098] sm:%s1009]
    %v1100 = vpack.c.bf16 0.0, %v1099
    %s1101 = sshllo.u32 0, %s1010
    %s1102 = smul.addr 4, 13
    %s1103 = scalar_lea.vmem %s1, %s1102
    %1104 = vst [vmem:[%s1103] sm:%s1101] %v1100
    %s1105 = scalar_lea.vmem [#allocation0], 112
    %v1106 = vld [vmem:[%s1105] sm:%s1009]
    %v1107 = vpack.c.bf16 0.0, %v1106
    %s1108 = sshllo.u32 0, %s1010
    %s1109 = smul.addr 4, 14
    %s1110 = scalar_lea.vmem %s1, %s1109
    %1111 = vst [vmem:[%s1110] sm:%s1108] %v1107
    %s1112 = scalar_lea.vmem [#allocation0], 120
    %v1113 = vld [vmem:[%s1112] sm:%s1009]
    %v1114 = vpack.c.bf16 0.0, %v1113
    %s1115 = sshllo.u32 0, %s1010
    %s1116 = smul.addr 4, 15
    %s1117 = scalar_lea.vmem %s1, %s1116
    %1118 = vst [vmem:[%s1117] sm:%s1115] %v1114
    %s1119 = scalar_lea.vmem [#allocation0], 128
    %v1120 = vld [vmem:[%s1119] sm:%s1009]
    %v1121 = vpack.c.bf16 0.0, %v1120
    %s1122 = sshllo.u32 0, %s1010
    %s1123 = smul.addr 4, 16
    %s1124 = scalar_lea.vmem %s1, %s1123
    %1125 = vst [vmem:[%s1124] sm:%s1122] %v1121
    %s1126 = scalar_lea.vmem [#allocation0], 136
    %v1127 = vld [vmem:[%s1126] sm:%s1009]
    %v1128 = vpack.c.bf16 0.0, %v1127
    %s1129 = sshllo.u32 0, %s1010
    %s1130 = smul.addr 4, 17
    %s1131 = scalar_lea.vmem %s1, %s1130
    %1132 = vst [vmem:[%s1131] sm:%s1129] %v1128
    %s1133 = scalar_lea.vmem [#allocation0], 144
    %v1134 = vld [vmem:[%s1133] sm:%s1009]
    %v1135 = vpack.c.bf16 0.0, %v1134
    %s1136 = sshllo.u32 0, %s1010
    %s1137 = smul.addr 4, 18
    %s1138 = scalar_lea.vmem %s1, %s1137
    %1139 = vst [vmem:[%s1138] sm:%s1136] %v1135
    %s1140 = scalar_lea.vmem [#allocation0], 152
    %v1141 = vld [vmem:[%s1140] sm:%s1009]
    %v1142 = vpack.c.bf16 0.0, %v1141
    %s1143 = sshllo.u32 0, %s1010
    %s1144 = smul.addr 4, 19
    %s1145 = scalar_lea.vmem %s1, %s1144
    %1146 = vst [vmem:[%s1145] sm:%s1143] %v1142
    %s1147 = scalar_lea.vmem [#allocation0], 160
    %v1148 = vld [vmem:[%s1147] sm:%s1009]
    %v1149 = vpack.c.bf16 0.0, %v1148
    %s1150 = sshllo.u32 0, %s1010
    %s1151 = smul.addr 4, 20
    %s1152 = scalar_lea.vmem %s1, %s1151
    %1153 = vst [vmem:[%s1152] sm:%s1150] %v1149
    %s1154 = scalar_lea.vmem [#allocation0], 168
    %v1155 = vld [vmem:[%s1154] sm:%s1009]
    %v1156 = vpack.c.bf16 0.0, %v1155
    %s1157 = sshllo.u32 0, %s1010
    %s1158 = smul.addr 4, 21
    %s1159 = scalar_lea.vmem %s1, %s1158
    %1160 = vst [vmem:[%s1159] sm:%s1157] %v1156
    %s1161 = scalar_lea.vmem [#allocation0], 176
    %v1162 = vld [vmem:[%s1161] sm:%s1009]
    %v1163 = vpack.c.bf16 0.0, %v1162
    %s1164 = sshllo.u32 0, %s1010
    %s1165 = smul.addr 4, 22
    %s1166 = scalar_lea.vmem %s1, %s1165
    %1167 = vst [vmem:[%s1166] sm:%s1164] %v1163
    %s1168 = scalar_lea.vmem [#allocation0], 184
    %v1169 = vld [vmem:[%s1168] sm:%s1009]
    %v1170 = vpack.c.bf16 0.0, %v1169
    %s1171 = sshllo.u32 0, %s1010
    %s1172 = smul.addr 4, 23
    %s1173 = scalar_lea.vmem %s1, %s1172
    %1174 = vst [vmem:[%s1173] sm:%s1171] %v1170
    %s1175 = scalar_lea.vmem [#allocation0], 192
    %v1176 = vld [vmem:[%s1175] sm:%s1009]
    %v1177 = vpack.c.bf16 0.0, %v1176
    %s1178 = sshllo.u32 0, %s1010
    %s1179 = smul.addr 4, 24
    %s1180 = scalar_lea.vmem %s1, %s1179
    %1181 = vst [vmem:[%s1180] sm:%s1178] %v1177
    %s1182 = scalar_lea.vmem [#allocation0], 200
    %v1183 = vld [vmem:[%s1182] sm:%s1009]
    %v1184 = vpack.c.bf16 0.0, %v1183
    %s1185 = sshllo.u32 0, %s1010
    %s1186 = smul.addr 4, 25
    %s1187 = scalar_lea.vmem %s1, %s1186
    %1188 = vst [vmem:[%s1187] sm:%s1185] %v1184
    %s1189 = scalar_lea.vmem [#allocation0], 208
    %v1190 = vld [vmem:[%s1189] sm:%s1009]
    %v1191 = vpack.c.bf16 0.0, %v1190
    %s1192 = sshllo.u32 0, %s1010
    %s1193 = smul.addr 4, 26
    %s1194 = scalar_lea.vmem %s1, %s1193
    %1195 = vst [vmem:[%s1194] sm:%s1192] %v1191
    %s1196 = scalar_lea.vmem [#allocation0], 216
    %v1197 = vld [vmem:[%s1196] sm:%s1009]
    %v1198 = vpack.c.bf16 0.0, %v1197
    %s1199 = sshllo.u32 0, %s1010
    %s1200 = smul.addr 4, 27
    %s1201 = scalar_lea.vmem %s1, %s1200
    %1202 = vst [vmem:[%s1201] sm:%s1199] %v1198
    %s1203 = scalar_lea.vmem [#allocation0], 224
    %v1204 = vld [vmem:[%s1203] sm:%s1009]
    %v1205 = vpack.c.bf16 0.0, %v1204
    %s1206 = sshllo.u32 0, %s1010
    %s1207 = smul.addr 4, 28
    %s1208 = scalar_lea.vmem %s1, %s1207
    %1209 = vst [vmem:[%s1208] sm:%s1206] %v1205
    %s1210 = scalar_lea.vmem [#allocation0], 232
    %v1211 = vld [vmem:[%s1210] sm:%s1009]
    %v1212 = vpack.c.bf16 0.0, %v1211
    %s1213 = sshllo.u32 0, %s1010
    %s1214 = smul.addr 4, 29
    %s1215 = scalar_lea.vmem %s1, %s1214
    %1216 = vst [vmem:[%s1215] sm:%s1213] %v1212
    %s1217 = scalar_lea.vmem [#allocation0], 240
    %v1218 = vld [vmem:[%s1217] sm:%s1009]
    %v1219 = vpack.c.bf16 0.0, %v1218
    %s1220 = sshllo.u32 0, %s1010
    %s1221 = smul.addr 4, 30
    %s1222 = scalar_lea.vmem %s1, %s1221
    %1223 = vst [vmem:[%s1222] sm:%s1220] %v1219
    %s1224 = scalar_lea.vmem [#allocation0], 248
    %v1225 = vld [vmem:[%s1224] sm:%s1009]
    %v1226 = vpack.c.bf16 0.0, %v1225
    %s1227 = sshllo.u32 0, %s1010
    %s1228 = smul.addr 4, 31
    %s1229 = scalar_lea.vmem %s1, %s1228
    %1230 = vst [vmem:[%s1229] sm:%s1227] %v1226
    %s1231 = scalar_lea.vmem [#allocation0], 256
    %v1232 = vld [vmem:[%s1231] sm:%s1009]
    %v1233 = vpack.c.bf16 0.0, %v1232
    %s1234 = sshllo.u32 0, %s1010
    %s1235 = smul.addr 4, 32
    %s1236 = scalar_lea.vmem %s1, %s1235
    %1237 = vst [vmem:[%s1236] sm:%s1234] %v1233
    %s1238 = scalar_lea.vmem [#allocation0], 264
    %v1239 = vld [vmem:[%s1238] sm:%s1009]
    %v1240 = vpack.c.bf16 0.0, %v1239
    %s1241 = sshllo.u32 0, %s1010
    %s1242 = smul.addr 4, 33
    %s1243 = scalar_lea.vmem %s1, %s1242
    %1244 = vst [vmem:[%s1243] sm:%s1241] %v1240
    %s1245 = scalar_lea.vmem [#allocation0], 272
    %v1246 = vld [vmem:[%s1245] sm:%s1009]
    %v1247 = vpack.c.bf16 0.0, %v1246
    %s1248 = sshllo.u32 0, %s1010
    %s1249 = smul.addr 4, 34
    %s1250 = scalar_lea.vmem %s1, %s1249
    %1251 = vst [vmem:[%s1250] sm:%s1248] %v1247
    %s1252 = scalar_lea.vmem [#allocation0], 280
    %v1253 = vld [vmem:[%s1252] sm:%s1009]
    %v1254 = vpack.c.bf16 0.0, %v1253
    %s1255 = sshllo.u32 0, %s1010
    %s1256 = smul.addr 4, 35
    %s1257 = scalar_lea.vmem %s1, %s1256
    %1258 = vst [vmem:[%s1257] sm:%s1255] %v1254

// kernel: net_forward.3
$region0: #{net_forward.3}
  #allocation0 [shape = 'u32[]', space=smem, size = 0x4, offset = 0x4, fixed_abs, tag = 'smem constant byte address 0x4 - core index']
  #allocation1 [shape = 'u32[144,128]{1,0:T(1,128)}', space=vmem, size = 0x12000, scoped, tag = 'internal scratch']
  %s0 = inlined_call_operand.vmem [shape: bf16[288,128], index: 0, kind: input, shape index: {}]
  %s1 = inlined_call_operand.vmem [shape: bf16[288,128], index: 1, kind: input, shape index: {}]
  %s2 = inlined_call_operand.vmem [shape: bf16[288,128], index: 2, kind: input, shape index: {}]
  %s3 = inlined_call_operand.vmem [shape: bf16[288,128], index: 3, kind: input, shape index: {}]
  %s4 = inlined_call_operand.vmem [shape: bf16[128,128], index: 4, kind: input, shape index: {}]
  %s5 = inlined_call_operand.vmem [shape: f32[1,128], index: 5, kind: input, shape index: {}]
  %s6 = inlined_call_operand.vmem [shape: f32[288,128], index: 6, kind: output, shape index: {}]
  %s7 = sld [smem:[#allocation0]]
  $region34: #{net_forward.3} parent=0
    _
  %s9 = ssub.s32 1, %s7
  %s10 = scalar_select 0, %s9, %s7
  // Predicated region
  $region2: #{net_forward.3} parent=0 // pred_check
    _
  $region3: #{net_forward.3} parent=0 // pred_check_branch
    %12 = sbr.rel (0) target = $region5
  $region4: #{net_forward.3} parent=0 // pred_region
    _
  $region5: #{net_forward.3} parent=0 // pred_fallthru
    _
  // Predicated region
  $region6: #{net_forward.3} parent=0 // pred_check
    _
  $region7: #{net_forward.3} parent=0 // pred_check_branch
    %14 = sbr.rel (0) target = $region9
  $region8: #{net_forward.3} parent=0 // pred_region
    _
  $region9: #{net_forward.3} parent=0 // pred_fallthru
    _
  // Predicated region
  $region10: #{net_forward.3} parent=0 // pred_check
    _
  $region11: #{net_forward.3} parent=0 // pred_check_branch
    %16 = sbr.rel (0) target = $region13
  $region12: #{net_forward.3} parent=0 // pred_region
    _
  $region13: #{net_forward.3} parent=0 // pred_fallthru
    _
  // Predicated region
  $region14: #{net_forward.3} parent=0 // pred_check
    _
  $region15: #{net_forward.3} parent=0 // pred_check_branch
    %18 = sbr.rel (0) target = $region17
  $region16: #{net_forward.3} parent=0 // pred_region
    _
  $region17: #{net_forward.3} parent=0 // pred_fallthru
    _
  // Predicated region
  $region18: #{net_forward.3} parent=0 // pred_check
    _
  $region19: #{net_forward.3} parent=0 // pred_check_branch
    %20 = sbr.rel (0) target = $region21
  $region20: #{net_forward.3} parent=0 // pred_region
    _
  $region21: #{net_forward.3} parent=0 // pred_fallthru
    _
  // Predicated region
  $region22: #{net_forward.3} parent=0 // pred_check
    _
  $region23: #{net_forward.3} parent=0 // pred_check_branch
    %22 = sbr.rel (0) target = $region25
  $region24: #{net_forward.3} parent=0 // pred_region
    _
  $region25: #{net_forward.3} parent=0 // pred_fallthru
    _
  %v24 = vld [vmem:[%s4] sm:$0xf]
  %v25 = vld [vmem:[%s4 + $0x4] sm:$0xf]
  %v26 = vld [vmem:[%s4 + $0x8] sm:$0xf]
  %v27 = vld [vmem:[%s4 + $0xc] sm:$0xf]
  %v28 = vld [vmem:[%s4 + $0x10] sm:$0xf]
  %v29 = vld [vmem:[%s4 + $0x14] sm:$0xf]
  %v30 = vld [vmem:[%s4 + $0x18] sm:$0xf]
  %v31 = vld [vmem:[%s4 + $0x1c] sm:$0xf]
  %v32 = vld [vmem:[%s4 + $0x20] sm:$0xf]
  %v33 = vld [vmem:[%s4 + $0x24] sm:$0xf]
  %v34 = vld [vmem:[%s4 + $0x28] sm:$0xf]
  %v35 = vld [vmem:[%s4 + $0x2c] sm:$0xf]
  %v36 = vld [vmem:[%s4 + $0x30] sm:$0xf]
  %v37 = vld [vmem:[%s4 + $0x34] sm:$0xf]
  %v38 = vld [vmem:[%s4 + $0x38] sm:$0xf]
  %v39 = vld [vmem:[%s4 + $0x3c] sm:$0xf]
  %v40 = vld [vmem:[%s5] sm:$0x1]
  %v41 = vld [vmem:[%s0] sm:$0xf]
  %v42 = vld [vmem:[%s0 + $0x4] sm:$0xf]
  %v43 = vld [vmem:[%s0 + $0x8] sm:$0xf]
  %v44 = vld [vmem:[%s0 + $0xc] sm:$0xf]
  %v45 = vld [vmem:[%s0 + $0x10] sm:$0xf]
  %v46 = vld [vmem:[%s0 + $0x14] sm:$0xf]
  %v47 = vld [vmem:[%s0 + $0x18] sm:$0xf]
  %v48 = vld [vmem:[%s0 + $0x1c] sm:$0xf]
  %v49 = vld [vmem:[%s0 + $0x20] sm:$0xf]
  %v50 = vld [vmem:[%s0 + $0x24] sm:$0xf]
  %v51 = vld [vmem:[%s0 + $0x28] sm:$0xf]
  %v52 = vld [vmem:[%s0 + $0x2c] sm:$0xf]
  %v53 = vld [vmem:[%s0 + $0x30] sm:$0xf]
  %v54 = vld [vmem:[%s0 + $0x34] sm:$0xf]
  %v55 = vld [vmem:[%s0 + $0x38] sm:$0xf]
  %v56 = vld [vmem:[%s0 + $0x3c] sm:$0xf]
  %v57 = vld [vmem:[%s0 + $0x40] sm:$0xf]
  %v58 = vld [vmem:[%s0 + $0x44] sm:$0xf]
  %v59 = vld [vmem:[%s0 + $0x48] sm:$0xf]
  %v60 = vld [vmem:[%s0 + $0x4c] sm:$0xf]
  %v61 = vld [vmem:[%s0 + $0x50] sm:$0xf]
  %v62 = vld [vmem:[%s0 + $0x54] sm:$0xf]
  %v63 = vld [vmem:[%s0 + $0x58] sm:$0xf]
  %v64 = vld [vmem:[%s0 + $0x5c] sm:$0xf]
  %v65 = vld [vmem:[%s0 + $0x60] sm:$0xf]
  %v66 = vld [vmem:[%s0 + $0x64] sm:$0xf]
  %v67 = vld [vmem:[%s0 + $0x68] sm:$0xf]
  %v68 = vld [vmem:[%s0 + $0x6c] sm:$0xf]
  %v69 = vld [vmem:[%s0 + $0x70] sm:$0xf]
  %v70 = vld [vmem:[%s0 + $0x74] sm:$0xf]
  %v71 = vld [vmem:[%s0 + $0x78] sm:$0xf]
  %v72 = vld [vmem:[%s0 + $0x7c] sm:$0xf]
  %v73 = vld [vmem:[%s0 + $0x80] sm:$0xf]
  %v74 = vld [vmem:[%s0 + $0x84] sm:$0xf]
  %v75 = vld [vmem:[%s0 + $0x88] sm:$0xf]
  %v76 = vld [vmem:[%s0 + $0x8c] sm:$0xf]
  %v78 = vlaneseq
  %v79 = vshrl.u32 %v78, 7
  %v80 = vsub.s32 0, %v79
  %v81 = vrot.slane %v40, %v80
  %v119 = vunpack.c.l.b16 %v41
  %v120 = vunpack.c.l.b16 %v42
  %v121 = vunpack.c.l.b16 %v43
  %v122 = vunpack.c.l.b16 %v44
  %v123 = vunpack.c.l.b16 %v45
  %v124 = vunpack.c.l.b16 %v46
  %v125 = vunpack.c.l.b16 %v47
  %v126 = vunpack.c.l.b16 %v48
  %v127 = vunpack.c.l.b16 %v49
  %v128 = vunpack.c.l.b16 %v50
  %v129 = vunpack.c.l.b16 %v51
  %v130 = vunpack.c.l.b16 %v52
  %v131 = vunpack.c.l.b16 %v53
  %v132 = vunpack.c.l.b16 %v54
  %v133 = vunpack.c.l.b16 %v55
  %v134 = vunpack.c.l.b16 %v56
  %v135 = vunpack.c.l.b16 %v57
  %v136 = vunpack.c.l.b16 %v58
  %v137 = vunpack.c.l.b16 %v59
  %v138 = vunpack.c.l.b16 %v60
  %v139 = vunpack.c.l.b16 %v61
  %v140 = vunpack.c.l.b16 %v62
  %v141 = vunpack.c.l.b16 %v63
  %v142 = vunpack.c.l.b16 %v64
  %v143 = vunpack.c.l.b16 %v65
  %v144 = vunpack.c.l.b16 %v66
  %v145 = vunpack.c.l.b16 %v67
  %v146 = vunpack.c.l.b16 %v68
  %v147 = vunpack.c.l.b16 %v69
  %v148 = vunpack.c.l.b16 %v70
  %v149 = vunpack.c.l.b16 %v71
  %v150 = vunpack.c.l.b16 %v72
  %v151 = vunpack.c.l.b16 %v73
  %v152 = vunpack.c.l.b16 %v74
  %v153 = vunpack.c.l.b16 %v75
  %v154 = vunpack.c.l.b16 %v76
  %v155 = vpack.c.b16 %v120, %v119
  %v156 = vpack.c.b16 %v122, %v121
  %v157 = vpack.c.b16 %v124, %v123
  %v158 = vpack.c.b16 %v126, %v125
  %v159 = vpack.c.b16 %v128, %v127
  %v160 = vpack.c.b16 %v130, %v129
  %v161 = vpack.c.b16 %v132, %v131
  %v162 = vpack.c.b16 %v134, %v133
  %v163 = vpack.c.b16 %v136, %v135
  %v164 = vpack.c.b16 %v138, %v137
  %v165 = vpack.c.b16 %v140, %v139
  %v166 = vpack.c.b16 %v142, %v141
  %v167 = vpack.c.b16 %v144, %v143
  %v168 = vpack.c.b16 %v146, %v145
  %v169 = vpack.c.b16 %v148, %v147
  %v170 = vpack.c.b16 %v150, %v149
  %v171 = vpack.c.b16 %v152, %v151
  %v172 = vpack.c.b16 %v154, %v153
  %v207 = vunpack.c.l.b16 %v24
  %v208 = vunpack.c.l.b16 %v25
  %v209 = vunpack.c.l.b16 %v26
  %v210 = vunpack.c.l.b16 %v27
  %v211 = vunpack.c.l.b16 %v28
  %v212 = vunpack.c.l.b16 %v29
  %v213 = vunpack.c.l.b16 %v30
  %v214 = vunpack.c.l.b16 %v31
  %v215 = vunpack.c.l.b16 %v32
  %v216 = vunpack.c.l.b16 %v33
  %v217 = vunpack.c.l.b16 %v34
  %v218 = vunpack.c.l.b16 %v35
  %v219 = vunpack.c.l.b16 %v36
  %v220 = vunpack.c.l.b16 %v37
  %v221 = vunpack.c.l.b16 %v38
  %v222 = vunpack.c.l.b16 %v39
  %v223 = vpack.c.b16 %v208, %v207
  %v224 = vpack.c.b16 %v210, %v209
  %v225 = vpack.c.b16 %v212, %v211
  %v226 = vpack.c.b16 %v214, %v213
  %v227 = vpack.c.b16 %v216, %v215
  %v228 = vpack.c.b16 %v218, %v217
  %v229 = vpack.c.b16 %v220, %v219
  %v230 = vpack.c.b16 %v222, %v221
  %239 = vmatprep.subr.bf16.mxu0 0
  %240 = vmatpush1.bf16.msra.mxu0 %v223
  %241 = vmatprep.subr.bf16.mxu0 0
  %242 = vmatpush1.bf16.msra.mxu0 %v224
  %243 = vmatprep.subr.bf16.mxu0 0
  %244 = vmatpush1.bf16.msra.mxu0 %v225
  %245 = vmatprep.subr.bf16.mxu0 0
  %246 = vmatpush1.bf16.msra.mxu0 %v226
  %247 = vmatprep.subr.bf16.mxu0 0
  %248 = vmatpush1.bf16.msra.mxu0 %v227
  %249 = vmatprep.subr.bf16.mxu0 0
  %250 = vmatpush1.bf16.msra.mxu0 %v228
  %251 = vmatprep.subr.bf16.mxu0 0
  %252 = vmatpush1.bf16.msra.mxu0 %v229
  %253 = vmatprep.subr.bf16.mxu0 0
  %254 = vmatpush1.bf16.msra.mxu0 %v230
  %255 = vmatprep.subr.bf16.mxu0 0
  %256 = vmatpush1.bf16.msra.mxu0 0
  %257 = vmatprep.subr.bf16.mxu0 0
  %258 = vmatpush1.bf16.msra.mxu0 0
  %259 = vmatprep.subr.bf16.mxu0 0
  %260 = vmatpush1.bf16.msra.mxu0 0
  %261 = vmatprep.subr.bf16.mxu0 0
  %262 = vmatpush1.bf16.msra.mxu0 0
  %263 = vmatprep.subr.bf16.mxu0 0
  %264 = vmatpush1.bf16.msra.mxu0 0
  %265 = vmatprep.subr.bf16.mxu0 0
  %266 = vmatpush1.bf16.msra.mxu0 0
  %267 = vmatprep.subr.bf16.mxu0 0
  %268 = vmatpush1.bf16.msra.mxu0 0
  %269 = vmatprep.subr.bf16.mxu0 0
  %270 = vmatpush1.bf16.msra.mxu0 0
  %271 = vmatprep.mubr.bf16.mxu0 0
  %272 = vmatmul.mubr.bf16.gmra.mrb[0].mxu0 %v155
  %v273 = vpop.f32.mrb[0].mxu0
  %v274 = vadd.f32 %v81, %v273
  %v275 = vpop.f32.mrb[0].mxu0
  %v276 = vpop.f32.mrb[0].mxu0
  %v277 = vadd.f32 %v81, %v276
  %v278 = vpop.f32.mrb[0].mxu0
  %279 = vmatprep.mubr.bf16.mxu0 0
  %280 = vmatmul.mubr.bf16.gmra.mrb[0].mxu0 %v156
  %v281 = vpop.f32.mrb[0].mxu0
  %v282 = vadd.f32 %v81, %v281
  %v283 = vpop.f32.mrb[0].mxu0
  %v284 = vpop.f32.mrb[0].mxu0
  %v285 = vadd.f32 %v81, %v284
  %v286 = vpop.f32.mrb[0].mxu0
  %287 = vmatprep.mubr.bf16.mxu0 0
  %288 = vmatmul.mubr.bf16.gmra.mrb[0].mxu0 %v157
  %v289 = vpop.f32.mrb[0].mxu0
  %v290 = vadd.f32 %v81, %v289
  %v291 = vpop.f32.mrb[0].mxu0
  %v292 = vpop.f32.mrb[0].mxu0
  %v293 = vadd.f32 %v81, %v292
  %v294 = vpop.f32.mrb[0].mxu0
  %295 = vmatprep.mubr.bf16.mxu0 0
  %296 = vmatmul.mubr.bf16.gmra.mrb[0].mxu0 %v158
  %v297 = vpop.f32.mrb[0].mxu0
  %v298 = vadd.f32 %v81, %v297
  %v299 = vpop.f32.mrb[0].mxu0
  %v300 = vpop.f32.mrb[0].mxu0
  %v301 = vadd.f32 %v81, %v300
  %v302 = vpop.f32.mrb[0].mxu0
  %303 = vmatprep.mubr.bf16.mxu0 0
  %304 = vmatmul.mubr.bf16.gmra.mrb[0].mxu0 %v159
  %v305 = vpop.f32.mrb[0].mxu0
  %v306 = vadd.f32 %v81, %v305
  %v307 = vpop.f32.mrb[0].mxu0
  %v308 = vpop.f32.mrb[0].mxu0
  %v309 = vadd.f32 %v81, %v308
  %v310 = vpop.f32.mrb[0].mxu0
  %311 = vmatprep.mubr.bf16.mxu0 0
  %312 = vmatmul.mubr.bf16.gmra.mrb[0].mxu0 %v160
  %v313 = vpop.f32.mrb[0].mxu0
  %v314 = vadd.f32 %v81, %v313
  %v315 = vpop.f32.mrb[0].mxu0
  %v316 = vpop.f32.mrb[0].mxu0
  %v317 = vadd.f32 %v81, %v316
  %v318 = vpop.f32.mrb[0].mxu0
  %319 = vmatprep.mubr.bf16.mxu0 0
  %320 = vmatmul.mubr.bf16.gmra.mrb[0].mxu0 %v161
  %v321 = vpop.f32.mrb[0].mxu0
  %v322 = vadd.f32 %v81, %v321
  %v323 = vpop.f32.mrb[0].mxu0
  %v324 = vpop.f32.mrb[0].mxu0
  %v325 = vadd.f32 %v81, %v324
  %v326 = vpop.f32.mrb[0].mxu0
  %327 = vmatprep.mubr.bf16.mxu0 0
  %328 = vmatmul.mubr.bf16.gmra.mrb[0].mxu0 %v162
  %v329 = vpop.f32.mrb[0].mxu0
  %v330 = vadd.f32 %v81, %v329
  %v331 = vpop.f32.mrb[0].mxu0
  %v332 = vpop.f32.mrb[0].mxu0
  %v333 = vadd.f32 %v81, %v332
  %v334 = vpop.f32.mrb[0].mxu0
  %335 = vmatprep.mubr.bf16.mxu0 0
  %336 = vmatmul.mubr.bf16.gmra.mrb[0].mxu0 %v163
  %v337 = vpop.f32.mrb[0].mxu0
  %v338 = vadd.f32 %v81, %v337
  %v339 = vpop.f32.mrb[0].mxu0
  %v340 = vpop.f32.mrb[0].mxu0
  %v341 = vadd.f32 %v81, %v340
  %v342 = vpop.f32.mrb[0].mxu0
  %343 = vmatprep.mubr.bf16.mxu0 0
  %344 = vmatmul.mubr.bf16.gmra.mrb[0].mxu0 %v164
  %v345 = vpop.f32.mrb[0].mxu0
  %v346 = vadd.f32 %v81, %v345
  %v347 = vpop.f32.mrb[0].mxu0
  %v348 = vpop.f32.mrb[0].mxu0
  %v349 = vadd.f32 %v81, %v348
  %v350 = vpop.f32.mrb[0].mxu0
  %351 = vmatprep.mubr.bf16.mxu0 0
  %352 = vmatmul.mubr.bf16.gmra.mrb[0].mxu0 %v165
  %v353 = vpop.f32.mrb[0].mxu0
  %v354 = vadd.f32 %v81, %v353
  %v355 = vpop.f32.mrb[0].mxu0
  %v356 = vpop.f32.mrb[0].mxu0
  %v357 = vadd.f32 %v81, %v356
  %v358 = vpop.f32.mrb[0].mxu0
  %359 = vmatprep.mubr.bf16.mxu0 0
  %360 = vmatmul.mubr.bf16.gmra.mrb[0].mxu0 %v166
  %v361 = vpop.f32.mrb[0].mxu0
  %v362 = vadd.f32 %v81, %v361
  %v363 = vpop.f32.mrb[0].mxu0
  %v364 = vpop.f32.mrb[0].mxu0
  %v365 = vadd.f32 %v81, %v364
  %v366 = vpop.f32.mrb[0].mxu0
  %367 = vmatprep.mubr.bf16.mxu0 0
  %368 = vmatmul.mubr.bf16.gmra.mrb[0].mxu0 %v167
  %v369 = vpop.f32.mrb[0].mxu0
  %v370 = vadd.f32 %v81, %v369
  %v371 = vpop.f32.mrb[0].mxu0
  %v372 = vpop.f32.mrb[0].mxu0
  %v373 = vadd.f32 %v81, %v372
  %v374 = vpop.f32.mrb[0].mxu0
  %375 = vmatprep.mubr.bf16.mxu0 0
  %376 = vmatmul.mubr.bf16.gmra.mrb[0].mxu0 %v168
  %v377 = vpop.f32.mrb[0].mxu0
  %v378 = vadd.f32 %v81, %v377
  %v379 = vpop.f32.mrb[0].mxu0
  %v380 = vpop.f32.mrb[0].mxu0
  %v381 = vadd.f32 %v81, %v380
  %v382 = vpop.f32.mrb[0].mxu0
  %383 = vmatprep.mubr.bf16.mxu0 0
  %384 = vmatmul.mubr.bf16.gmra.mrb[0].mxu0 %v169
  %v385 = vpop.f32.mrb[0].mxu0
  %v386 = vadd.f32 %v81, %v385
  %v387 = vpop.f32.mrb[0].mxu0
  %v388 = vpop.f32.mrb[0].mxu0
  %v389 = vadd.f32 %v81, %v388
  %v390 = vpop.f32.mrb[0].mxu0
  %391 = vmatprep.mubr.bf16.mxu0 0
  %392 = vmatmul.mubr.bf16.gmra.mrb[0].mxu0 %v170
  %v393 = vpop.f32.mrb[0].mxu0
  %v394 = vadd.f32 %v81, %v393
  %v395 = vpop.f32.mrb[0].mxu0
  %v396 = vpop.f32.mrb[0].mxu0
  %v397 = vadd.f32 %v81, %v396
  %v398 = vpop.f32.mrb[0].mxu0
  %399 = vmatprep.mubr.bf16.mxu0 0
  %400 = vmatmul.mubr.bf16.gmra.mrb[0].mxu0 %v171
  %v401 = vpop.f32.mrb[0].mxu0
  %v402 = vadd.f32 %v81, %v401
  %v403 = vpop.f32.mrb[0].mxu0
  %v404 = vpop.f32.mrb[0].mxu0
  %v405 = vadd.f32 %v81, %v404
  %v406 = vpop.f32.mrb[0].mxu0
  %407 = vmatprep.mubr.bf16.mxu0 0
  %408 = vmatmul.mubr.bf16.gmra.mrb[0].mxu0 %v172
  %v409 = vpop.f32.mrb[0].mxu0
  %v410 = vadd.f32 %v81, %v409
  %v411 = vpop.f32.mrb[0].mxu0
  %v412 = vpop.f32.mrb[0].mxu0
  %v413 = vadd.f32 %v81, %v412
  %v414 = vpop.f32.mrb[0].mxu0
  %415 = vdwg.mxu0
  %v416 = vmax.f32 %v274, 0.0
  %v417 = vmax.f32 %v277, 0.0
  %v418 = vmax.f32 %v282, 0.0
  %v419 = vmax.f32 %v285, 0.0
  %v420 = vmax.f32 %v290, 0.0
  %v421 = vmax.f32 %v293, 0.0
  %v422 = vmax.f32 %v298, 0.0
  %v423 = vmax.f32 %v301, 0.0
  %v424 = vmax.f32 %v306, 0.0
  %v425 = vmax.f32 %v309, 0.0
  %v426 = vmax.f32 %v314, 0.0
  %v427 = vmax.f32 %v317, 0.0
  %v428 = vmax.f32 %v322, 0.0
  %v429 = vmax.f32 %v325, 0.0
  %v430 = vmax.f32 %v330, 0.0
  %v431 = vmax.f32 %v333, 0.0
  %v432 = vmax.f32 %v338, 0.0
  %v433 = vmax.f32 %v341, 0.0
  %v434 = vmax.f32 %v346, 0.0
  %v435 = vmax.f32 %v349, 0.0
  %v436 = vmax.f32 %v354, 0.0
  %v437 = vmax.f32 %v357, 0.0
  %v438 = vmax.f32 %v362, 0.0
  %v439 = vmax.f32 %v365, 0.0
  %v440 = vmax.f32 %v370, 0.0
  %v441 = vmax.f32 %v373, 0.0
  %v442 = vmax.f32 %v378, 0.0
  %v443 = vmax.f32 %v381, 0.0
  %v444 = vmax.f32 %v386, 0.0
  %v445 = vmax.f32 %v389, 0.0
  %v446 = vmax.f32 %v394, 0.0
  %v447 = vmax.f32 %v397, 0.0
  %v448 = vmax.f32 %v402, 0.0
  %v449 = vmax.f32 %v405, 0.0
  %v450 = vmax.f32 %v410, 0.0
  %v451 = vmax.f32 %v413, 0.0
  %v452 = vld [vmem:[%s1] sm:$0xf]
  %v453 = vld [vmem:[%s1 + $0x4] sm:$0xf]
  %v454 = vld [vmem:[%s1 + $0x8] sm:$0xf]
  %v455 = vld [vmem:[%s1 + $0xc] sm:$0xf]
  %v456 = vld [vmem:[%s1 + $0x10] sm:$0xf]
  %v457 = vld [vmem:[%s1 + $0x14] sm:$0xf]
  %v458 = vld [vmem:[%s1 + $0x18] sm:$0xf]
  %v459 = vld [vmem:[%s1 + $0x1c] sm:$0xf]
  %v460 = vld [vmem:[%s1 + $0x20] sm:$0xf]
  %v461 = vld [vmem:[%s1 + $0x24] sm:$0xf]
  %v462 = vld [vmem:[%s1 + $0x28] sm:$0xf]
  %v463 = vld [vmem:[%s1 + $0x2c] sm:$0xf]
  %v464 = vld [vmem:[%s1 + $0x30] sm:$0xf]
  %v465 = vld [vmem:[%s1 + $0x34] sm:$0xf]
  %v466 = vld [vmem:[%s1 + $0x38] sm:$0xf]
  %v467 = vld [vmem:[%s1 + $0x3c] sm:$0xf]
  %v468 = vld [vmem:[%s1 + $0x40] sm:$0xf]
  %v469 = vld [vmem:[%s1 + $0x44] sm:$0xf]
  %v470 = vld [vmem:[%s1 + $0x48] sm:$0xf]
  %v471 = vld [vmem:[%s1 + $0x4c] sm:$0xf]
  %v472 = vld [vmem:[%s1 + $0x50] sm:$0xf]
  %v473 = vld [vmem:[%s1 + $0x54] sm:$0xf]
  %v474 = vld [vmem:[%s1 + $0x58] sm:$0xf]
  %v475 = vld [vmem:[%s1 + $0x5c] sm:$0xf]
  %v476 = vld [vmem:[%s1 + $0x60] sm:$0xf]
  %v477 = vld [vmem:[%s1 + $0x64] sm:$0xf]
  %v478 = vld [vmem:[%s1 + $0x68] sm:$0xf]
  %v479 = vld [vmem:[%s1 + $0x6c] sm:$0xf]
  %v480 = vld [vmem:[%s1 + $0x70] sm:$0xf]
  %v481 = vld [vmem:[%s1 + $0x74] sm:$0xf]
  %v482 = vld [vmem:[%s1 + $0x78] sm:$0xf]
  %v483 = vld [vmem:[%s1 + $0x7c] sm:$0xf]
  %v484 = vld [vmem:[%s1 + $0x80] sm:$0xf]
  %v485 = vld [vmem:[%s1 + $0x84] sm:$0xf]
  %v486 = vld [vmem:[%s1 + $0x88] sm:$0xf]
  %v487 = vld [vmem:[%s1 + $0x8c] sm:$0xf]
  %v524 = vunpack.c.l.b16 %v452
  %v525 = vunpack.c.l.b16 %v453
  %v526 = vunpack.c.l.b16 %v454
  %v527 = vunpack.c.l.b16 %v455
  %v528 = vunpack.c.l.b16 %v456
  %v529 = vunpack.c.l.b16 %v457
  %v530 = vunpack.c.l.b16 %v458
  %v531 = vunpack.c.l.b16 %v459
  %v532 = vunpack.c.l.b16 %v460
  %v533 = vunpack.c.l.b16 %v461
  %v534 = vunpack.c.l.b16 %v462
  %v535 = vunpack.c.l.b16 %v463
  %v536 = vunpack.c.l.b16 %v464
  %v537 = vunpack.c.l.b16 %v465
  %v538 = vunpack.c.l.b16 %v466
  %v539 = vunpack.c.l.b16 %v467
  %v540 = vunpack.c.l.b16 %v468
  %v541 = vunpack.c.l.b16 %v469
  %v542 = vunpack.c.l.b16 %v470
  %v543 = vunpack.c.l.b16 %v471
  %v544 = vunpack.c.l.b16 %v472
  %v545 = vunpack.c.l.b16 %v473
  %v546 = vunpack.c.l.b16 %v474
  %v547 = vunpack.c.l.b16 %v475
  %v548 = vunpack.c.l.b16 %v476
  %v549 = vunpack.c.l.b16 %v477
  %v550 = vunpack.c.l.b16 %v478
  %v551 = vunpack.c.l.b16 %v479
  %v552 = vunpack.c.l.b16 %v480
  %v553 = vunpack.c.l.b16 %v481
  %v554 = vunpack.c.l.b16 %v482
  %v555 = vunpack.c.l.b16 %v483
  %v556 = vunpack.c.l.b16 %v484
  %v557 = vunpack.c.l.b16 %v485
  %v558 = vunpack.c.l.b16 %v486
  %v559 = vunpack.c.l.b16 %v487
  %v560 = vpack.c.b16 %v525, %v524
  %v561 = vpack.c.b16 %v527, %v526
  %v562 = vpack.c.b16 %v529, %v528
  %v563 = vpack.c.b16 %v531, %v530
  %v564 = vpack.c.b16 %v533, %v532
  %v565 = vpack.c.b16 %v535, %v534
  %v566 = vpack.c.b16 %v537, %v536
  %v567 = vpack.c.b16 %v539, %v538
  %v568 = vpack.c.b16 %v541, %v540
  %v569 = vpack.c.b16 %v543, %v542
  %v570 = vpack.c.b16 %v545, %v544
  %v571 = vpack.c.b16 %v547, %v546
  %v572 = vpack.c.b16 %v549, %v548
  %v573 = vpack.c.b16 %v551, %v550
  %v574 = vpack.c.b16 %v553, %v552
  %v575 = vpack.c.b16 %v555, %v554
  %v576 = vpack.c.b16 %v557, %v556
  %v577 = vpack.c.b16 %v559, %v558
  %596 = vmatprep.subr.bf16.mxu0 0
  %597 = vmatpush1.bf16.msra.mxu0 %v223
  %598 = vmatprep.subr.bf16.mxu0 0
  %599 = vmatpush1.bf16.msra.mxu0 %v224
  %600 = vmatprep.subr.bf16.mxu0 0
  %601 = vmatpush1.bf16.msra.mxu0 %v225
  %602 = vmatprep.subr.bf16.mxu0 0
  %603 = vmatpush1.bf16.msra.mxu0 %v226
  %604 = vmatprep.subr.bf16.mxu0 0
  %605 = vmatpush1.bf16.msra.mxu0 %v227
  %606 = vmatprep.subr.bf16.mxu0 0
  %607 = vmatpush1.bf16.msra.mxu0 %v228
  %608 = vmatprep.subr.bf16.mxu0 0
  %609 = vmatpush1.bf16.msra.mxu0 %v229
  %610 = vmatprep.subr.bf16.mxu0 0
  %611 = vmatpush1.bf16.msra.mxu0 %v230
  %612 = vmatprep.subr.bf16.mxu0 0
  %613 = vmatpush1.bf16.msra.mxu0 0
  %614 = vmatprep.subr.bf16.mxu0 0
  %615 = vmatpush1.bf16.msra.mxu0 0
  %616 = vmatprep.subr.bf16.mxu0 0
  %617 = vmatpush1.bf16.msra.mxu0 0
  %618 = vmatprep.subr.bf16.mxu0 0
  %619 = vmatpush1.bf16.msra.mxu0 0
  %620 = vmatprep.subr.bf16.mxu0 0
  %621 = vmatpush1.bf16.msra.mxu0 0
  %622 = vmatprep.subr.bf16.mxu0 0
  %623 = vmatpush1.bf16.msra.mxu0 0
  %624 = vmatprep.subr.bf16.mxu0 0
  %625 = vmatpush1.bf16.msra.mxu0 0
  %626 = vmatprep.subr.bf16.mxu0 0
  %627 = vmatpush1.bf16.msra.mxu0 0
  %628 = vmatprep.mubr.bf16.mxu0 0
  %629 = vmatmul.mubr.bf16.gmra.mrb[0].mxu0 %v560
  %v630 = vpop.f32.mrb[0].mxu0
  %v631 = vadd.f32 %v81, %v630
  %v632 = vpop.f32.mrb[0].mxu0
  %v633 = vpop.f32.mrb[0].mxu0
  %v634 = vadd.f32 %v81, %v633
  %v635 = vpop.f32.mrb[0].mxu0
  %636 = vmatprep.mubr.bf16.mxu0 0
  %637 = vmatmul.mubr.bf16.gmra.mrb[0].mxu0 %v561
  %v638 = vpop.f32.mrb[0].mxu0
  %v639 = vadd.f32 %v81, %v638
  %v640 = vpop.f32.mrb[0].mxu0
  %v641 = vpop.f32.mrb[0].mxu0
  %v642 = vadd.f32 %v81, %v641
  %v643 = vpop.f32.mrb[0].mxu0
  %644 = vmatprep.mubr.bf16.mxu0 0
  %645 = vmatmul.mubr.bf16.gmra.mrb[0].mxu0 %v562
  %v646 = vpop.f32.mrb[0].mxu0
  %v647 = vadd.f32 %v81, %v646
  %v648 = vpop.f32.mrb[0].mxu0
  %v649 = vpop.f32.mrb[0].mxu0
  %v650 = vadd.f32 %v81, %v649
  %v651 = vpop.f32.mrb[0].mxu0
  %652 = vmatprep.mubr.bf16.mxu0 0
  %653 = vmatmul.mubr.bf16.gmra.mrb[0].mxu0 %v563
  %v654 = vpop.f32.mrb[0].mxu0
  %v655 = vadd.f32 %v81, %v654
  %v656 = vpop.f32.mrb[0].mxu0
  %v657 = vpop.f32.mrb[0].mxu0
  %v658 = vadd.f32 %v81, %v657
  %v659 = vpop.f32.mrb[0].mxu0
  %660 = vmatprep.mubr.bf16.mxu0 0
  %661 = vmatmul.mubr.bf16.gmra.mrb[0].mxu0 %v564
  %v662 = vpop.f32.mrb[0].mxu0
  %v663 = vadd.f32 %v81, %v662
  %v664 = vpop.f32.mrb[0].mxu0
  %v665 = vpop.f32.mrb[0].mxu0
  %v666 = vadd.f32 %v81, %v665
  %v667 = vpop.f32.mrb[0].mxu0
  %668 = vmatprep.mubr.bf16.mxu0 0
  %669 = vmatmul.mubr.bf16.gmra.mrb[0].mxu0 %v565
  %v670 = vpop.f32.mrb[0].mxu0
  %v671 = vadd.f32 %v81, %v670
  %v672 = vpop.f32.mrb[0].mxu0
  %v673 = vpop.f32.mrb[0].mxu0
  %v674 = vadd.f32 %v81, %v673
  %v675 = vpop.f32.mrb[0].mxu0
  %676 = vmatprep.mubr.bf16.mxu0 0
  %677 = vmatmul.mubr.bf16.gmra.mrb[0].mxu0 %v566
  %v678 = vpop.f32.mrb[0].mxu0
  %v679 = vadd.f32 %v81, %v678
  %v680 = vpop.f32.mrb[0].mxu0
  %v681 = vpop.f32.mrb[0].mxu0
  %v682 = vadd.f32 %v81, %v681
  %v683 = vpop.f32.mrb[0].mxu0
  %684 = vmatprep.mubr.bf16.mxu0 0
  %685 = vmatmul.mubr.bf16.gmra.mrb[0].mxu0 %v567
  %v686 = vpop.f32.mrb[0].mxu0
  %v687 = vadd.f32 %v81, %v686
  %v688 = vpop.f32.mrb[0].mxu0
  %v689 = vpop.f32.mrb[0].mxu0
  %v690 = vadd.f32 %v81, %v689
  %v691 = vpop.f32.mrb[0].mxu0
  %692 = vmatprep.mubr.bf16.mxu0 0
  %693 = vmatmul.mubr.bf16.gmra.mrb[0].mxu0 %v568
  %v694 = vpop.f32.mrb[0].mxu0
  %v695 = vadd.f32 %v81, %v694
  %v696 = vpop.f32.mrb[0].mxu0
  %v697 = vpop.f32.mrb[0].mxu0
  %v698 = vadd.f32 %v81, %v697
  %v699 = vpop.f32.mrb[0].mxu0
  %700 = vmatprep.mubr.bf16.mxu0 0
  %701 = vmatmul.mubr.bf16.gmra.mrb[0].mxu0 %v569
  %v702 = vpop.f32.mrb[0].mxu0
  %v703 = vadd.f32 %v81, %v702
  %v704 = vpop.f32.mrb[0].mxu0
  %v705 = vpop.f32.mrb[0].mxu0
  %v706 = vadd.f32 %v81, %v705
  %v707 = vpop.f32.mrb[0].mxu0
  %708 = vmatprep.mubr.bf16.mxu0 0
  %709 = vmatmul.mubr.bf16.gmra.mrb[0].mxu0 %v570
  %v710 = vpop.f32.mrb[0].mxu0
  %v711 = vadd.f32 %v81, %v710
  %v712 = vpop.f32.mrb[0].mxu0
  %v713 = vpop.f32.mrb[0].mxu0
  %v714 = vadd.f32 %v81, %v713
  %v715 = vpop.f32.mrb[0].mxu0
  %716 = vmatprep.mubr.bf16.mxu0 0
  %717 = vmatmul.mubr.bf16.gmra.mrb[0].mxu0 %v571
  %v718 = vpop.f32.mrb[0].mxu0
  %v719 = vadd.f32 %v81, %v718
  %v720 = vpop.f32.mrb[0].mxu0
  %v721 = vpop.f32.mrb[0].mxu0
  %v722 = vadd.f32 %v81, %v721
  %v723 = vpop.f32.mrb[0].mxu0
  %724 = vmatprep.mubr.bf16.mxu0 0
  %725 = vmatmul.mubr.bf16.gmra.mrb[0].mxu0 %v572
  %v726 = vpop.f32.mrb[0].mxu0
  %v727 = vadd.f32 %v81, %v726
  %v728 = vpop.f32.mrb[0].mxu0
  %v729 = vpop.f32.mrb[0].mxu0
  %v730 = vadd.f32 %v81, %v729
  %v731 = vpop.f32.mrb[0].mxu0
  %732 = vmatprep.mubr.bf16.mxu0 0
  %733 = vmatmul.mubr.bf16.gmra.mrb[0].mxu0 %v573
  %v734 = vpop.f32.mrb[0].mxu0
  %v735 = vadd.f32 %v81, %v734
  %v736 = vpop.f32.mrb[0].mxu0
  %v737 = vpop.f32.mrb[0].mxu0
  %v738 = vadd.f32 %v81, %v737
  %v739 = vpop.f32.mrb[0].mxu0
  %740 = vmatprep.mubr.bf16.mxu0 0
  %741 = vmatmul.mubr.bf16.gmra.mrb[0].mxu0 %v574
  %v742 = vpop.f32.mrb[0].mxu0
  %v743 = vadd.f32 %v81, %v742
  %v744 = vpop.f32.mrb[0].mxu0
  %v745 = vpop.f32.mrb[0].mxu0
  %v746 = vadd.f32 %v81, %v745
  %v747 = vpop.f32.mrb[0].mxu0
  %748 = vmatprep.mubr.bf16.mxu0 0
  %749 = vmatmul.mubr.bf16.gmra.mrb[0].mxu0 %v575
  %v750 = vpop.f32.mrb[0].mxu0
  %v751 = vadd.f32 %v81, %v750
  %v752 = vpop.f32.mrb[0].mxu0
  %v753 = vpop.f32.mrb[0].mxu0
  %v754 = vadd.f32 %v81, %v753
  %v755 = vpop.f32.mrb[0].mxu0
  %756 = vmatprep.mubr.bf16.mxu0 0
  %757 = vmatmul.mubr.bf16.gmra.mrb[0].mxu0 %v576
  %v758 = vpop.f32.mrb[0].mxu0
  %v759 = vadd.f32 %v81, %v758
  %v760 = vpop.f32.mrb[0].mxu0
  %v761 = vpop.f32.mrb[0].mxu0
  %v762 = vadd.f32 %v81, %v761
  %v763 = vpop.f32.mrb[0].mxu0
  %764 = vmatprep.mubr.bf16.mxu0 0
  %765 = vmatmul.mubr.bf16.gmra.mrb[0].mxu0 %v577
  %v766 = vpop.f32.mrb[0].mxu0
  %v767 = vadd.f32 %v81, %v766
  %v768 = vpop.f32.mrb[0].mxu0
  %v769 = vpop.f32.mrb[0].mxu0
  %v770 = vadd.f32 %v81, %v769
  %v771 = vpop.f32.mrb[0].mxu0
  %772 = vdwg.mxu0
  %v773 = vmax.f32 %v631, 0.0
  %v774 = vmax.f32 %v634, 0.0
  %v775 = vmax.f32 %v639, 0.0
  %v776 = vmax.f32 %v642, 0.0
  %v777 = vmax.f32 %v647, 0.0
  %v778 = vmax.f32 %v650, 0.0
  %v779 = vmax.f32 %v655, 0.0
  %v780 = vmax.f32 %v658, 0.0
  %v781 = vmax.f32 %v663, 0.0
  %v782 = vmax.f32 %v666, 0.0
  %v783 = vmax.f32 %v671, 0.0
  %v784 = vmax.f32 %v674, 0.0
  %v785 = vmax.f32 %v679, 0.0
  %v786 = vmax.f32 %v682, 0.0
  %v787 = vmax.f32 %v687, 0.0
  %v788 = vmax.f32 %v690, 0.0
  %v789 = vmax.f32 %v695, 0.0
  %v790 = vmax.f32 %v698, 0.0
  %v791 = vmax.f32 %v703, 0.0
  %v792 = vmax.f32 %v706, 0.0
  %v793 = vmax.f32 %v711, 0.0
  %v794 = vmax.f32 %v714, 0.0
  %v795 = vmax.f32 %v719, 0.0
  %v796 = vmax.f32 %v722, 0.0
  %v797 = vmax.f32 %v727, 0.0
  %v798 = vmax.f32 %v730, 0.0
  %v799 = vmax.f32 %v735, 0.0
  %v800 = vmax.f32 %v738, 0.0
  %v801 = vmax.f32 %v743, 0.0
  %v802 = vmax.f32 %v746, 0.0
  %v803 = vmax.f32 %v751, 0.0
  %v804 = vmax.f32 %v754, 0.0
  %v805 = vmax.f32 %v759, 0.0
  %v806 = vmax.f32 %v762, 0.0
  %v807 = vmax.f32 %v767, 0.0
  %v808 = vmax.f32 %v770, 0.0
  %v809 = vmax.f32 %v416, %v773
  %v810 = vmax.f32 %v417, %v774
  %v811 = vmax.f32 %v418, %v775
  %v812 = vmax.f32 %v419, %v776
  %v813 = vmax.f32 %v420, %v777
  %v814 = vmax.f32 %v421, %v778
  %v815 = vmax.f32 %v422, %v779
  %v816 = vmax.f32 %v423, %v780
  %v817 = vmax.f32 %v424, %v781
  %v818 = vmax.f32 %v425, %v782
  %v819 = vmax.f32 %v426, %v783
  %v820 = vmax.f32 %v427, %v784
  %v821 = vmax.f32 %v428, %v785
  %v822 = vmax.f32 %v429, %v786
  %v823 = vmax.f32 %v430, %v787
  %v824 = vmax.f32 %v431, %v788
  %v825 = vmax.f32 %v432, %v789
  %v826 = vmax.f32 %v433, %v790
  %v827 = vmax.f32 %v434, %v791
  %v828 = vmax.f32 %v435, %v792
  %v829 = vmax.f32 %v436, %v793
  %v830 = vmax.f32 %v437, %v794
  %v831 = vmax.f32 %v438, %v795
  %v832 = vmax.f32 %v439, %v796
  %v833 = vmax.f32 %v440, %v797
  %v834 = vmax.f32 %v441, %v798
  %v835 = vmax.f32 %v442, %v799
  %v836 = vmax.f32 %v443, %v800
  %v837 = vmax.f32 %v444, %v801
  %v838 = vmax.f32 %v445, %v802
  %v839 = vmax.f32 %v446, %v803
  %v840 = vmax.f32 %v447, %v804
  %v841 = vmax.f32 %v448, %v805
  %v842 = vmax.f32 %v449, %v806
  %v843 = vmax.f32 %v450, %v807
  %v844 = vmax.f32 %v451, %v808
  %v845 = vld [vmem:[%s2] sm:$0xf]
  %v846 = vld [vmem:[%s2 + $0x4] sm:$0xf]
  %v847 = vld [vmem:[%s2 + $0x8] sm:$0xf]
  %v848 = vld [vmem:[%s2 + $0xc] sm:$0xf]
  %v849 = vld [vmem:[%s2 + $0x10] sm:$0xf]
  %v850 = vld [vmem:[%s2 + $0x14] sm:$0xf]
  %v851 = vld [vmem:[%s2 + $0x18] sm:$0xf]
  %v852 = vld [vmem:[%s2 + $0x1c] sm:$0xf]
  %v853 = vld [vmem:[%s2 + $0x20] sm:$0xf]
  %v854 = vld [vmem:[%s2 + $0x24] sm:$0xf]
  %v855 = vld [vmem:[%s2 + $0x28] sm:$0xf]
  %v856 = vld [vmem:[%s2 + $0x2c] sm:$0xf]
  %v857 = vld [vmem:[%s2 + $0x30] sm:$0xf]
  %v858 = vld [vmem:[%s2 + $0x34] sm:$0xf]
  %v859 = vld [vmem:[%s2 + $0x38] sm:$0xf]
  %v860 = vld [vmem:[%s2 + $0x3c] sm:$0xf]
  %v861 = vld [vmem:[%s2 + $0x40] sm:$0xf]
  %v862 = vld [vmem:[%s2 + $0x44] sm:$0xf]
  %v863 = vld [vmem:[%s2 + $0x48] sm:$0xf]
  %v864 = vld [vmem:[%s2 + $0x4c] sm:$0xf]
  %v865 = vld [vmem:[%s2 + $0x50] sm:$0xf]
  %v866 = vld [vmem:[%s2 + $0x54] sm:$0xf]
  %v867 = vld [vmem:[%s2 + $0x58] sm:$0xf]
  %v868 = vld [vmem:[%s2 + $0x5c] sm:$0xf]
  %v869 = vld [vmem:[%s2 + $0x60] sm:$0xf]
  %v870 = vld [vmem:[%s2 + $0x64] sm:$0xf]
  %v871 = vld [vmem:[%s2 + $0x68] sm:$0xf]
  %v872 = vld [vmem:[%s2 + $0x6c] sm:$0xf]
  %v873 = vld [vmem:[%s2 + $0x70] sm:$0xf]
  %v874 = vld [vmem:[%s2 + $0x74] sm:$0xf]
  %v875 = vld [vmem:[%s2 + $0x78] sm:$0xf]
  %v876 = vld [vmem:[%s2 + $0x7c] sm:$0xf]
  %v877 = vld [vmem:[%s2 + $0x80] sm:$0xf]
  %v878 = vld [vmem:[%s2 + $0x84] sm:$0xf]
  %v879 = vld [vmem:[%s2 + $0x88] sm:$0xf]
  %v880 = vld [vmem:[%s2 + $0x8c] sm:$0xf]
  %v917 = vunpack.c.l.b16 %v845
  %v918 = vunpack.c.l.b16 %v846
  %v919 = vunpack.c.l.b16 %v847
  %v920 = vunpack.c.l.b16 %v848
  %v921 = vunpack.c.l.b16 %v849
  %v922 = vunpack.c.l.b16 %v850
  %v923 = vunpack.c.l.b16 %v851
  %v924 = vunpack.c.l.b16 %v852
  %v925 = vunpack.c.l.b16 %v853
  %v926 = vunpack.c.l.b16 %v854
  %v927 = vunpack.c.l.b16 %v855
  %v928 = vunpack.c.l.b16 %v856
  %v929 = vunpack.c.l.b16 %v857
  %v930 = vunpack.c.l.b16 %v858
  %v931 = vunpack.c.l.b16 %v859
  %v932 = vunpack.c.l.b16 %v860
  %v933 = vunpack.c.l.b16 %v861
  %v934 = vunpack.c.l.b16 %v862
  %v935 = vunpack.c.l.b16 %v863
  %v936 = vunpack.c.l.b16 %v864
  %v937 = vunpack.c.l.b16 %v865
  %v938 = vunpack.c.l.b16 %v866
  %v939 = vunpack.c.l.b16 %v867
  %v940 = vunpack.c.l.b16 %v868
  %v941 = vunpack.c.l.b16 %v869
  %v942 = vunpack.c.l.b16 %v870
  %v943 = vunpack.c.l.b16 %v871
  %v944 = vunpack.c.l.b16 %v872
  %v945 = vunpack.c.l.b16 %v873
  %v946 = vunpack.c.l.b16 %v874
  %v947 = vunpack.c.l.b16 %v875
  %v948 = vunpack.c.l.b16 %v876
  %v949 = vunpack.c.l.b16 %v877
  %v950 = vunpack.c.l.b16 %v878
  %v951 = vunpack.c.l.b16 %v879
  %v952 = vunpack.c.l.b16 %v880
  %v953 = vpack.c.b16 %v918, %v917
  %v954 = vpack.c.b16 %v920, %v919
  %v955 = vpack.c.b16 %v922, %v921
  %v956 = vpack.c.b16 %v924, %v923
  %v957 = vpack.c.b16 %v926, %v925
  %v958 = vpack.c.b16 %v928, %v927
  %v959 = vpack.c.b16 %v930, %v929
  %v960 = vpack.c.b16 %v932, %v931
  %v961 = vpack.c.b16 %v934, %v933
  %v962 = vpack.c.b16 %v936, %v935
  %v963 = vpack.c.b16 %v938, %v937
  %v964 = vpack.c.b16 %v940, %v939
  %v965 = vpack.c.b16 %v942, %v941
  %v966 = vpack.c.b16 %v944, %v943
  %v967 = vpack.c.b16 %v946, %v945
  %v968 = vpack.c.b16 %v948, %v947
  %v969 = vpack.c.b16 %v950, %v949
  %v970 = vpack.c.b16 %v952, %v951
  %989 = vmatprep.subr.bf16.mxu0 0
  %990 = vmatpush1.bf16.msra.mxu0 %v223
  %991 = vmatprep.subr.bf16.mxu0 0
  %992 = vmatpush1.bf16.msra.mxu0 %v224
  %993 = vmatprep.subr.bf16.mxu0 0
  %994 = vmatpush1.bf16.msra.mxu0 %v225
  %995 = vmatprep.subr.bf16.mxu0 0
  %996 = vmatpush1.bf16.msra.mxu0 %v226
  %997 = vmatprep.subr.bf16.mxu0 0
  %998 = vmatpush1.bf16.msra.mxu0 %v227
  %999 = vmatprep.subr.bf16.mxu0 0
  %1000 = vmatpush1.bf16.msra.mxu0 %v228
  %1001 = vmatprep.subr.bf16.mxu0 0
  %1002 = vmatpush1.bf16.msra.mxu0 %v229
  %1003 = vmatprep.subr.bf16.mxu0 0
  %1004 = vmatpush1.bf16.msra.mxu0 %v230
  %1005 = vmatprep.subr.bf16.mxu0 0
  %1006 = vmatpush1.bf16.msra.mxu0 0
  %1007 = vmatprep.subr.bf16.mxu0 0
  %1008 = vmatpush1.bf16.msra.mxu0 0
  %1009 = vmatprep.subr.bf16.mxu0 0
  %1010 = vmatpush1.bf16.msra.mxu0 0
  %1011 = vmatprep.subr.bf16.mxu0 0
  %1012 = vmatpush1.bf16.msra.mxu0 0
  %1013 = vmatprep.subr.bf16.mxu0 0
  %1014 = vmatpush1.bf16.msra.mxu0 0
  %1015 = vmatprep.subr.bf16.mxu0 0
  %1016 = vmatpush1.bf16.msra.mxu0 0
  %1017 = vmatprep.subr.bf16.mxu0 0
  %1018 = vmatpush1.bf16.msra.mxu0 0
  %1019 = vmatprep.subr.bf16.mxu0 0
  %1020 = vmatpush1.bf16.msra.mxu0 0
  %1021 = vmatprep.mubr.bf16.mxu0 0
  %1022 = vmatmul.mubr.bf16.gmra.mrb[0].mxu0 %v953
  %v1023 = vpop.f32.mrb[0].mxu0
  %v1024 = vadd.f32 %v81, %v1023
  %v1025 = vpop.f32.mrb[0].mxu0
  %v1026 = vpop.f32.mrb[0].mxu0
  %v1027 = vadd.f32 %v81, %v1026
  %v1028 = vpop.f32.mrb[0].mxu0
  %1029 = vmatprep.mubr.bf16.mxu0 0
  %1030 = vmatmul.mubr.bf16.gmra.mrb[0].mxu0 %v954
  %v1031 = vpop.f32.mrb[0].mxu0
  %v1032 = vadd.f32 %v81, %v1031
  %v1033 = vpop.f32.mrb[0].mxu0
  %v1034 = vpop.f32.mrb[0].mxu0
  %v1035 = vadd.f32 %v81, %v1034
  %v1036 = vpop.f32.mrb[0].mxu0
  %1037 = vmatprep.mubr.bf16.mxu0 0
  %1038 = vmatmul.mubr.bf16.gmra.mrb[0].mxu0 %v955
  %v1039 = vpop.f32.mrb[0].mxu0
  %v1040 = vadd.f32 %v81, %v1039
  %v1041 = vpop.f32.mrb[0].mxu0
  %v1042 = vpop.f32.mrb[0].mxu0
  %v1043 = vadd.f32 %v81, %v1042
  %v1044 = vpop.f32.mrb[0].mxu0
  %1045 = vmatprep.mubr.bf16.mxu0 0
  %1046 = vmatmul.mubr.bf16.gmra.mrb[0].mxu0 %v956
  %v1047 = vpop.f32.mrb[0].mxu0
  %v1048 = vadd.f32 %v81, %v1047
  %v1049 = vpop.f32.mrb[0].mxu0
  %v1050 = vpop.f32.mrb[0].mxu0
  %v1051 = vadd.f32 %v81, %v1050
  %v1052 = vpop.f32.mrb[0].mxu0
  %1053 = vmatprep.mubr.bf16.mxu0 0
  %1054 = vmatmul.mubr.bf16.gmra.mrb[0].mxu0 %v957
  %v1055 = vpop.f32.mrb[0].mxu0
  %v1056 = vadd.f32 %v81, %v1055
  %v1057 = vpop.f32.mrb[0].mxu0
  %v1058 = vpop.f32.mrb[0].mxu0
  %v1059 = vadd.f32 %v81, %v1058
  %v1060 = vpop.f32.mrb[0].mxu0
  %1061 = vmatprep.mubr.bf16.mxu0 0
  %1062 = vmatmul.mubr.bf16.gmra.mrb[0].mxu0 %v958
  %v1063 = vpop.f32.mrb[0].mxu0
  %v1064 = vadd.f32 %v81, %v1063
  %v1065 = vpop.f32.mrb[0].mxu0
  %v1066 = vpop.f32.mrb[0].mxu0
  %v1067 = vadd.f32 %v81, %v1066
  %v1068 = vpop.f32.mrb[0].mxu0
  %1069 = vmatprep.mubr.bf16.mxu0 0
  %1070 = vmatmul.mubr.bf16.gmra.mrb[0].mxu0 %v959
  %v1071 = vpop.f32.mrb[0].mxu0
  %v1072 = vadd.f32 %v81, %v1071
  %v1073 = vpop.f32.mrb[0].mxu0
  %v1074 = vpop.f32.mrb[0].mxu0
  %v1075 = vadd.f32 %v81, %v1074
  %v1076 = vpop.f32.mrb[0].mxu0
  %1077 = vmatprep.mubr.bf16.mxu0 0
  %1078 = vmatmul.mubr.bf16.gmra.mrb[0].mxu0 %v960
  %v1079 = vpop.f32.mrb[0].mxu0
  %v1080 = vadd.f32 %v81, %v1079
  %v1081 = vpop.f32.mrb[0].mxu0
  %v1082 = vpop.f32.mrb[0].mxu0
  %v1083 = vadd.f32 %v81, %v1082
  %v1084 = vpop.f32.mrb[0].mxu0
  %1085 = vmatprep.mubr.bf16.mxu0 0
  %1086 = vmatmul.mubr.bf16.gmra.mrb[0].mxu0 %v961
  %v1087 = vpop.f32.mrb[0].mxu0
  %v1088 = vadd.f32 %v81, %v1087
  %v1089 = vpop.f32.mrb[0].mxu0
  %v1090 = vpop.f32.mrb[0].mxu0
  %v1091 = vadd.f32 %v81, %v1090
  %v1092 = vpop.f32.mrb[0].mxu0
  %1093 = vmatprep.mubr.bf16.mxu0 0
  %1094 = vmatmul.mubr.bf16.gmra.mrb[0].mxu0 %v962
  %v1095 = vpop.f32.mrb[0].mxu0
  %v1096 = vadd.f32 %v81, %v1095
  %v1097 = vpop.f32.mrb[0].mxu0
  %v1098 = vpop.f32.mrb[0].mxu0
  %v1099 = vadd.f32 %v81, %v1098
  %v1100 = vpop.f32.mrb[0].mxu0
  %1101 = vmatprep.mubr.bf16.mxu0 0
  %1102 = vmatmul.mubr.bf16.gmra.mrb[0].mxu0 %v963
  %v1103 = vpop.f32.mrb[0].mxu0
  %v1104 = vadd.f32 %v81, %v1103
  %v1105 = vpop.f32.mrb[0].mxu0
  %v1106 = vpop.f32.mrb[0].mxu0
  %v1107 = vadd.f32 %v81, %v1106
  %v1108 = vpop.f32.mrb[0].mxu0
  %1109 = vmatprep.mubr.bf16.mxu0 0
  %1110 = vmatmul.mubr.bf16.gmra.mrb[0].mxu0 %v964
  %v1111 = vpop.f32.mrb[0].mxu0
  %v1112 = vadd.f32 %v81, %v1111
  %v1113 = vpop.f32.mrb[0].mxu0
  %v1114 = vpop.f32.mrb[0].mxu0
  %v1115 = vadd.f32 %v81, %v1114
  %v1116 = vpop.f32.mrb[0].mxu0
  %1117 = vmatprep.mubr.bf16.mxu0 0
  %1118 = vmatmul.mubr.bf16.gmra.mrb[0].mxu0 %v965
  %v1119 = vpop.f32.mrb[0].mxu0
  %v1120 = vadd.f32 %v81, %v1119
  %v1121 = vpop.f32.mrb[0].mxu0
  %v1122 = vpop.f32.mrb[0].mxu0
  %v1123 = vadd.f32 %v81, %v1122
  %v1124 = vpop.f32.mrb[0].mxu0
  %1125 = vmatprep.mubr.bf16.mxu0 0
  %1126 = vmatmul.mubr.bf16.gmra.mrb[0].mxu0 %v966
  %v1127 = vpop.f32.mrb[0].mxu0
  %v1128 = vadd.f32 %v81, %v1127
  %v1129 = vpop.f32.mrb[0].mxu0
  %v1130 = vpop.f32.mrb[0].mxu0
  %v1131 = vadd.f32 %v81, %v1130
  %v1132 = vpop.f32.mrb[0].mxu0
  %1133 = vmatprep.mubr.bf16.mxu0 0
  %1134 = vmatmul.mubr.bf16.gmra.mrb[0].mxu0 %v967
  %v1135 = vpop.f32.mrb[0].mxu0
  %v1136 = vadd.f32 %v81, %v1135
  %v1137 = vpop.f32.mrb[0].mxu0
  %v1138 = vpop.f32.mrb[0].mxu0
  %v1139 = vadd.f32 %v81, %v1138
  %v1140 = vpop.f32.mrb[0].mxu0
  %1141 = vmatprep.mubr.bf16.mxu0 0
  %1142 = vmatmul.mubr.bf16.gmra.mrb[0].mxu0 %v968
  %v1143 = vpop.f32.mrb[0].mxu0
  %v1144 = vadd.f32 %v81, %v1143
  %v1145 = vpop.f32.mrb[0].mxu0
  %v1146 = vpop.f32.mrb[0].mxu0
  %v1147 = vadd.f32 %v81, %v1146
  %v1148 = vpop.f32.mrb[0].mxu0
  %1149 = vmatprep.mubr.bf16.mxu0 0
  %1150 = vmatmul.mubr.bf16.gmra.mrb[0].mxu0 %v969
  %v1151 = vpop.f32.mrb[0].mxu0
  %v1152 = vadd.f32 %v81, %v1151
  %v1153 = vpop.f32.mrb[0].mxu0
  %v1154 = vpop.f32.mrb[0].mxu0
  %v1155 = vadd.f32 %v81, %v1154
  %v1156 = vpop.f32.mrb[0].mxu0
  %1157 = vmatprep.mubr.bf16.mxu0 0
  %1158 = vmatmul.mubr.bf16.gmra.mrb[0].mxu0 %v970
  %v1159 = vpop.f32.mrb[0].mxu0
  %v1160 = vadd.f32 %v81, %v1159
  %v1161 = vpop.f32.mrb[0].mxu0
  %v1162 = vpop.f32.mrb[0].mxu0
  %v1163 = vadd.f32 %v81, %v1162
  %v1164 = vpop.f32.mrb[0].mxu0
  %1165 = vdwg.mxu0
  %v1166 = vmax.f32 %v1024, 0.0
  %v1167 = vmax.f32 %v1027, 0.0
  %v1168 = vmax.f32 %v1032, 0.0
  %v1169 = vmax.f32 %v1035, 0.0
  %v1170 = vmax.f32 %v1040, 0.0
  %v1171 = vmax.f32 %v1043, 0.0
  %v1172 = vmax.f32 %v1048, 0.0
  %v1173 = vmax.f32 %v1051, 0.0
  %v1174 = vmax.f32 %v1056, 0.0
  %v1175 = vmax.f32 %v1059, 0.0
  %v1176 = vmax.f32 %v1064, 0.0
  %v1177 = vmax.f32 %v1067, 0.0
  %v1178 = vmax.f32 %v1072, 0.0
  %v1179 = vmax.f32 %v1075, 0.0
  %v1180 = vmax.f32 %v1080, 0.0
  %v1181 = vmax.f32 %v1083, 0.0
  %v1182 = vmax.f32 %v1088, 0.0
  %v1183 = vmax.f32 %v1091, 0.0
  %v1184 = vmax.f32 %v1096, 0.0
  %v1185 = vmax.f32 %v1099, 0.0
  %v1186 = vmax.f32 %v1104, 0.0
  %v1187 = vmax.f32 %v1107, 0.0
  %v1188 = vmax.f32 %v1112, 0.0
  %v1189 = vmax.f32 %v1115, 0.0
  %v1190 = vmax.f32 %v1120, 0.0
  %v1191 = vmax.f32 %v1123, 0.0
  %v1192 = vmax.f32 %v1128, 0.0
  %v1193 = vmax.f32 %v1131, 0.0
  %v1194 = vmax.f32 %v1136, 0.0
  %v1195 = vmax.f32 %v1139, 0.0
  %v1196 = vmax.f32 %v1144, 0.0
  %v1197 = vmax.f32 %v1147, 0.0
  %v1198 = vmax.f32 %v1152, 0.0
  %v1199 = vmax.f32 %v1155, 0.0
  %v1200 = vmax.f32 %v1160, 0.0
  %v1201 = vmax.f32 %v1163, 0.0
  %v1202 = vld [vmem:[%s3] sm:$0xf]
  %v1203 = vld [vmem:[%s3 + $0x4] sm:$0xf]
  %v1204 = vld [vmem:[%s3 + $0x8] sm:$0xf]
  %v1205 = vld [vmem:[%s3 + $0xc] sm:$0xf]
  %v1206 = vld [vmem:[%s3 + $0x10] sm:$0xf]
  %v1207 = vld [vmem:[%s3 + $0x14] sm:$0xf]
  %v1208 = vld [vmem:[%s3 + $0x18] sm:$0xf]
  %v1209 = vld [vmem:[%s3 + $0x1c] sm:$0xf]
  %v1210 = vld [vmem:[%s3 + $0x20] sm:$0xf]
  %v1211 = vld [vmem:[%s3 + $0x24] sm:$0xf]
  %v1212 = vld [vmem:[%s3 + $0x28] sm:$0xf]
  %v1213 = vld [vmem:[%s3 + $0x2c] sm:$0xf]
  %v1214 = vld [vmem:[%s3 + $0x30] sm:$0xf]
  %v1215 = vld [vmem:[%s3 + $0x34] sm:$0xf]
  %v1216 = vld [vmem:[%s3 + $0x38] sm:$0xf]
  %v1217 = vld [vmem:[%s3 + $0x3c] sm:$0xf]
  %v1218 = vld [vmem:[%s3 + $0x40] sm:$0xf]
  %v1219 = vld [vmem:[%s3 + $0x44] sm:$0xf]
  %v1220 = vld [vmem:[%s3 + $0x48] sm:$0xf]
  %v1221 = vld [vmem:[%s3 + $0x4c] sm:$0xf]
  %v1222 = vld [vmem:[%s3 + $0x50] sm:$0xf]
  %v1223 = vld [vmem:[%s3 + $0x54] sm:$0xf]
  %v1224 = vld [vmem:[%s3 + $0x58] sm:$0xf]
  %v1225 = vld [vmem:[%s3 + $0x5c] sm:$0xf]
  %v1226 = vld [vmem:[%s3 + $0x60] sm:$0xf]
  %v1227 = vld [vmem:[%s3 + $0x64] sm:$0xf]
  %v1228 = vld [vmem:[%s3 + $0x68] sm:$0xf]
  %v1229 = vld [vmem:[%s3 + $0x6c] sm:$0xf]
  %v1230 = vld [vmem:[%s3 + $0x70] sm:$0xf]
  %v1231 = vld [vmem:[%s3 + $0x74] sm:$0xf]
  %v1232 = vld [vmem:[%s3 + $0x78] sm:$0xf]
  %v1233 = vld [vmem:[%s3 + $0x7c] sm:$0xf]
  %v1234 = vld [vmem:[%s3 + $0x80] sm:$0xf]
  %v1235 = vld [vmem:[%s3 + $0x84] sm:$0xf]
  %v1236 = vld [vmem:[%s3 + $0x88] sm:$0xf]
  %v1237 = vld [vmem:[%s3 + $0x8c] sm:$0xf]
  %v1274 = vunpack.c.l.b16 %v1202
  %v1275 = vunpack.c.l.b16 %v1203
  %v1276 = vunpack.c.l.b16 %v1204
  %v1277 = vunpack.c.l.b16 %v1205
  %v1278 = vunpack.c.l.b16 %v1206
  %v1279 = vunpack.c.l.b16 %v1207
  %v1280 = vunpack.c.l.b16 %v1208
  %v1281 = vunpack.c.l.b16 %v1209
  %v1282 = vunpack.c.l.b16 %v1210
  %v1283 = vunpack.c.l.b16 %v1211
  %v1284 = vunpack.c.l.b16 %v1212
  %v1285 = vunpack.c.l.b16 %v1213
  %v1286 = vunpack.c.l.b16 %v1214
  %v1287 = vunpack.c.l.b16 %v1215
  %v1288 = vunpack.c.l.b16 %v1216
  %v1289 = vunpack.c.l.b16 %v1217
  %v1290 = vunpack.c.l.b16 %v1218
  %v1291 = vunpack.c.l.b16 %v1219
  %v1292 = vunpack.c.l.b16 %v1220
  %v1293 = vunpack.c.l.b16 %v1221
  %v1294 = vunpack.c.l.b16 %v1222
  %v1295 = vunpack.c.l.b16 %v1223
  %v1296 = vunpack.c.l.b16 %v1224
  %v1297 = vunpack.c.l.b16 %v1225
  %v1298 = vunpack.c.l.b16 %v1226
  %v1299 = vunpack.c.l.b16 %v1227
  %v1300 = vunpack.c.l.b16 %v1228
  %v1301 = vunpack.c.l.b16 %v1229
  %v1302 = vunpack.c.l.b16 %v1230
  %v1303 = vunpack.c.l.b16 %v1231
  %v1304 = vunpack.c.l.b16 %v1232
  %v1305 = vunpack.c.l.b16 %v1233
  %v1306 = vunpack.c.l.b16 %v1234
  %v1307 = vunpack.c.l.b16 %v1235
  %v1308 = vunpack.c.l.b16 %v1236
  %v1309 = vunpack.c.l.b16 %v1237
  %v1310 = vpack.c.b16 %v1275, %v1274
  %v1311 = vpack.c.b16 %v1277, %v1276
  %v1312 = vpack.c.b16 %v1279, %v1278
  %v1313 = vpack.c.b16 %v1281, %v1280
  %v1314 = vpack.c.b16 %v1283, %v1282
  %v1315 = vpack.c.b16 %v1285, %v1284
  %v1316 = vpack.c.b16 %v1287, %v1286
  %v1317 = vpack.c.b16 %v1289, %v1288
  %v1318 = vpack.c.b16 %v1291, %v1290
  %v1319 = vpack.c.b16 %v1293, %v1292
  %v1320 = vpack.c.b16 %v1295, %v1294
  %v1321 = vpack.c.b16 %v1297, %v1296
  %v1322 = vpack.c.b16 %v1299, %v1298
  %v1323 = vpack.c.b16 %v1301, %v1300
  %v1324 = vpack.c.b16 %v1303, %v1302
  %v1325 = vpack.c.b16 %v1305, %v1304
  %v1326 = vpack.c.b16 %v1307, %v1306
  %v1327 = vpack.c.b16 %v1309, %v1308
  %1346 = vmatprep.subr.bf16.mxu0 0
  %1347 = vmatpush1.bf16.msra.mxu0 %v223
  %1348 = vmatprep.subr.bf16.mxu0 0
  %1349 = vmatpush1.bf16.msra.mxu0 %v224
  %1350 = vmatprep.subr.bf16.mxu0 0
  %1351 = vmatpush1.bf16.msra.mxu0 %v225
  %1352 = vmatprep.subr.bf16.mxu0 0
  %1353 = vmatpush1.bf16.msra.mxu0 %v226
  %1354 = vmatprep.subr.bf16.mxu0 0
  %1355 = vmatpush1.bf16.msra.mxu0 %v227
  %1356 = vmatprep.subr.bf16.mxu0 0
  %1357 = vmatpush1.bf16.msra.mxu0 %v228
  %1358 = vmatprep.subr.bf16.mxu0 0
  %1359 = vmatpush1.bf16.msra.mxu0 %v229
  %1360 = vmatprep.subr.bf16.mxu0 0
  %1361 = vmatpush1.bf16.msra.mxu0 %v230
  %1362 = vmatprep.subr.bf16.mxu0 0
  %1363 = vmatpush1.bf16.msra.mxu0 0
  %1364 = vmatprep.subr.bf16.mxu0 0
  %1365 = vmatpush1.bf16.msra.mxu0 0
  %1366 = vmatprep.subr.bf16.mxu0 0
  %1367 = vmatpush1.bf16.msra.mxu0 0
  %1368 = vmatprep.subr.bf16.mxu0 0
  %1369 = vmatpush1.bf16.msra.mxu0 0
  %1370 = vmatprep.subr.bf16.mxu0 0
  %1371 = vmatpush1.bf16.msra.mxu0 0
  %1372 = vmatprep.subr.bf16.mxu0 0
  %1373 = vmatpush1.bf16.msra.mxu0 0
  %1374 = vmatprep.subr.bf16.mxu0 0
  %1375 = vmatpush1.bf16.msra.mxu0 0
  %1376 = vmatprep.subr.bf16.mxu0 0
  %1377 = vmatpush1.bf16.msra.mxu0 0
  %1378 = vmatprep.mubr.bf16.mxu0 0
  %1379 = vmatmul.mubr.bf16.gmra.mrb[0].mxu0 %v1310
  %v1380 = vpop.f32.mrb[0].mxu0
  %v1381 = vadd.f32 %v81, %v1380
  %v1382 = vpop.f32.mrb[0].mxu0
  %v1383 = vpop.f32.mrb[0].mxu0
  %v1384 = vadd.f32 %v81, %v1383
  %v1385 = vpop.f32.mrb[0].mxu0
  %1386 = vmatprep.mubr.bf16.mxu0 0
  %1387 = vmatmul.mubr.bf16.gmra.mrb[0].mxu0 %v1311
  %v1388 = vpop.f32.mrb[0].mxu0
  %v1389 = vadd.f32 %v81, %v1388
  %v1390 = vpop.f32.mrb[0].mxu0
  %v1391 = vpop.f32.mrb[0].mxu0
  %v1392 = vadd.f32 %v81, %v1391
  %v1393 = vpop.f32.mrb[0].mxu0
  %1394 = vmatprep.mubr.bf16.mxu0 0
  %1395 = vmatmul.mubr.bf16.gmra.mrb[0].mxu0 %v1312
  %v1396 = vpop.f32.mrb[0].mxu0
  %v1397 = vadd.f32 %v81, %v1396
  %v1398 = vpop.f32.mrb[0].mxu0
  %v1399 = vpop.f32.mrb[0].mxu0
  %v1400 = vadd.f32 %v81, %v1399
  %v1401 = vpop.f32.mrb[0].mxu0
  %1402 = vmatprep.mubr.bf16.mxu0 0
  %1403 = vmatmul.mubr.bf16.gmra.mrb[0].mxu0 %v1313
  %v1404 = vpop.f32.mrb[0].mxu0
  %v1405 = vadd.f32 %v81, %v1404
  %v1406 = vpop.f32.mrb[0].mxu0
  %v1407 = vpop.f32.mrb[0].mxu0
  %v1408 = vadd.f32 %v81, %v1407
  %v1409 = vpop.f32.mrb[0].mxu0
  %1410 = vmatprep.mubr.bf16.mxu0 0
  %1411 = vmatmul.mubr.bf16.gmra.mrb[0].mxu0 %v1314
  %v1412 = vpop.f32.mrb[0].mxu0
  %v1413 = vadd.f32 %v81, %v1412
  %v1414 = vpop.f32.mrb[0].mxu0
  %v1415 = vpop.f32.mrb[0].mxu0
  %v1416 = vadd.f32 %v81, %v1415
  %v1417 = vpop.f32.mrb[0].mxu0
  %1418 = vmatprep.mubr.bf16.mxu0 0
  %1419 = vmatmul.mubr.bf16.gmra.mrb[0].mxu0 %v1315
  %v1420 = vpop.f32.mrb[0].mxu0
  %v1421 = vadd.f32 %v81, %v1420
  %v1422 = vpop.f32.mrb[0].mxu0
  %v1423 = vpop.f32.mrb[0].mxu0
  %v1424 = vadd.f32 %v81, %v1423
  %v1425 = vpop.f32.mrb[0].mxu0
  %1426 = vmatprep.mubr.bf16.mxu0 0
  %1427 = vmatmul.mubr.bf16.gmra.mrb[0].mxu0 %v1316
  %v1428 = vpop.f32.mrb[0].mxu0
  %v1429 = vadd.f32 %v81, %v1428
  %v1430 = vpop.f32.mrb[0].mxu0
  %v1431 = vpop.f32.mrb[0].mxu0
  %v1432 = vadd.f32 %v81, %v1431
  %v1433 = vpop.f32.mrb[0].mxu0
  %1434 = vmatprep.mubr.bf16.mxu0 0
  %1435 = vmatmul.mubr.bf16.gmra.mrb[0].mxu0 %v1317
  %v1436 = vpop.f32.mrb[0].mxu0
  %v1437 = vadd.f32 %v81, %v1436
  %v1438 = vpop.f32.mrb[0].mxu0
  %v1439 = vpop.f32.mrb[0].mxu0
  %v1440 = vadd.f32 %v81, %v1439
  %v1441 = vpop.f32.mrb[0].mxu0
  %1442 = vmatprep.mubr.bf16.mxu0 0
  %1443 = vmatmul.mubr.bf16.gmra.mrb[0].mxu0 %v1318
  %v1444 = vpop.f32.mrb[0].mxu0
  %v1445 = vadd.f32 %v81, %v1444
  %v1446 = vpop.f32.mrb[0].mxu0
  %v1447 = vpop.f32.mrb[0].mxu0
  %v1448 = vadd.f32 %v81, %v1447
  %v1449 = vpop.f32.mrb[0].mxu0
  %1450 = vmatprep.mubr.bf16.mxu0 0
  %1451 = vmatmul.mubr.bf16.gmra.mrb[0].mxu0 %v1319
  %v1452 = vpop.f32.mrb[0].mxu0
  %v1453 = vadd.f32 %v81, %v1452
  %v1454 = vpop.f32.mrb[0].mxu0
  %v1455 = vpop.f32.mrb[0].mxu0
  %v1456 = vadd.f32 %v81, %v1455
  %v1457 = vpop.f32.mrb[0].mxu0
  %1458 = vmatprep.mubr.bf16.mxu0 0
  %1459 = vmatmul.mubr.bf16.gmra.mrb[0].mxu0 %v1320
  %v1460 = vpop.f32.mrb[0].mxu0
  %v1461 = vadd.f32 %v81, %v1460
  %v1462 = vpop.f32.mrb[0].mxu0
  %v1463 = vpop.f32.mrb[0].mxu0
  %v1464 = vadd.f32 %v81, %v1463
  %v1465 = vpop.f32.mrb[0].mxu0
  %1466 = vmatprep.mubr.bf16.mxu0 0
  %1467 = vmatmul.mubr.bf16.gmra.mrb[0].mxu0 %v1321
  %v1468 = vpop.f32.mrb[0].mxu0
  %v1469 = vadd.f32 %v81, %v1468
  %v1470 = vpop.f32.mrb[0].mxu0
  %v1471 = vpop.f32.mrb[0].mxu0
  %v1472 = vadd.f32 %v81, %v1471
  %v1473 = vpop.f32.mrb[0].mxu0
  %1474 = vmatprep.mubr.bf16.mxu0 0
  %1475 = vmatmul.mubr.bf16.gmra.mrb[0].mxu0 %v1322
  %v1476 = vpop.f32.mrb[0].mxu0
  %v1477 = vadd.f32 %v81, %v1476
  %v1478 = vpop.f32.mrb[0].mxu0
  %v1479 = vpop.f32.mrb[0].mxu0
  %v1480 = vadd.f32 %v81, %v1479
  %v1481 = vpop.f32.mrb[0].mxu0
  %1482 = vmatprep.mubr.bf16.mxu0 0
  %1483 = vmatmul.mubr.bf16.gmra.mrb[0].mxu0 %v1323
  %v1484 = vpop.f32.mrb[0].mxu0
  %v1485 = vadd.f32 %v81, %v1484
  %v1486 = vpop.f32.mrb[0].mxu0
  %v1487 = vpop.f32.mrb[0].mxu0
  %v1488 = vadd.f32 %v81, %v1487
  %v1489 = vpop.f32.mrb[0].mxu0
  %1490 = vmatprep.mubr.bf16.mxu0 0
  %1491 = vmatmul.mubr.bf16.gmra.mrb[0].mxu0 %v1324
  %v1492 = vpop.f32.mrb[0].mxu0
  %v1493 = vadd.f32 %v81, %v1492
  %v1494 = vpop.f32.mrb[0].mxu0
  %v1495 = vpop.f32.mrb[0].mxu0
  %v1496 = vadd.f32 %v81, %v1495
  %v1497 = vpop.f32.mrb[0].mxu0
  %1498 = vmatprep.mubr.bf16.mxu0 0
  %1499 = vmatmul.mubr.bf16.gmra.mrb[0].mxu0 %v1325
  %v1500 = vpop.f32.mrb[0].mxu0
  %v1501 = vadd.f32 %v81, %v1500
  %v1502 = vpop.f32.mrb[0].mxu0
  %v1503 = vpop.f32.mrb[0].mxu0
  %v1504 = vadd.f32 %v81, %v1503
  %v1505 = vpop.f32.mrb[0].mxu0
  %1506 = vmatprep.mubr.bf16.mxu0 0
  %1507 = vmatmul.mubr.bf16.gmra.mrb[0].mxu0 %v1326
  %v1508 = vpop.f32.mrb[0].mxu0
  %v1509 = vadd.f32 %v81, %v1508
  %v1510 = vpop.f32.mrb[0].mxu0
  %v1511 = vpop.f32.mrb[0].mxu0
  %v1512 = vadd.f32 %v81, %v1511
  %v1513 = vpop.f32.mrb[0].mxu0
  %1514 = vmatprep.mubr.bf16.mxu0 0
  %1515 = vmatmul.mubr.bf16.gmra.mrb[0].mxu0 %v1327
  %v1516 = vpop.f32.mrb[0].mxu0
  %v1517 = vadd.f32 %v81, %v1516
  %v1518 = vpop.f32.mrb[0].mxu0
  %v1519 = vpop.f32.mrb[0].mxu0
  %v1520 = vadd.f32 %v81, %v1519
  %v1521 = vpop.f32.mrb[0].mxu0
  %1522 = vdwg.mxu0
  %v1523 = vmax.f32 %v1381, 0.0
  %v1524 = vmax.f32 %v1384, 0.0
  %v1525 = vmax.f32 %v1389, 0.0
  %v1526 = vmax.f32 %v1392, 0.0
  %v1527 = vmax.f32 %v1397, 0.0
  %v1528 = vmax.f32 %v1400, 0.0
  %v1529 = vmax.f32 %v1405, 0.0
  %v1530 = vmax.f32 %v1408, 0.0
  %v1531 = vmax.f32 %v1413, 0.0
  %v1532 = vmax.f32 %v1416, 0.0
  %v1533 = vmax.f32 %v1421, 0.0
  %v1534 = vmax.f32 %v1424, 0.0
  %v1535 = vmax.f32 %v1429, 0.0
  %v1536 = vmax.f32 %v1432, 0.0
  %v1537 = vmax.f32 %v1437, 0.0
  %v1538 = vmax.f32 %v1440, 0.0
  %v1539 = vmax.f32 %v1445, 0.0
  %v1540 = vmax.f32 %v1448, 0.0
  %v1541 = vmax.f32 %v1453, 0.0
  %v1542 = vmax.f32 %v1456, 0.0
  %v1543 = vmax.f32 %v1461, 0.0
  %v1544 = vmax.f32 %v1464, 0.0
  %v1545 = vmax.f32 %v1469, 0.0
  %v1546 = vmax.f32 %v1472, 0.0
  %v1547 = vmax.f32 %v1477, 0.0
  %v1548 = vmax.f32 %v1480, 0.0
  %v1549 = vmax.f32 %v1485, 0.0
  %v1550 = vmax.f32 %v1488, 0.0
  %v1551 = vmax.f32 %v1493, 0.0
  %v1552 = vmax.f32 %v1496, 0.0
  %v1553 = vmax.f32 %v1501, 0.0
  %v1554 = vmax.f32 %v1504, 0.0
  %v1555 = vmax.f32 %v1509, 0.0
  %v1556 = vmax.f32 %v1512, 0.0
  %v1557 = vmax.f32 %v1517, 0.0
  %v1558 = vmax.f32 %v1520, 0.0
  %v1559 = vmax.f32 %v1166, %v1523
  %v1560 = vmax.f32 %v1167, %v1524
  %v1561 = vmax.f32 %v1168, %v1525
  %v1562 = vmax.f32 %v1169, %v1526
  %v1563 = vmax.f32 %v1170, %v1527
  %v1564 = vmax.f32 %v1171, %v1528
  %v1565 = vmax.f32 %v1172, %v1529
  %v1566 = vmax.f32 %v1173, %v1530
  %v1567 = vmax.f32 %v1174, %v1531
  %v1568 = vmax.f32 %v1175, %v1532
  %v1569 = vmax.f32 %v1176, %v1533
  %v1570 = vmax.f32 %v1177, %v1534
  %v1571 = vmax.f32 %v1178, %v1535
  %v1572 = vmax.f32 %v1179, %v1536
  %v1573 = vmax.f32 %v1180, %v1537
  %v1574 = vmax.f32 %v1181, %v1538
  %v1575 = vmax.f32 %v1182, %v1539
  %v1576 = vmax.f32 %v1183, %v1540
  %v1577 = vmax.f32 %v1184, %v1541
  %v1578 = vmax.f32 %v1185, %v1542
  %v1579 = vmax.f32 %v1186, %v1543
  %v1580 = vmax.f32 %v1187, %v1544
  %v1581 = vmax.f32 %v1188, %v1545
  %v1582 = vmax.f32 %v1189, %v1546
  %v1583 = vmax.f32 %v1190, %v1547
  %v1584 = vmax.f32 %v1191, %v1548
  %v1585 = vmax.f32 %v1192, %v1549
  %v1586 = vmax.f32 %v1193, %v1550
  %v1587 = vmax.f32 %v1194, %v1551
  %v1588 = vmax.f32 %v1195, %v1552
  %v1589 = vmax.f32 %v1196, %v1553
  %v1590 = vmax.f32 %v1197, %v1554
  %v1591 = vmax.f32 %v1198, %v1555
  %v1592 = vmax.f32 %v1199, %v1556
  %v1593 = vmax.f32 %v1200, %v1557
  %v1594 = vmax.f32 %v1201, %v1558
  %v1595 = vmax.f32 %v809, %v1559
  %v1596 = vmax.f32 %v810, %v1560
  %v1597 = vmax.f32 %v811, %v1561
  %v1598 = vmax.f32 %v812, %v1562
  %v1599 = vmax.f32 %v813, %v1563
  %v1600 = vmax.f32 %v814, %v1564
  %v1601 = vmax.f32 %v815, %v1565
  %v1602 = vmax.f32 %v816, %v1566
  %v1603 = vmax.f32 %v817, %v1567
  %v1604 = vmax.f32 %v818, %v1568
  %v1605 = vmax.f32 %v819, %v1569
  %v1606 = vmax.f32 %v820, %v1570
  %v1607 = vmax.f32 %v821, %v1571
  %v1608 = vmax.f32 %v822, %v1572
  %v1609 = vmax.f32 %v823, %v1573
  %v1610 = vmax.f32 %v824, %v1574
  %v1611 = vmax.f32 %v825, %v1575
  %v1612 = vmax.f32 %v826, %v1576
  %v1613 = vmax.f32 %v827, %v1577
  %v1614 = vmax.f32 %v828, %v1578
  %v1615 = vmax.f32 %v829, %v1579
  %v1616 = vmax.f32 %v830, %v1580
  %v1617 = vmax.f32 %v831, %v1581
  %v1618 = vmax.f32 %v832, %v1582
  %v1619 = vmax.f32 %v833, %v1583
  %v1620 = vmax.f32 %v834, %v1584
  %v1621 = vmax.f32 %v835, %v1585
  %v1622 = vmax.f32 %v836, %v1586
  %v1623 = vmax.f32 %v837, %v1587
  %v1624 = vmax.f32 %v838, %v1588
  %v1625 = vmax.f32 %v839, %v1589
  %v1626 = vmax.f32 %v840, %v1590
  %v1627 = vmax.f32 %v841, %v1591
  %v1628 = vmax.f32 %v842, %v1592
  %v1629 = vmax.f32 %v843, %v1593
  %v1630 = vmax.f32 %v844, %v1594
  %1631 = vst [vmem:[%s6] sm:$0xff] %v1595
  %1632 = vst [vmem:[%s6 + $0x8] sm:$0xff] %v1596
  %1633 = vst [vmem:[%s6 + $0x10] sm:$0xff] %v1597
  %1634 = vst [vmem:[%s6 + $0x18] sm:$0xff] %v1598
  %1635 = vst [vmem:[%s6 + $0x20] sm:$0xff] %v1599
  %1636 = vst [vmem:[%s6 + $0x28] sm:$0xff] %v1600
  %1637 = vst [vmem:[%s6 + $0x30] sm:$0xff] %v1601
  %1638 = vst [vmem:[%s6 + $0x38] sm:$0xff] %v1602
  %1639 = vst [vmem:[%s6 + $0x40] sm:$0xff] %v1603
  %1640 = vst [vmem:[%s6 + $0x48] sm:$0xff] %v1604
  %1641 = vst [vmem:[%s6 + $0x50] sm:$0xff] %v1605
  %1642 = vst [vmem:[%s6 + $0x58] sm:$0xff] %v1606
  %1643 = vst [vmem:[%s6 + $0x60] sm:$0xff] %v1607
  %1644 = vst [vmem:[%s6 + $0x68] sm:$0xff] %v1608
  %1645 = vst [vmem:[%s6 + $0x70] sm:$0xff] %v1609
  %1646 = vst [vmem:[%s6 + $0x78] sm:$0xff] %v1610
  %1647 = vst [vmem:[%s6 + $0x80] sm:$0xff] %v1611
  %1648 = vst [vmem:[%s6 + $0x88] sm:$0xff] %v1612
  %1649 = vst [vmem:[%s6 + $0x90] sm:$0xff] %v1613
  %1650 = vst [vmem:[%s6 + $0x98] sm:$0xff] %v1614
  %1651 = vst [vmem:[%s6 + $0xa0] sm:$0xff] %v1615
  %1652 = vst [vmem:[%s6 + $0xa8] sm:$0xff] %v1616
  %1653 = vst [vmem:[%s6 + $0xb0] sm:$0xff] %v1617
  %1654 = vst [vmem:[%s6 + $0xb8] sm:$0xff] %v1618
  %1655 = vst [vmem:[%s6 + $0xc0] sm:$0xff] %v1619
  %1656 = vst [vmem:[%s6 + $0xc8] sm:$0xff] %v1620
  %1657 = vst [vmem:[%s6 + $0xd0] sm:$0xff] %v1621
  %1658 = vst [vmem:[%s6 + $0xd8] sm:$0xff] %v1622
  %1659 = vst [vmem:[%s6 + $0xe0] sm:$0xff] %v1623
  %1660 = vst [vmem:[%s6 + $0xe8] sm:$0xff] %v1624
  %1661 = vst [vmem:[%s6 + $0xf0] sm:$0xff] %v1625
  %1662 = vst [vmem:[%s6 + $0xf8] sm:$0xff] %v1626
  %1663 = vst [vmem:[%s6 + $0x100] sm:$0xff] %v1627
  %1664 = vst [vmem:[%s6 + $0x108] sm:$0xff] %v1628
  %1665 = vst [vmem:[%s6 + $0x110] sm:$0xff] %v1629
  %1666 = vst [vmem:[%s6 + $0x118] sm:$0xff] %v1630
  // Predicated region
  $region26: #{net_forward.3} parent=0 // pred_check
    _
  $region27: #{net_forward.3} parent=0 // pred_check_branch
    %1668 = sbr.rel (0) target = $region29
  $region28: #{net_forward.3} parent=0 // pred_region
    _
  $region29: #{net_forward.3} parent=0 // pred_fallthru
    _
  // Predicated region
  $region30: #{net_forward.3} parent=0 // pred_check
    _
  $region31: #{net_forward.3} parent=0 // pred_check_branch
    %1670 = sbr.rel (0) target = $region33
  $region32: #{net_forward.3} parent=0 // pred_region
    _
  $region33: #{net_forward.3} parent=0 // pred_fallthru
    _

// kernel: squeeze.0
$region0: #{squeeze.0}
  %s0 = inlined_call_operand.vmem [shape: bf16[2,4,1,4,1,500], index: 0, kind: input, shape index: {}]
  %s1 = inlined_call_operand.vmem [shape: bf16[32,500], index: 1, kind: output, shape index: {}]
  $region1: #{squeeze.0} parent=0
    #allocation0 [shape = 'u8[65536]{0}', space=vmem, size = 0x10000, scoped, tag = 'scoped mem for output reshape']
    #allocation1 [shape = 'u8[131072]{0}', space=vmem, size = 0x20000, scoped, tag = 'scoped mem for input reshape']
    %s3 = smul.u32 2, 2
    %s4 = sshllo.u32 0, %s3
    %s5 = smul.addr 2, 31
    %s6 = scalar_lea.vmem %s0, %s5
    %s7 = sshrl.u32 %s4, 1
    %s8 = sor.u32 %s4, %s7
    %s9 = sand.u32 %s8, 85
    %s10 = sshrl.u32 %s9, 1
    %s11 = sor.u32 %s9, %s10
    %s12 = sand.u32 51, %s11
    %s13 = sshrl.u32 %s12, 2
    %s14 = sor.u32 %s12, %s13
    %s15 = sand.u32 15, %s14
    %v16 = vld [vmem:[%s6] sm:%s15]
    %v17 = vunpack.c.l.bf16 %v16
    %v18 = vunpack.c.h.bf16 %v16
    %s19 = scalar_lea.vmem [#allocation1], 248
    %20 = vst [vmem:[%s19] sm:%s4] %v17
    %s21 = smul.addr 2, 30
    %s22 = scalar_lea.vmem %s0, %s21
    %s23 = sshrl.u32 %s4, 1
    %s24 = sor.u32 %s4, %s23
    %s25 = sand.u32 %s24, 85
    %s26 = sshrl.u32 %s25, 1
    %s27 = sor.u32 %s25, %s26
    %s28 = sand.u32 51, %s27
    %s29 = sshrl.u32 %s28, 2
    %s30 = sor.u32 %s28, %s29
    %s31 = sand.u32 15, %s30
    %v32 = vld [vmem:[%s22] sm:%s31]
    %v33 = vunpack.c.l.bf16 %v32
    %v34 = vunpack.c.h.bf16 %v32
    %s35 = scalar_lea.vmem [#allocation1], 240
    %36 = vst [vmem:[%s35] sm:%s4] %v33
    %s37 = smul.addr 2, 29
    %s38 = scalar_lea.vmem %s0, %s37
    %s39 = sshrl.u32 %s4, 1
    %s40 = sor.u32 %s4, %s39
    %s41 = sand.u32 %s40, 85
    %s42 = sshrl.u32 %s41, 1
    %s43 = sor.u32 %s41, %s42
    %s44 = sand.u32 51, %s43
    %s45 = sshrl.u32 %s44, 2
    %s46 = sor.u32 %s44, %s45
    %s47 = sand.u32 15, %s46
    %v48 = vld [vmem:[%s38] sm:%s47]
    %v49 = vunpack.c.l.bf16 %v48
    %v50 = vunpack.c.h.bf16 %v48
    %s51 = scalar_lea.vmem [#allocation1], 232
    %52 = vst [vmem:[%s51] sm:%s4] %v49
    %s53 = smul.addr 2, 28
    %s54 = scalar_lea.vmem %s0, %s53
    %s55 = sshrl.u32 %s4, 1
    %s56 = sor.u32 %s4, %s55
    %s57 = sand.u32 %s56, 85
    %s58 = sshrl.u32 %s57, 1
    %s59 = sor.u32 %s57, %s58
    %s60 = sand.u32 51, %s59
    %s61 = sshrl.u32 %s60, 2
    %s62 = sor.u32 %s60, %s61
    %s63 = sand.u32 15, %s62
    %v64 = vld [vmem:[%s54] sm:%s63]
    %v65 = vunpack.c.l.bf16 %v64
    %v66 = vunpack.c.h.bf16 %v64
    %s67 = scalar_lea.vmem [#allocation1], 224
    %68 = vst [vmem:[%s67] sm:%s4] %v65
    %s69 = smul.addr 2, 27
    %s70 = scalar_lea.vmem %s0, %s69
    %s71 = sshrl.u32 %s4, 1
    %s72 = sor.u32 %s4, %s71
    %s73 = sand.u32 %s72, 85
    %s74 = sshrl.u32 %s73, 1
    %s75 = sor.u32 %s73, %s74
    %s76 = sand.u32 51, %s75
    %s77 = sshrl.u32 %s76, 2
    %s78 = sor.u32 %s76, %s77
    %s79 = sand.u32 15, %s78
    %v80 = vld [vmem:[%s70] sm:%s79]
    %v81 = vunpack.c.l.bf16 %v80
    %v82 = vunpack.c.h.bf16 %v80
    %s83 = scalar_lea.vmem [#allocation1], 216
    %84 = vst [vmem:[%s83] sm:%s4] %v81
    %s85 = smul.addr 2, 26
    %s86 = scalar_lea.vmem %s0, %s85
    %s87 = sshrl.u32 %s4, 1
    %s88 = sor.u32 %s4, %s87
    %s89 = sand.u32 %s88, 85
    %s90 = sshrl.u32 %s89, 1
    %s91 = sor.u32 %s89, %s90
    %s92 = sand.u32 51, %s91
    %s93 = sshrl.u32 %s92, 2
    %s94 = sor.u32 %s92, %s93
    %s95 = sand.u32 15, %s94
    %v96 = vld [vmem:[%s86] sm:%s95]
    %v97 = vunpack.c.l.bf16 %v96
    %v98 = vunpack.c.h.bf16 %v96
    %s99 = scalar_lea.vmem [#allocation1], 208
    %100 = vst [vmem:[%s99] sm:%s4] %v97
    %s101 = smul.addr 2, 25
    %s102 = scalar_lea.vmem %s0, %s101
    %s103 = sshrl.u32 %s4, 1
    %s104 = sor.u32 %s4, %s103
    %s105 = sand.u32 %s104, 85
    %s106 = sshrl.u32 %s105, 1
    %s107 = sor.u32 %s105, %s106
    %s108 = sand.u32 51, %s107
    %s109 = sshrl.u32 %s108, 2
    %s110 = sor.u32 %s108, %s109
    %s111 = sand.u32 15, %s110
    %v112 = vld [vmem:[%s102] sm:%s111]
    %v113 = vunpack.c.l.bf16 %v112
    %v114 = vunpack.c.h.bf16 %v112
    %s115 = scalar_lea.vmem [#allocation1], 200
    %116 = vst [vmem:[%s115] sm:%s4] %v113
    %s117 = smul.addr 2, 24
    %s118 = scalar_lea.vmem %s0, %s117
    %s119 = sshrl.u32 %s4, 1
    %s120 = sor.u32 %s4, %s119
    %s121 = sand.u32 %s120, 85
    %s122 = sshrl.u32 %s121, 1
    %s123 = sor.u32 %s121, %s122
    %s124 = sand.u32 51, %s123
    %s125 = sshrl.u32 %s124, 2
    %s126 = sor.u32 %s124, %s125
    %s127 = sand.u32 15, %s126
    %v128 = vld [vmem:[%s118] sm:%s127]
    %v129 = vunpack.c.l.bf16 %v128
    %v130 = vunpack.c.h.bf16 %v128
    %s131 = scalar_lea.vmem [#allocation1], 192
    %132 = vst [vmem:[%s131] sm:%s4] %v129
    %s133 = smul.addr 2, 23
    %s134 = scalar_lea.vmem %s0, %s133
    %s135 = sshrl.u32 %s4, 1
    %s136 = sor.u32 %s4, %s135
    %s137 = sand.u32 %s136, 85
    %s138 = sshrl.u32 %s137, 1
    %s139 = sor.u32 %s137, %s138
    %s140 = sand.u32 51, %s139
    %s141 = sshrl.u32 %s140, 2
    %s142 = sor.u32 %s140, %s141
    %s143 = sand.u32 15, %s142
    %v144 = vld [vmem:[%s134] sm:%s143]
    %v145 = vunpack.c.l.bf16 %v144
    %v146 = vunpack.c.h.bf16 %v144
    %s147 = scalar_lea.vmem [#allocation1], 184
    %148 = vst [vmem:[%s147] sm:%s4] %v145
    %s149 = smul.addr 2, 22
    %s150 = scalar_lea.vmem %s0, %s149
    %s151 = sshrl.u32 %s4, 1
    %s152 = sor.u32 %s4, %s151
    %s153 = sand.u32 %s152, 85
    %s154 = sshrl.u32 %s153, 1
    %s155 = sor.u32 %s153, %s154
    %s156 = sand.u32 51, %s155
    %s157 = sshrl.u32 %s156, 2
    %s158 = sor.u32 %s156, %s157
    %s159 = sand.u32 15, %s158
    %v160 = vld [vmem:[%s150] sm:%s159]
    %v161 = vunpack.c.l.bf16 %v160
    %v162 = vunpack.c.h.bf16 %v160
    %s163 = scalar_lea.vmem [#allocation1], 176
    %164 = vst [vmem:[%s163] sm:%s4] %v161
    %s165 = smul.addr 2, 21
    %s166 = scalar_lea.vmem %s0, %s165
    %s167 = sshrl.u32 %s4, 1
    %s168 = sor.u32 %s4, %s167
    %s169 = sand.u32 %s168, 85
    %s170 = sshrl.u32 %s169, 1
    %s171 = sor.u32 %s169, %s170
    %s172 = sand.u32 51, %s171
    %s173 = sshrl.u32 %s172, 2
    %s174 = sor.u32 %s172, %s173
    %s175 = sand.u32 15, %s174
    %v176 = vld [vmem:[%s166] sm:%s175]
    %v177 = vunpack.c.l.bf16 %v176
    %v178 = vunpack.c.h.bf16 %v176
    %s179 = scalar_lea.vmem [#allocation1], 168
    %180 = vst [vmem:[%s179] sm:%s4] %v177
    %s181 = smul.addr 2, 20
    %s182 = scalar_lea.vmem %s0, %s181
    %s183 = sshrl.u32 %s4, 1
    %s184 = sor.u32 %s4, %s183
    %s185 = sand.u32 %s184, 85
    %s186 = sshrl.u32 %s185, 1
    %s187 = sor.u32 %s185, %s186
    %s188 = sand.u32 51, %s187
    %s189 = sshrl.u32 %s188, 2
    %s190 = sor.u32 %s188, %s189
    %s191 = sand.u32 15, %s190
    %v192 = vld [vmem:[%s182] sm:%s191]
    %v193 = vunpack.c.l.bf16 %v192
    %v194 = vunpack.c.h.bf16 %v192
    %s195 = scalar_lea.vmem [#allocation1], 160
    %196 = vst [vmem:[%s195] sm:%s4] %v193
    %s197 = smul.addr 2, 19
    %s198 = scalar_lea.vmem %s0, %s197
    %s199 = sshrl.u32 %s4, 1
    %s200 = sor.u32 %s4, %s199
    %s201 = sand.u32 %s200, 85
    %s202 = sshrl.u32 %s201, 1
    %s203 = sor.u32 %s201, %s202
    %s204 = sand.u32 51, %s203
    %s205 = sshrl.u32 %s204, 2
    %s206 = sor.u32 %s204, %s205
    %s207 = sand.u32 15, %s206
    %v208 = vld [vmem:[%s198] sm:%s207]
    %v209 = vunpack.c.l.bf16 %v208
    %v210 = vunpack.c.h.bf16 %v208
    %s211 = scalar_lea.vmem [#allocation1], 152
    %212 = vst [vmem:[%s211] sm:%s4] %v209
    %s213 = smul.addr 2, 18
    %s214 = scalar_lea.vmem %s0, %s213
    %s215 = sshrl.u32 %s4, 1
    %s216 = sor.u32 %s4, %s215
    %s217 = sand.u32 %s216, 85
    %s218 = sshrl.u32 %s217, 1
    %s219 = sor.u32 %s217, %s218
    %s220 = sand.u32 51, %s219
    %s221 = sshrl.u32 %s220, 2
    %s222 = sor.u32 %s220, %s221
    %s223 = sand.u32 15, %s222
    %v224 = vld [vmem:[%s214] sm:%s223]
    %v225 = vunpack.c.l.bf16 %v224
    %v226 = vunpack.c.h.bf16 %v224
    %s227 = scalar_lea.vmem [#allocation1], 144
    %228 = vst [vmem:[%s227] sm:%s4] %v225
    %s229 = smul.addr 2, 17
    %s230 = scalar_lea.vmem %s0, %s229
    %s231 = sshrl.u32 %s4, 1
    %s232 = sor.u32 %s4, %s231
    %s233 = sand.u32 %s232, 85
    %s234 = sshrl.u32 %s233, 1
    %s235 = sor.u32 %s233, %s234
    %s236 = sand.u32 51, %s235
    %s237 = sshrl.u32 %s236, 2
    %s238 = sor.u32 %s236, %s237
    %s239 = sand.u32 15, %s238
    %v240 = vld [vmem:[%s230] sm:%s239]
    %v241 = vunpack.c.l.bf16 %v240
    %v242 = vunpack.c.h.bf16 %v240
    %s243 = scalar_lea.vmem [#allocation1], 136
    %244 = vst [vmem:[%s243] sm:%s4] %v241
    %s245 = smul.addr 2, 16
    %s246 = scalar_lea.vmem %s0, %s245
    %s247 = sshrl.u32 %s4, 1
    %s248 = sor.u32 %s4, %s247
    %s249 = sand.u32 %s248, 85
    %s250 = sshrl.u32 %s249, 1
    %s251 = sor.u32 %s249, %s250
    %s252 = sand.u32 51, %s251
    %s253 = sshrl.u32 %s252, 2
    %s254 = sor.u32 %s252, %s253
    %s255 = sand.u32 15, %s254
    %v256 = vld [vmem:[%s246] sm:%s255]
    %v257 = vunpack.c.l.bf16 %v256
    %v258 = vunpack.c.h.bf16 %v256
    %s259 = scalar_lea.vmem [#allocation1], 128
    %260 = vst [vmem:[%s259] sm:%s4] %v257
    %s261 = smul.addr 2, 15
    %s262 = scalar_lea.vmem %s0, %s261
    %s263 = sshrl.u32 %s4, 1
    %s264 = sor.u32 %s4, %s263
    %s265 = sand.u32 %s264, 85
    %s266 = sshrl.u32 %s265, 1
    %s267 = sor.u32 %s265, %s266
    %s268 = sand.u32 51, %s267
    %s269 = sshrl.u32 %s268, 2
    %s270 = sor.u32 %s268, %s269
    %s271 = sand.u32 15, %s270
    %v272 = vld [vmem:[%s262] sm:%s271]
    %v273 = vunpack.c.l.bf16 %v272
    %v274 = vunpack.c.h.bf16 %v272
    %s275 = scalar_lea.vmem [#allocation1], 120
    %276 = vst [vmem:[%s275] sm:%s4] %v273
    %s277 = smul.addr 2, 14
    %s278 = scalar_lea.vmem %s0, %s277
    %s279 = sshrl.u32 %s4, 1
    %s280 = sor.u32 %s4, %s279
    %s281 = sand.u32 %s280, 85
    %s282 = sshrl.u32 %s281, 1
    %s283 = sor.u32 %s281, %s282
    %s284 = sand.u32 51, %s283
    %s285 = sshrl.u32 %s284, 2
    %s286 = sor.u32 %s284, %s285
    %s287 = sand.u32 15, %s286
    %v288 = vld [vmem:[%s278] sm:%s287]
    %v289 = vunpack.c.l.bf16 %v288
    %v290 = vunpack.c.h.bf16 %v288
    %s291 = scalar_lea.vmem [#allocation1], 112
    %292 = vst [vmem:[%s291] sm:%s4] %v289
    %s293 = smul.addr 2, 13
    %s294 = scalar_lea.vmem %s0, %s293
    %s295 = sshrl.u32 %s4, 1
    %s296 = sor.u32 %s4, %s295
    %s297 = sand.u32 %s296, 85
    %s298 = sshrl.u32 %s297, 1
    %s299 = sor.u32 %s297, %s298
    %s300 = sand.u32 51, %s299
    %s301 = sshrl.u32 %s300, 2
    %s302 = sor.u32 %s300, %s301
    %s303 = sand.u32 15, %s302
    %v304 = vld [vmem:[%s294] sm:%s303]
    %v305 = vunpack.c.l.bf16 %v304
    %v306 = vunpack.c.h.bf16 %v304
    %s307 = scalar_lea.vmem [#allocation1], 104
    %308 = vst [vmem:[%s307] sm:%s4] %v305
    %s309 = smul.addr 2, 12
    %s310 = scalar_lea.vmem %s0, %s309
    %s311 = sshrl.u32 %s4, 1
    %s312 = sor.u32 %s4, %s311
    %s313 = sand.u32 %s312, 85
    %s314 = sshrl.u32 %s313, 1
    %s315 = sor.u32 %s313, %s314
    %s316 = sand.u32 51, %s315
    %s317 = sshrl.u32 %s316, 2
    %s318 = sor.u32 %s316, %s317
    %s319 = sand.u32 15, %s318
    %v320 = vld [vmem:[%s310] sm:%s319]
    %v321 = vunpack.c.l.bf16 %v320
    %v322 = vunpack.c.h.bf16 %v320
    %s323 = scalar_lea.vmem [#allocation1], 96
    %324 = vst [vmem:[%s323] sm:%s4] %v321
    %s325 = smul.addr 2, 11
    %s326 = scalar_lea.vmem %s0, %s325
    %s327 = sshrl.u32 %s4, 1
    %s328 = sor.u32 %s4, %s327
    %s329 = sand.u32 %s328, 85
    %s330 = sshrl.u32 %s329, 1
    %s331 = sor.u32 %s329, %s330
    %s332 = sand.u32 51, %s331
    %s333 = sshrl.u32 %s332, 2
    %s334 = sor.u32 %s332, %s333
    %s335 = sand.u32 15, %s334
    %v336 = vld [vmem:[%s326] sm:%s335]
    %v337 = vunpack.c.l.bf16 %v336
    %v338 = vunpack.c.h.bf16 %v336
    %s339 = scalar_lea.vmem [#allocation1], 88
    %340 = vst [vmem:[%s339] sm:%s4] %v337
    %s341 = smul.addr 2, 10
    %s342 = scalar_lea.vmem %s0, %s341
    %s343 = sshrl.u32 %s4, 1
    %s344 = sor.u32 %s4, %s343
    %s345 = sand.u32 %s344, 85
    %s346 = sshrl.u32 %s345, 1
    %s347 = sor.u32 %s345, %s346
    %s348 = sand.u32 51, %s347
    %s349 = sshrl.u32 %s348, 2
    %s350 = sor.u32 %s348, %s349
    %s351 = sand.u32 15, %s350
    %v352 = vld [vmem:[%s342] sm:%s351]
    %v353 = vunpack.c.l.bf16 %v352
    %v354 = vunpack.c.h.bf16 %v352
    %s355 = scalar_lea.vmem [#allocation1], 80
    %356 = vst [vmem:[%s355] sm:%s4] %v353
    %s357 = smul.addr 2, 9
    %s358 = scalar_lea.vmem %s0, %s357
    %s359 = sshrl.u32 %s4, 1
    %s360 = sor.u32 %s4, %s359
    %s361 = sand.u32 %s360, 85
    %s362 = sshrl.u32 %s361, 1
    %s363 = sor.u32 %s361, %s362
    %s364 = sand.u32 51, %s363
    %s365 = sshrl.u32 %s364, 2
    %s366 = sor.u32 %s364, %s365
    %s367 = sand.u32 15, %s366
    %v368 = vld [vmem:[%s358] sm:%s367]
    %v369 = vunpack.c.l.bf16 %v368
    %v370 = vunpack.c.h.bf16 %v368
    %s371 = scalar_lea.vmem [#allocation1], 72
    %372 = vst [vmem:[%s371] sm:%s4] %v369
    %s373 = smul.addr 2, 8
    %s374 = scalar_lea.vmem %s0, %s373
    %s375 = sshrl.u32 %s4, 1
    %s376 = sor.u32 %s4, %s375
    %s377 = sand.u32 %s376, 85
    %s378 = sshrl.u32 %s377, 1
    %s379 = sor.u32 %s377, %s378
    %s380 = sand.u32 51, %s379
    %s381 = sshrl.u32 %s380, 2
    %s382 = sor.u32 %s380, %s381
    %s383 = sand.u32 15, %s382
    %v384 = vld [vmem:[%s374] sm:%s383]
    %v385 = vunpack.c.l.bf16 %v384
    %v386 = vunpack.c.h.bf16 %v384
    %s387 = scalar_lea.vmem [#allocation1], 64
    %388 = vst [vmem:[%s387] sm:%s4] %v385
    %s389 = smul.addr 2, 7
    %s390 = scalar_lea.vmem %s0, %s389
    %s391 = sshrl.u32 %s4, 1
    %s392 = sor.u32 %s4, %s391
    %s393 = sand.u32 %s392, 85
    %s394 = sshrl.u32 %s393, 1
    %s395 = sor.u32 %s393, %s394
    %s396 = sand.u32 51, %s395
    %s397 = sshrl.u32 %s396, 2
    %s398 = sor.u32 %s396, %s397
    %s399 = sand.u32 15, %s398
    %v400 = vld [vmem:[%s390] sm:%s399]
    %v401 = vunpack.c.l.bf16 %v400
    %v402 = vunpack.c.h.bf16 %v400
    %s403 = scalar_lea.vmem [#allocation1], 56
    %404 = vst [vmem:[%s403] sm:%s4] %v401
    %s405 = smul.addr 2, 6
    %s406 = scalar_lea.vmem %s0, %s405
    %s407 = sshrl.u32 %s4, 1
    %s408 = sor.u32 %s4, %s407
    %s409 = sand.u32 %s408, 85
    %s410 = sshrl.u32 %s409, 1
    %s411 = sor.u32 %s409, %s410
    %s412 = sand.u32 51, %s411
    %s413 = sshrl.u32 %s412, 2
    %s414 = sor.u32 %s412, %s413
    %s415 = sand.u32 15, %s414
    %v416 = vld [vmem:[%s406] sm:%s415]
    %v417 = vunpack.c.l.bf16 %v416
    %v418 = vunpack.c.h.bf16 %v416
    %s419 = scalar_lea.vmem [#allocation1], 48
    %420 = vst [vmem:[%s419] sm:%s4] %v417
    %s421 = smul.addr 2, 5
    %s422 = scalar_lea.vmem %s0, %s421
    %s423 = sshrl.u32 %s4, 1
    %s424 = sor.u32 %s4, %s423
    %s425 = sand.u32 %s424, 85
    %s426 = sshrl.u32 %s425, 1
    %s427 = sor.u32 %s425, %s426
    %s428 = sand.u32 51, %s427
    %s429 = sshrl.u32 %s428, 2
    %s430 = sor.u32 %s428, %s429
    %s431 = sand.u32 15, %s430
    %v432 = vld [vmem:[%s422] sm:%s431]
    %v433 = vunpack.c.l.bf16 %v432
    %v434 = vunpack.c.h.bf16 %v432
    %s435 = scalar_lea.vmem [#allocation1], 40
    %436 = vst [vmem:[%s435] sm:%s4] %v433
    %s437 = smul.addr 2, 4
    %s438 = scalar_lea.vmem %s0, %s437
    %s439 = sshrl.u32 %s4, 1
    %s440 = sor.u32 %s4, %s439
    %s441 = sand.u32 %s440, 85
    %s442 = sshrl.u32 %s441, 1
    %s443 = sor.u32 %s441, %s442
    %s444 = sand.u32 51, %s443
    %s445 = sshrl.u32 %s444, 2
    %s446 = sor.u32 %s444, %s445
    %s447 = sand.u32 15, %s446
    %v448 = vld [vmem:[%s438] sm:%s447]
    %v449 = vunpack.c.l.bf16 %v448
    %v450 = vunpack.c.h.bf16 %v448
    %s451 = scalar_lea.vmem [#allocation1], 32
    %452 = vst [vmem:[%s451] sm:%s4] %v449
    %s453 = smul.addr 2, 3
    %s454 = scalar_lea.vmem %s0, %s453
    %s455 = sshrl.u32 %s4, 1
    %s456 = sor.u32 %s4, %s455
    %s457 = sand.u32 %s456, 85
    %s458 = sshrl.u32 %s457, 1
    %s459 = sor.u32 %s457, %s458
    %s460 = sand.u32 51, %s459
    %s461 = sshrl.u32 %s460, 2
    %s462 = sor.u32 %s460, %s461
    %s463 = sand.u32 15, %s462
    %v464 = vld [vmem:[%s454] sm:%s463]
    %v465 = vunpack.c.l.bf16 %v464
    %v466 = vunpack.c.h.bf16 %v464
    %s467 = scalar_lea.vmem [#allocation1], 24
    %468 = vst [vmem:[%s467] sm:%s4] %v465
    %s469 = smul.addr 2, 2
    %s470 = scalar_lea.vmem %s0, %s469
    %s471 = sshrl.u32 %s4, 1
    %s472 = sor.u32 %s4, %s471
    %s473 = sand.u32 %s472, 85
    %s474 = sshrl.u32 %s473, 1
    %s475 = sor.u32 %s473, %s474
    %s476 = sand.u32 51, %s475
    %s477 = sshrl.u32 %s476, 2
    %s478 = sor.u32 %s476, %s477
    %s479 = sand.u32 15, %s478
    %v480 = vld [vmem:[%s470] sm:%s479]
    %v481 = vunpack.c.l.bf16 %v480
    %v482 = vunpack.c.h.bf16 %v480
    %s483 = scalar_lea.vmem [#allocation1], 16
    %484 = vst [vmem:[%s483] sm:%s4] %v481
    %s485 = scalar_lea.vmem %s0, 2
    %s486 = sshrl.u32 %s4, 1
    %s487 = sor.u32 %s4, %s486
    %s488 = sand.u32 %s487, 85
    %s489 = sshrl.u32 %s488, 1
    %s490 = sor.u32 %s488, %s489
    %s491 = sand.u32 51, %s490
    %s492 = sshrl.u32 %s491, 2
    %s493 = sor.u32 %s491, %s492
    %s494 = sand.u32 15, %s493
    %v495 = vld [vmem:[%s485] sm:%s494]
    %v496 = vunpack.c.l.bf16 %v495
    %v497 = vunpack.c.h.bf16 %v495
    %s498 = scalar_lea.vmem [#allocation1], 8
    %499 = vst [vmem:[%s498] sm:%s4] %v496
    %s500 = sshrl.u32 %s4, 1
    %s501 = sor.u32 %s4, %s500
    %s502 = sand.u32 %s501, 85
    %s503 = sshrl.u32 %s502, 1
    %s504 = sor.u32 %s502, %s503
    %s505 = sand.u32 51, %s504
    %s506 = sshrl.u32 %s505, 2
    %s507 = sor.u32 %s505, %s506
    %s508 = sand.u32 15, %s507
    %v509 = vld [vmem:[%s0] sm:%s508]
    %v510 = vunpack.c.l.bf16 %v509
    %v511 = vunpack.c.h.bf16 %v509
    %512 = vst [vmem:[#allocation1] sm:%s4] %v510
    %s513 = scalar_lea.vmem [#allocation1], 24
    %v514 = vld [vmem:[%s513] sm:$0xf]
    %vm515 = vcmask 949248
    %s516 = scalar_lea.vmem [#allocation0], 24
    %517 = vst.msk [vmem:[%s516] sm:$0xf] %vm515, %v514
    %s518 = scalar_lea.vmem [#allocation1], 56
    %v519 = vld [vmem:[%s518] sm:$0xf]
    %vm520 = vcmask 949248
    %s521 = scalar_lea.vmem [#allocation0], 28
    %522 = vst.msk [vmem:[%s521] sm:$0xf] %vm520, %v519
    %s523 = scalar_lea.vmem [#allocation1], 88
    %v524 = vld [vmem:[%s523] sm:$0xf]
    %vm525 = vcmask 949248
    %s526 = scalar_lea.vmem [#allocation0], 56
    %527 = vst.msk [vmem:[%s526] sm:$0xf] %vm525, %v524
    %s528 = scalar_lea.vmem [#allocation1], 120
    %v529 = vld [vmem:[%s528] sm:$0xf]
    %vm530 = vcmask 949248
    %s531 = scalar_lea.vmem [#allocation0], 60
    %532 = vst.msk [vmem:[%s531] sm:$0xf] %vm530, %v529
    %s533 = scalar_lea.vmem [#allocation1], 152
    %v534 = vld [vmem:[%s533] sm:$0xf]
    %vm535 = vcmask 949248
    %s536 = scalar_lea.vmem [#allocation0], 88
    %537 = vst.msk [vmem:[%s536] sm:$0xf] %vm535, %v534
    %s538 = scalar_lea.vmem [#allocation1], 184
    %v539 = vld [vmem:[%s538] sm:$0xf]
    %vm540 = vcmask 949248
    %s541 = scalar_lea.vmem [#allocation0], 92
    %542 = vst.msk [vmem:[%s541] sm:$0xf] %vm540, %v539
    %s543 = scalar_lea.vmem [#allocation1], 216
    %v544 = vld [vmem:[%s543] sm:$0xf]
    %vm545 = vcmask 949248
    %s546 = scalar_lea.vmem [#allocation0], 120
    %547 = vst.msk [vmem:[%s546] sm:$0xf] %vm545, %v544
    %s548 = scalar_lea.vmem [#allocation1], 248
    %v549 = vld [vmem:[%s548] sm:$0xf]
    %vm550 = vcmask 949248
    %s551 = scalar_lea.vmem [#allocation0], 124
    %552 = vst.msk [vmem:[%s551] sm:$0xf] %vm550, %v549
    %v553 = vld [vmem:[#allocation1] sm:$0xf]
    %554 = vst [vmem:[#allocation0] sm:$0xf] %v553
    %s555 = scalar_lea.vmem [#allocation1], 8
    %v556 = vld [vmem:[%s555] sm:$0xf]
    %s557 = scalar_lea.vmem [#allocation0], 8
    %558 = vst [vmem:[%s557] sm:$0xf] %v556
    %s559 = scalar_lea.vmem [#allocation1], 16
    %v560 = vld [vmem:[%s559] sm:$0xf]
    %s561 = scalar_lea.vmem [#allocation0], 16
    %562 = vst [vmem:[%s561] sm:$0xf] %v560
    %s563 = scalar_lea.vmem [#allocation1], 32
    %v564 = vld [vmem:[%s563] sm:$0xf]
    %s565 = scalar_lea.vmem [#allocation0], 4
    %566 = vst [vmem:[%s565] sm:$0xf] %v564
    %s567 = scalar_lea.vmem [#allocation1], 40
    %v568 = vld [vmem:[%s567] sm:$0xf]
    %s569 = scalar_lea.vmem [#allocation0], 12
    %570 = vst [vmem:[%s569] sm:$0xf] %v568
    %s571 = scalar_lea.vmem [#allocation1], 48
    %v572 = vld [vmem:[%s571] sm:$0xf]
    %s573 = scalar_lea.vmem [#allocation0], 20
    %574 = vst [vmem:[%s573] sm:$0xf] %v572
    %s575 = scalar_lea.vmem [#allocation1], 64
    %v576 = vld [vmem:[%s575] sm:$0xf]
    %s577 = scalar_lea.vmem [#allocation0], 32
    %578 = vst [vmem:[%s577] sm:$0xf] %v576
    %s579 = scalar_lea.vmem [#allocation1], 72
    %v580 = vld [vmem:[%s579] sm:$0xf]
    %s581 = scalar_lea.vmem [#allocation0], 40
    %582 = vst [vmem:[%s581] sm:$0xf] %v580
    %s583 = scalar_lea.vmem [#allocation1], 80
    %v584 = vld [vmem:[%s583] sm:$0xf]
    %s585 = scalar_lea.vmem [#allocation0], 48
    %586 = vst [vmem:[%s585] sm:$0xf] %v584
    %s587 = scalar_lea.vmem [#allocation1], 96
    %v588 = vld [vmem:[%s587] sm:$0xf]
    %s589 = scalar_lea.vmem [#allocation0], 36
    %590 = vst [vmem:[%s589] sm:$0xf] %v588
    %s591 = scalar_lea.vmem [#allocation1], 104
    %v592 = vld [vmem:[%s591] sm:$0xf]
    %s593 = scalar_lea.vmem [#allocation0], 44
    %594 = vst [vmem:[%s593] sm:$0xf] %v592
    %s595 = scalar_lea.vmem [#allocation1], 112
    %v596 = vld [vmem:[%s595] sm:$0xf]
    %s597 = scalar_lea.vmem [#allocation0], 52
    %598 = vst [vmem:[%s597] sm:$0xf] %v596
    %s599 = scalar_lea.vmem [#allocation1], 128
    %v600 = vld [vmem:[%s599] sm:$0xf]
    %s601 = scalar_lea.vmem [#allocation0], 64
    %602 = vst [vmem:[%s601] sm:$0xf] %v600
    %s603 = scalar_lea.vmem [#allocation1], 136
    %v604 = vld [vmem:[%s603] sm:$0xf]
    %s605 = scalar_lea.vmem [#allocation0], 72
    %606 = vst [vmem:[%s605] sm:$0xf] %v604
    %s607 = scalar_lea.vmem [#allocation1], 144
    %v608 = vld [vmem:[%s607] sm:$0xf]
    %s609 = scalar_lea.vmem [#allocation0], 80
    %610 = vst [vmem:[%s609] sm:$0xf] %v608
    %s611 = scalar_lea.vmem [#allocation1], 160
    %v612 = vld [vmem:[%s611] sm:$0xf]
    %s613 = scalar_lea.vmem [#allocation0], 68
    %614 = vst [vmem:[%s613] sm:$0xf] %v612
    %s615 = scalar_lea.vmem [#allocation1], 168
    %v616 = vld [vmem:[%s615] sm:$0xf]
    %s617 = scalar_lea.vmem [#allocation0], 76
    %618 = vst [vmem:[%s617] sm:$0xf] %v616
    %s619 = scalar_lea.vmem [#allocation1], 176
    %v620 = vld [vmem:[%s619] sm:$0xf]
    %s621 = scalar_lea.vmem [#allocation0], 84
    %622 = vst [vmem:[%s621] sm:$0xf] %v620
    %s623 = scalar_lea.vmem [#allocation1], 192
    %v624 = vld [vmem:[%s623] sm:$0xf]
    %s625 = scalar_lea.vmem [#allocation0], 96
    %626 = vst [vmem:[%s625] sm:$0xf] %v624
    %s627 = scalar_lea.vmem [#allocation1], 200
    %v628 = vld [vmem:[%s627] sm:$0xf]
    %s629 = scalar_lea.vmem [#allocation0], 104
    %630 = vst [vmem:[%s629] sm:$0xf] %v628
    %s631 = scalar_lea.vmem [#allocation1], 208
    %v632 = vld [vmem:[%s631] sm:$0xf]
    %s633 = scalar_lea.vmem [#allocation0], 112
    %634 = vst [vmem:[%s633] sm:$0xf] %v632
    %s635 = scalar_lea.vmem [#allocation1], 224
    %v636 = vld [vmem:[%s635] sm:$0xf]
    %s637 = scalar_lea.vmem [#allocation0], 100
    %638 = vst [vmem:[%s637] sm:$0xf] %v636
    %s639 = scalar_lea.vmem [#allocation1], 232
    %v640 = vld [vmem:[%s639] sm:$0xf]
    %s641 = scalar_lea.vmem [#allocation0], 108
    %642 = vst [vmem:[%s641] sm:$0xf] %v640
    %s643 = scalar_lea.vmem [#allocation1], 240
    %v644 = vld [vmem:[%s643] sm:$0xf]
    %s645 = scalar_lea.vmem [#allocation0], 116
    %646 = vst [vmem:[%s645] sm:$0xf] %v644
    %s648 = smul.u32 4, 2
    %s649 = sshllo.u32 0, %s648
    %s650 = sshrl.u32 %s648, 1
    %v651 = vld [vmem:[#allocation0] sm:%s649]
    %v652 = vpack.c.bf16 0.0, %v651
    %s653 = sshllo.u32 0, %s650
    %654 = vst [vmem:[%s1] sm:%s653] %v652
    %s655 = scalar_lea.vmem [#allocation0], 8
    %v656 = vld [vmem:[%s655] sm:%s649]
    %v657 = vpack.c.bf16 0.0, %v656
    %s658 = sshllo.u32 0, %s650
    %s659 = scalar_lea.vmem %s1, 4
    %660 = vst [vmem:[%s659] sm:%s658] %v657
    %s661 = scalar_lea.vmem [#allocation0], 16
    %v662 = vld [vmem:[%s661] sm:%s649]
    %v663 = vpack.c.bf16 0.0, %v662
    %s664 = sshllo.u32 0, %s650
    %s665 = smul.addr 4, 2
    %s666 = scalar_lea.vmem %s1, %s665
    %667 = vst [vmem:[%s666] sm:%s664] %v663
    %s668 = scalar_lea.vmem [#allocation0], 24
    %v669 = vld [vmem:[%s668] sm:%s649]
    %v670 = vpack.c.bf16 0.0, %v669
    %s671 = sshllo.u32 0, %s650
    %s672 = smul.addr 4, 3
    %s673 = scalar_lea.vmem %s1, %s672
    %674 = vst [vmem:[%s673] sm:%s671] %v670
    %s675 = scalar_lea.vmem [#allocation0], 32
    %v676 = vld [vmem:[%s675] sm:%s649]
    %v677 = vpack.c.bf16 0.0, %v676
    %s678 = sshllo.u32 0, %s650
    %s679 = smul.addr 4, 4
    %s680 = scalar_lea.vmem %s1, %s679
    %681 = vst [vmem:[%s680] sm:%s678] %v677
    %s682 = scalar_lea.vmem [#allocation0], 40
    %v683 = vld [vmem:[%s682] sm:%s649]
    %v684 = vpack.c.bf16 0.0, %v683
    %s685 = sshllo.u32 0, %s650
    %s686 = smul.addr 4, 5
    %s687 = scalar_lea.vmem %s1, %s686
    %688 = vst [vmem:[%s687] sm:%s685] %v684
    %s689 = scalar_lea.vmem [#allocation0], 48
    %v690 = vld [vmem:[%s689] sm:%s649]
    %v691 = vpack.c.bf16 0.0, %v690
    %s692 = sshllo.u32 0, %s650
    %s693 = smul.addr 4, 6
    %s694 = scalar_lea.vmem %s1, %s693
    %695 = vst [vmem:[%s694] sm:%s692] %v691
    %s696 = scalar_lea.vmem [#allocation0], 56
    %v697 = vld [vmem:[%s696] sm:%s649]
    %v698 = vpack.c.bf16 0.0, %v697
    %s699 = sshllo.u32 0, %s650
    %s700 = smul.addr 4, 7
    %s701 = scalar_lea.vmem %s1, %s700
    %702 = vst [vmem:[%s701] sm:%s699] %v698
    %s703 = scalar_lea.vmem [#allocation0], 64
    %v704 = vld [vmem:[%s703] sm:%s649]
    %v705 = vpack.c.bf16 0.0, %v704
    %s706 = sshllo.u32 0, %s650
    %s707 = smul.addr 4, 8
    %s708 = scalar_lea.vmem %s1, %s707
    %709 = vst [vmem:[%s708] sm:%s706] %v705
    %s710 = scalar_lea.vmem [#allocation0], 72
    %v711 = vld [vmem:[%s710] sm:%s649]
    %v712 = vpack.c.bf16 0.0, %v711
    %s713 = sshllo.u32 0, %s650
    %s714 = smul.addr 4, 9
    %s715 = scalar_lea.vmem %s1, %s714
    %716 = vst [vmem:[%s715] sm:%s713] %v712
    %s717 = scalar_lea.vmem [#allocation0], 80
    %v718 = vld [vmem:[%s717] sm:%s649]
    %v719 = vpack.c.bf16 0.0, %v718
    %s720 = sshllo.u32 0, %s650
    %s721 = smul.addr 4, 10
    %s722 = scalar_lea.vmem %s1, %s721
    %723 = vst [vmem:[%s722] sm:%s720] %v719
    %s724 = scalar_lea.vmem [#allocation0], 88
    %v725 = vld [vmem:[%s724] sm:%s649]
    %v726 = vpack.c.bf16 0.0, %v725
    %s727 = sshllo.u32 0, %s650
    %s728 = smul.addr 4, 11
    %s729 = scalar_lea.vmem %s1, %s728
    %730 = vst [vmem:[%s729] sm:%s727] %v726
    %s731 = scalar_lea.vmem [#allocation0], 96
    %v732 = vld [vmem:[%s731] sm:%s649]
    %v733 = vpack.c.bf16 0.0, %v732
    %s734 = sshllo.u32 0, %s650
    %s735 = smul.addr 4, 12
    %s736 = scalar_lea.vmem %s1, %s735
    %737 = vst [vmem:[%s736] sm:%s734] %v733
    %s738 = scalar_lea.vmem [#allocation0], 104
    %v739 = vld [vmem:[%s738] sm:%s649]
    %v740 = vpack.c.bf16 0.0, %v739
    %s741 = sshllo.u32 0, %s650
    %s742 = smul.addr 4, 13
    %s743 = scalar_lea.vmem %s1, %s742
    %744 = vst [vmem:[%s743] sm:%s741] %v740
    %s745 = scalar_lea.vmem [#allocation0], 112
    %v746 = vld [vmem:[%s745] sm:%s649]
    %v747 = vpack.c.bf16 0.0, %v746
    %s748 = sshllo.u32 0, %s650
    %s749 = smul.addr 4, 14
    %s750 = scalar_lea.vmem %s1, %s749
    %751 = vst [vmem:[%s750] sm:%s748] %v747
    %s752 = scalar_lea.vmem [#allocation0], 120
    %v753 = vld [vmem:[%s752] sm:%s649]
    %v754 = vpack.c.bf16 0.0, %v753
    %s755 = sshllo.u32 0, %s650
    %s756 = smul.addr 4, 15
    %s757 = scalar_lea.vmem %s1, %s756
    %758 = vst [vmem:[%s757] sm:%s755] %v754

// kernel: net_forward.4
$region0: #{net_forward.4}
  #allocation0 [shape = 'u32[]', space=smem, size = 0x4, offset = 0x4, fixed_abs, tag = 'smem constant byte address 0x4 - core index']
  #allocation1 [shape = 'u32[144,128]{1,0:T(1,128)}', space=vmem, size = 0x12000, scoped, tag = 'internal scratch']
  %s0 = inlined_call_operand.vmem [shape: bf16[32,512], index: 0, kind: input, shape index: {}]
  %s1 = inlined_call_operand.vmem [shape: bf16[32,512], index: 1, kind: input, shape index: {}]
  %s2 = inlined_call_operand.vmem [shape: bf16[32,512], index: 2, kind: input, shape index: {}]
  %s3 = inlined_call_operand.vmem [shape: bf16[32,512], index: 3, kind: input, shape index: {}]
  %s4 = inlined_call_operand.vmem [shape: bf16[512,128], index: 4, kind: input, shape index: {}]
  %s5 = inlined_call_operand.vmem [shape: f32[1,128], index: 5, kind: input, shape index: {}]
  %s6 = inlined_call_operand.vmem [shape: f32[32,128], index: 6, kind: output, shape index: {}]
  %s7 = sld [smem:[#allocation0]]
  $region34: #{net_forward.4} parent=0
    _
  %s9 = ssub.s32 1, %s7
  %s10 = scalar_select 0, %s9, %s7
  // Predicated region
  $region2: #{net_forward.4} parent=0 // pred_check
    _
  $region3: #{net_forward.4} parent=0 // pred_check_branch
    %12 = sbr.rel (0) target = $region5
  $region4: #{net_forward.4} parent=0 // pred_region
    _
  $region5: #{net_forward.4} parent=0 // pred_fallthru
    _
  // Predicated region
  $region6: #{net_forward.4} parent=0 // pred_check
    _
  $region7: #{net_forward.4} parent=0 // pred_check_branch
    %14 = sbr.rel (0) target = $region9
  $region8: #{net_forward.4} parent=0 // pred_region
    _
  $region9: #{net_forward.4} parent=0 // pred_fallthru
    _
  // Predicated region
  $region10: #{net_forward.4} parent=0 // pred_check
    _
  $region11: #{net_forward.4} parent=0 // pred_check_branch
    %16 = sbr.rel (0) target = $region13
  $region12: #{net_forward.4} parent=0 // pred_region
    _
  $region13: #{net_forward.4} parent=0 // pred_fallthru
    _
  // Predicated region
  $region14: #{net_forward.4} parent=0 // pred_check
    _
  $region15: #{net_forward.4} parent=0 // pred_check_branch
    %18 = sbr.rel (0) target = $region17
  $region16: #{net_forward.4} parent=0 // pred_region
    _
  $region17: #{net_forward.4} parent=0 // pred_fallthru
    _
  // Predicated region
  $region18: #{net_forward.4} parent=0 // pred_check
    _
  $region19: #{net_forward.4} parent=0 // pred_check_branch
    %20 = sbr.rel (0) target = $region21
  $region20: #{net_forward.4} parent=0 // pred_region
    _
  $region21: #{net_forward.4} parent=0 // pred_fallthru
    _
  // Predicated region
  $region22: #{net_forward.4} parent=0 // pred_check
    _
  $region23: #{net_forward.4} parent=0 // pred_check_branch
    %22 = sbr.rel (0) target = $region25
  $region24: #{net_forward.4} parent=0 // pred_region
    _
  $region25: #{net_forward.4} parent=0 // pred_fallthru
    _
  %v24 = vld [vmem:[%s4] sm:$0xf]
  %v25 = vld [vmem:[%s4 + $0x4] sm:$0xf]
  %v26 = vld [vmem:[%s4 + $0x8] sm:$0xf]
  %v27 = vld [vmem:[%s4 + $0xc] sm:$0xf]
  %v28 = vld [vmem:[%s4 + $0x10] sm:$0xf]
  %v29 = vld [vmem:[%s4 + $0x14] sm:$0xf]
  %v30 = vld [vmem:[%s4 + $0x18] sm:$0xf]
  %v31 = vld [vmem:[%s4 + $0x1c] sm:$0xf]
  %v32 = vld [vmem:[%s4 + $0x20] sm:$0xf]
  %v33 = vld [vmem:[%s4 + $0x24] sm:$0xf]
  %v34 = vld [vmem:[%s4 + $0x28] sm:$0xf]
  %v35 = vld [vmem:[%s4 + $0x2c] sm:$0xf]
  %v36 = vld [vmem:[%s4 + $0x30] sm:$0xf]
  %v37 = vld [vmem:[%s4 + $0x34] sm:$0xf]
  %v38 = vld [vmem:[%s4 + $0x38] sm:$0xf]
  %v39 = vld [vmem:[%s4 + $0x3c] sm:$0xf]
  %v40 = vld [vmem:[%s4 + $0x40] sm:$0xf]
  %v41 = vld [vmem:[%s4 + $0x44] sm:$0xf]
  %v42 = vld [vmem:[%s4 + $0x48] sm:$0xf]
  %v43 = vld [vmem:[%s4 + $0x4c] sm:$0xf]
  %v44 = vld [vmem:[%s4 + $0x50] sm:$0xf]
  %v45 = vld [vmem:[%s4 + $0x54] sm:$0xf]
  %v46 = vld [vmem:[%s4 + $0x58] sm:$0xf]
  %v47 = vld [vmem:[%s4 + $0x5c] sm:$0xf]
  %v48 = vld [vmem:[%s4 + $0x60] sm:$0xf]
  %v49 = vld [vmem:[%s4 + $0x64] sm:$0xf]
  %v50 = vld [vmem:[%s4 + $0x68] sm:$0xf]
  %v51 = vld [vmem:[%s4 + $0x6c] sm:$0xf]
  %v52 = vld [vmem:[%s4 + $0x70] sm:$0xf]
  %v53 = vld [vmem:[%s4 + $0x74] sm:$0xf]
  %v54 = vld [vmem:[%s4 + $0x78] sm:$0xf]
  %v55 = vld [vmem:[%s4 + $0x7c] sm:$0xf]
  %v56 = vld [vmem:[%s4 + $0x80] sm:$0xf]
  %v57 = vld [vmem:[%s4 + $0x84] sm:$0xf]
  %v58 = vld [vmem:[%s4 + $0x88] sm:$0xf]
  %v59 = vld [vmem:[%s4 + $0x8c] sm:$0xf]
  %v60 = vld [vmem:[%s4 + $0x90] sm:$0xf]
  %v61 = vld [vmem:[%s4 + $0x94] sm:$0xf]
  %v62 = vld [vmem:[%s4 + $0x98] sm:$0xf]
  %v63 = vld [vmem:[%s4 + $0x9c] sm:$0xf]
  %v64 = vld [vmem:[%s4 + $0xa0] sm:$0xf]
  %v65 = vld [vmem:[%s4 + $0xa4] sm:$0xf]
  %v66 = vld [vmem:[%s4 + $0xa8] sm:$0xf]
  %v67 = vld [vmem:[%s4 + $0xac] sm:$0xf]
  %v68 = vld [vmem:[%s4 + $0xb0] sm:$0xf]
  %v69 = vld [vmem:[%s4 + $0xb4] sm:$0xf]
  %v70 = vld [vmem:[%s4 + $0xb8] sm:$0xf]
  %v71 = vld [vmem:[%s4 + $0xbc] sm:$0xf]
  %v72 = vld [vmem:[%s4 + $0xc0] sm:$0xf]
  %v73 = vld [vmem:[%s4 + $0xc4] sm:$0xf]
  %v74 = vld [vmem:[%s4 + $0xc8] sm:$0xf]
  %v75 = vld [vmem:[%s4 + $0xcc] sm:$0xf]
  %v76 = vld [vmem:[%s4 + $0xd0] sm:$0xf]
  %v77 = vld [vmem:[%s4 + $0xd4] sm:$0xf]
  %v78 = vld [vmem:[%s4 + $0xd8] sm:$0xf]
  %v79 = vld [vmem:[%s4 + $0xdc] sm:$0xf]
  %v80 = vld [vmem:[%s4 + $0xe0] sm:$0xf]
  %v81 = vld [vmem:[%s4 + $0xe4] sm:$0xf]
  %v82 = vld [vmem:[%s4 + $0xe8] sm:$0xf]
  %v83 = vld [vmem:[%s4 + $0xec] sm:$0xf]
  %v84 = vld [vmem:[%s4 + $0xf0] sm:$0xf]
  %v85 = vld [vmem:[%s4 + $0xf4] sm:$0xf]
  %v86 = vld [vmem:[%s4 + $0xf8] sm:$0xf]
  %v87 = vld [vmem:[%s4 + $0xfc] sm:$0xf]
  %v88 = vld [vmem:[%s5] sm:$0x1]
  %v89 = vld [vmem:[%s0] sm:$0xff]
  %v90 = vld [vmem:[%s0 + $0x8] sm:$0xff]
  %v91 = vld [vmem:[%s0 + $0x10] sm:$0xff]
  %v92 = vld [vmem:[%s0 + $0x18] sm:$0xff]
  %v93 = vld [vmem:[%s0 + $0x20] sm:$0xff]
  %v94 = vld [vmem:[%s0 + $0x28] sm:$0xff]
  %v95 = vld [vmem:[%s0 + $0x30] sm:$0xff]
  %v96 = vld [vmem:[%s0 + $0x38] sm:$0xff]
  %v98 = vlaneseq
  %v99 = vshrl.u32 %v98, 7
  %v100 = vsub.s32 0, %v99
  %v101 = vrot.slane %v88, %v100
  %v111 = vunpack.c.l.b16 %v89
  %v112 = vunpack.c.h.b16 %v89
  %v113 = vunpack.c.l.b16 %v90
  %v114 = vunpack.c.h.b16 %v90
  %v115 = vunpack.c.l.b16 %v91
  %v116 = vunpack.c.h.b16 %v91
  %v117 = vunpack.c.l.b16 %v92
  %v118 = vunpack.c.h.b16 %v92
  %v119 = vunpack.c.l.b16 %v93
  %v120 = vunpack.c.h.b16 %v93
  %v121 = vunpack.c.l.b16 %v94
  %v122 = vunpack.c.h.b16 %v94
  %v123 = vunpack.c.l.b16 %v95
  %v124 = vunpack.c.h.b16 %v95
  %v125 = vunpack.c.l.b16 %v96
  %v126 = vunpack.c.h.b16 %v96
  %v127 = vpack.c.b16 %v115, %v111
  %v128 = vpack.c.b16 %v116, %v112
  %v129 = vpack.c.b16 %v117, %v113
  %v130 = vpack.c.b16 %v118, %v114
  %v131 = vpack.c.b16 %v123, %v119
  %v132 = vpack.c.b16 %v124, %v120
  %v133 = vpack.c.b16 %v125, %v121
  %v134 = vpack.c.b16 %v126, %v122
  %v207 = vunpack.c.l.b16 %v24
  %v208 = vunpack.c.l.b16 %v25
  %v209 = vunpack.c.l.b16 %v26
  %v210 = vunpack.c.l.b16 %v27
  %v211 = vunpack.c.l.b16 %v28
  %v212 = vunpack.c.l.b16 %v29
  %v213 = vunpack.c.l.b16 %v30
  %v214 = vunpack.c.l.b16 %v31
  %v215 = vunpack.c.l.b16 %v32
  %v216 = vunpack.c.l.b16 %v33
  %v217 = vunpack.c.l.b16 %v34
  %v218 = vunpack.c.l.b16 %v35
  %v219 = vunpack.c.l.b16 %v36
  %v220 = vunpack.c.l.b16 %v37
  %v221 = vunpack.c.l.b16 %v38
  %v222 = vunpack.c.l.b16 %v39
  %v223 = vunpack.c.l.b16 %v40
  %v224 = vunpack.c.l.b16 %v41
  %v225 = vunpack.c.l.b16 %v42
  %v226 = vunpack.c.l.b16 %v43
  %v227 = vunpack.c.l.b16 %v44
  %v228 = vunpack.c.l.b16 %v45
  %v229 = vunpack.c.l.b16 %v46
  %v230 = vunpack.c.l.b16 %v47
  %v231 = vunpack.c.l.b16 %v48
  %v232 = vunpack.c.l.b16 %v49
  %v233 = vunpack.c.l.b16 %v50
  %v234 = vunpack.c.l.b16 %v51
  %v235 = vunpack.c.l.b16 %v52
  %v236 = vunpack.c.l.b16 %v53
  %v237 = vunpack.c.l.b16 %v54
  %v238 = vunpack.c.l.b16 %v55
  %v239 = vunpack.c.l.b16 %v56
  %v240 = vunpack.c.l.b16 %v57
  %v241 = vunpack.c.l.b16 %v58
  %v242 = vunpack.c.l.b16 %v59
  %v243 = vunpack.c.l.b16 %v60
  %v244 = vunpack.c.l.b16 %v61
  %v245 = vunpack.c.l.b16 %v62
  %v246 = vunpack.c.l.b16 %v63
  %v247 = vunpack.c.l.b16 %v64
  %v248 = vunpack.c.l.b16 %v65
  %v249 = vunpack.c.l.b16 %v66
  %v250 = vunpack.c.l.b16 %v67
  %v251 = vunpack.c.l.b16 %v68
  %v252 = vunpack.c.l.b16 %v69
  %v253 = vunpack.c.l.b16 %v70
  %v254 = vunpack.c.l.b16 %v71
  %v255 = vunpack.c.l.b16 %v72
  %v256 = vunpack.c.l.b16 %v73
  %v257 = vunpack.c.l.b16 %v74
  %v258 = vunpack.c.l.b16 %v75
  %v259 = vunpack.c.l.b16 %v76
  %v260 = vunpack.c.l.b16 %v77
  %v261 = vunpack.c.l.b16 %v78
  %v262 = vunpack.c.l.b16 %v79
  %v263 = vunpack.c.l.b16 %v80
  %v264 = vunpack.c.l.b16 %v81
  %v265 = vunpack.c.l.b16 %v82
  %v266 = vunpack.c.l.b16 %v83
  %v267 = vunpack.c.l.b16 %v84
  %v268 = vunpack.c.l.b16 %v85
  %v269 = vunpack.c.l.b16 %v86
  %v270 = vunpack.c.l.b16 %v87
  %v271 = vpack.c.b16 %v208, %v207
  %v272 = vpack.c.b16 %v210, %v209
  %v273 = vpack.c.b16 %v212, %v211
  %v274 = vpack.c.b16 %v214, %v213
  %v275 = vpack.c.b16 %v216, %v215
  %v276 = vpack.c.b16 %v218, %v217
  %v277 = vpack.c.b16 %v220, %v219
  %v278 = vpack.c.b16 %v222, %v221
  %v279 = vpack.c.b16 %v224, %v223
  %v280 = vpack.c.b16 %v226, %v225
  %v281 = vpack.c.b16 %v228, %v227
  %v282 = vpack.c.b16 %v230, %v229
  %v283 = vpack.c.b16 %v232, %v231
  %v284 = vpack.c.b16 %v234, %v233
  %v285 = vpack.c.b16 %v236, %v235
  %v286 = vpack.c.b16 %v238, %v237
  %v287 = vpack.c.b16 %v240, %v239
  %v288 = vpack.c.b16 %v242, %v241
  %v289 = vpack.c.b16 %v244, %v243
  %v290 = vpack.c.b16 %v246, %v245
  %v291 = vpack.c.b16 %v248, %v247
  %v292 = vpack.c.b16 %v250, %v249
  %v293 = vpack.c.b16 %v252, %v251
  %v294 = vpack.c.b16 %v254, %v253
  %v295 = vpack.c.b16 %v256, %v255
  %v296 = vpack.c.b16 %v258, %v257
  %v297 = vpack.c.b16 %v260, %v259
  %v298 = vpack.c.b16 %v262, %v261
  %v299 = vpack.c.b16 %v264, %v263
  %v300 = vpack.c.b16 %v266, %v265
  %v301 = vpack.c.b16 %v268, %v267
  %v302 = vpack.c.b16 %v270, %v269
  %335 = vmatprep.subr.bf16.mxu0 0
  %336 = vmatpush1.bf16.msra.mxu0 %v271
  %337 = vmatprep.subr.bf16.mxu0 0
  %338 = vmatpush1.bf16.msra.mxu0 %v272
  %339 = vmatprep.subr.bf16.mxu0 0
  %340 = vmatpush1.bf16.msra.mxu0 %v273
  %341 = vmatprep.subr.bf16.mxu0 0
  %342 = vmatpush1.bf16.msra.mxu0 %v274
  %343 = vmatprep.subr.bf16.mxu0 0
  %344 = vmatpush1.bf16.msra.mxu0 %v275
  %345 = vmatprep.subr.bf16.mxu0 0
  %346 = vmatpush1.bf16.msra.mxu0 %v276
  %347 = vmatprep.subr.bf16.mxu0 0
  %348 = vmatpush1.bf16.msra.mxu0 %v277
  %349 = vmatprep.subr.bf16.mxu0 0
  %350 = vmatpush1.bf16.msra.mxu0 %v278
  %351 = vmatprep.subr.bf16.mxu0 0
  %352 = vmatpush1.bf16.msra.mxu0 %v279
  %353 = vmatprep.subr.bf16.mxu0 0
  %354 = vmatpush1.bf16.msra.mxu0 %v280
  %355 = vmatprep.subr.bf16.mxu0 0
  %356 = vmatpush1.bf16.msra.mxu0 %v281
  %357 = vmatprep.subr.bf16.mxu0 0
  %358 = vmatpush1.bf16.msra.mxu0 %v282
  %359 = vmatprep.subr.bf16.mxu0 0
  %360 = vmatpush1.bf16.msra.mxu0 %v283
  %361 = vmatprep.subr.bf16.mxu0 0
  %362 = vmatpush1.bf16.msra.mxu0 %v284
  %363 = vmatprep.subr.bf16.mxu0 0
  %364 = vmatpush1.bf16.msra.mxu0 %v285
  %365 = vmatprep.subr.bf16.mxu0 0
  %366 = vmatpush1.bf16.msra.mxu0 %v286
  %367 = vmatprep.mubr.bf16.mxu0 %v128
  %368 = vmatmul.mubr.bf16.gmra.mrb[0].mxu0 %v127
  %v369 = vpop.f32.mrb[0].mxu0
  %v370 = vadd.f32 %v101, %v369
  %v371 = vpop.f32.mrb[0].mxu0
  %v372 = vpop.f32.mrb[0].mxu0
  %v373 = vadd.f32 %v101, %v372
  %v374 = vpop.f32.mrb[0].mxu0
  %375 = vmatprep.mubr.bf16.mxu0 %v132
  %376 = vmatmul.mubr.bf16.gmra.mrb[0].mxu0 %v131
  %v377 = vpop.f32.mrb[0].mxu0
  %v378 = vadd.f32 %v101, %v377
  %v379 = vpop.f32.mrb[0].mxu0
  %v380 = vpop.f32.mrb[0].mxu0
  %v381 = vadd.f32 %v101, %v380
  %v382 = vpop.f32.mrb[0].mxu0
  %383 = vdwg.mxu0
  %384 = vmatprep.subr.bf16.mxu0 0
  %385 = vmatpush1.bf16.msra.mxu0 %v287
  %386 = vmatprep.subr.bf16.mxu0 0
  %387 = vmatpush1.bf16.msra.mxu0 %v288
  %388 = vmatprep.subr.bf16.mxu0 0
  %389 = vmatpush1.bf16.msra.mxu0 %v289
  %390 = vmatprep.subr.bf16.mxu0 0
  %391 = vmatpush1.bf16.msra.mxu0 %v290
  %392 = vmatprep.subr.bf16.mxu0 0
  %393 = vmatpush1.bf16.msra.mxu0 %v291
  %394 = vmatprep.subr.bf16.mxu0 0
  %395 = vmatpush1.bf16.msra.mxu0 %v292
  %396 = vmatprep.subr.bf16.mxu0 0
  %397 = vmatpush1.bf16.msra.mxu0 %v293
  %398 = vmatprep.subr.bf16.mxu0 0
  %399 = vmatpush1.bf16.msra.mxu0 %v294
  %400 = vmatprep.subr.bf16.mxu0 0
  %401 = vmatpush1.bf16.msra.mxu0 %v295
  %402 = vmatprep.subr.bf16.mxu0 0
  %403 = vmatpush1.bf16.msra.mxu0 %v296
  %404 = vmatprep.subr.bf16.mxu0 0
  %405 = vmatpush1.bf16.msra.mxu0 %v297
  %406 = vmatprep.subr.bf16.mxu0 0
  %407 = vmatpush1.bf16.msra.mxu0 %v298
  %408 = vmatprep.subr.bf16.mxu0 0
  %409 = vmatpush1.bf16.msra.mxu0 %v299
  %410 = vmatprep.subr.bf16.mxu0 0
  %411 = vmatpush1.bf16.msra.mxu0 %v300
  %412 = vmatprep.subr.bf16.mxu0 0
  %413 = vmatpush1.bf16.msra.mxu0 %v301
  %414 = vmatprep.subr.bf16.mxu0 0
  %415 = vmatpush1.bf16.msra.mxu0 %v302
  %416 = vmatprep.mubr.bf16.mxu0 %v130
  %417 = vmatmul.mubr.bf16.gmra.mrb[0].mxu0 %v129
  %v418 = vpop.f32.mrb[0].mxu0
  %v419 = vadd.f32 %v370, %v418
  %v420 = vpop.f32.mrb[0].mxu0
  %v421 = vpop.f32.mrb[0].mxu0
  %v422 = vadd.f32 %v373, %v421
  %v423 = vpop.f32.mrb[0].mxu0
  %424 = vmatprep.mubr.bf16.mxu0 %v134
  %425 = vmatmul.mubr.bf16.gmra.mrb[0].mxu0 %v133
  %v426 = vpop.f32.mrb[0].mxu0
  %v427 = vadd.f32 %v378, %v426
  %v428 = vpop.f32.mrb[0].mxu0
  %v429 = vpop.f32.mrb[0].mxu0
  %v430 = vadd.f32 %v381, %v429
  %v431 = vpop.f32.mrb[0].mxu0
  %432 = vdwg.mxu0
  %v433 = vmax.f32 %v419, 0.0
  %v434 = vmax.f32 %v422, 0.0
  %v435 = vmax.f32 %v427, 0.0
  %v436 = vmax.f32 %v430, 0.0
  %v437 = vld [vmem:[%s1] sm:$0xff]
  %v438 = vld [vmem:[%s1 + $0x8] sm:$0xff]
  %v439 = vld [vmem:[%s1 + $0x10] sm:$0xff]
  %v440 = vld [vmem:[%s1 + $0x18] sm:$0xff]
  %v441 = vld [vmem:[%s1 + $0x20] sm:$0xff]
  %v442 = vld [vmem:[%s1 + $0x28] sm:$0xff]
  %v443 = vld [vmem:[%s1 + $0x30] sm:$0xff]
  %v444 = vld [vmem:[%s1 + $0x38] sm:$0xff]
  %v453 = vunpack.c.l.b16 %v437
  %v454 = vunpack.c.h.b16 %v437
  %v455 = vunpack.c.l.b16 %v438
  %v456 = vunpack.c.h.b16 %v438
  %v457 = vunpack.c.l.b16 %v439
  %v458 = vunpack.c.h.b16 %v439
  %v459 = vunpack.c.l.b16 %v440
  %v460 = vunpack.c.h.b16 %v440
  %v461 = vunpack.c.l.b16 %v441
  %v462 = vunpack.c.h.b16 %v441
  %v463 = vunpack.c.l.b16 %v442
  %v464 = vunpack.c.h.b16 %v442
  %v465 = vunpack.c.l.b16 %v443
  %v466 = vunpack.c.h.b16 %v443
  %v467 = vunpack.c.l.b16 %v444
  %v468 = vunpack.c.h.b16 %v444
  %v469 = vpack.c.b16 %v457, %v453
  %v470 = vpack.c.b16 %v458, %v454
  %v471 = vpack.c.b16 %v459, %v455
  %v472 = vpack.c.b16 %v460, %v456
  %v473 = vpack.c.b16 %v465, %v461
  %v474 = vpack.c.b16 %v466, %v462
  %v475 = vpack.c.b16 %v467, %v463
  %v476 = vpack.c.b16 %v468, %v464
  %485 = vmatprep.subr.bf16.mxu0 0
  %486 = vmatpush1.bf16.msra.mxu0 %v271
  %487 = vmatprep.subr.bf16.mxu0 0
  %488 = vmatpush1.bf16.msra.mxu0 %v272
  %489 = vmatprep.subr.bf16.mxu0 0
  %490 = vmatpush1.bf16.msra.mxu0 %v273
  %491 = vmatprep.subr.bf16.mxu0 0
  %492 = vmatpush1.bf16.msra.mxu0 %v274
  %493 = vmatprep.subr.bf16.mxu0 0
  %494 = vmatpush1.bf16.msra.mxu0 %v275
  %495 = vmatprep.subr.bf16.mxu0 0
  %496 = vmatpush1.bf16.msra.mxu0 %v276
  %497 = vmatprep.subr.bf16.mxu0 0
  %498 = vmatpush1.bf16.msra.mxu0 %v277
  %499 = vmatprep.subr.bf16.mxu0 0
  %500 = vmatpush1.bf16.msra.mxu0 %v278
  %501 = vmatprep.subr.bf16.mxu0 0
  %502 = vmatpush1.bf16.msra.mxu0 %v279
  %503 = vmatprep.subr.bf16.mxu0 0
  %504 = vmatpush1.bf16.msra.mxu0 %v280
  %505 = vmatprep.subr.bf16.mxu0 0
  %506 = vmatpush1.bf16.msra.mxu0 %v281
  %507 = vmatprep.subr.bf16.mxu0 0
  %508 = vmatpush1.bf16.msra.mxu0 %v282
  %509 = vmatprep.subr.bf16.mxu0 0
  %510 = vmatpush1.bf16.msra.mxu0 %v283
  %511 = vmatprep.subr.bf16.mxu0 0
  %512 = vmatpush1.bf16.msra.mxu0 %v284
  %513 = vmatprep.subr.bf16.mxu0 0
  %514 = vmatpush1.bf16.msra.mxu0 %v285
  %515 = vmatprep.subr.bf16.mxu0 0
  %516 = vmatpush1.bf16.msra.mxu0 %v286
  %517 = vmatprep.mubr.bf16.mxu0 %v470
  %518 = vmatmul.mubr.bf16.gmra.mrb[0].mxu0 %v469
  %v519 = vpop.f32.mrb[0].mxu0
  %v520 = vadd.f32 %v101, %v519
  %v521 = vpop.f32.mrb[0].mxu0
  %v522 = vpop.f32.mrb[0].mxu0
  %v523 = vadd.f32 %v101, %v522
  %v524 = vpop.f32.mrb[0].mxu0
  %525 = vmatprep.mubr.bf16.mxu0 %v474
  %526 = vmatmul.mubr.bf16.gmra.mrb[0].mxu0 %v473
  %v527 = vpop.f32.mrb[0].mxu0
  %v528 = vadd.f32 %v101, %v527
  %v529 = vpop.f32.mrb[0].mxu0
  %v530 = vpop.f32.mrb[0].mxu0
  %v531 = vadd.f32 %v101, %v530
  %v532 = vpop.f32.mrb[0].mxu0
  %533 = vdwg.mxu0
  %534 = vmatprep.subr.bf16.mxu0 0
  %535 = vmatpush1.bf16.msra.mxu0 %v287
  %536 = vmatprep.subr.bf16.mxu0 0
  %537 = vmatpush1.bf16.msra.mxu0 %v288
  %538 = vmatprep.subr.bf16.mxu0 0
  %539 = vmatpush1.bf16.msra.mxu0 %v289
  %540 = vmatprep.subr.bf16.mxu0 0
  %541 = vmatpush1.bf16.msra.mxu0 %v290
  %542 = vmatprep.subr.bf16.mxu0 0
  %543 = vmatpush1.bf16.msra.mxu0 %v291
  %544 = vmatprep.subr.bf16.mxu0 0
  %545 = vmatpush1.bf16.msra.mxu0 %v292
  %546 = vmatprep.subr.bf16.mxu0 0
  %547 = vmatpush1.bf16.msra.mxu0 %v293
  %548 = vmatprep.subr.bf16.mxu0 0
  %549 = vmatpush1.bf16.msra.mxu0 %v294
  %550 = vmatprep.subr.bf16.mxu0 0
  %551 = vmatpush1.bf16.msra.mxu0 %v295
  %552 = vmatprep.subr.bf16.mxu0 0
  %553 = vmatpush1.bf16.msra.mxu0 %v296
  %554 = vmatprep.subr.bf16.mxu0 0
  %555 = vmatpush1.bf16.msra.mxu0 %v297
  %556 = vmatprep.subr.bf16.mxu0 0
  %557 = vmatpush1.bf16.msra.mxu0 %v298
  %558 = vmatprep.subr.bf16.mxu0 0
  %559 = vmatpush1.bf16.msra.mxu0 %v299
  %560 = vmatprep.subr.bf16.mxu0 0
  %561 = vmatpush1.bf16.msra.mxu0 %v300
  %562 = vmatprep.subr.bf16.mxu0 0
  %563 = vmatpush1.bf16.msra.mxu0 %v301
  %564 = vmatprep.subr.bf16.mxu0 0
  %565 = vmatpush1.bf16.msra.mxu0 %v302
  %566 = vmatprep.mubr.bf16.mxu0 %v472
  %567 = vmatmul.mubr.bf16.gmra.mrb[0].mxu0 %v471
  %v568 = vpop.f32.mrb[0].mxu0
  %v569 = vadd.f32 %v520, %v568
  %v570 = vpop.f32.mrb[0].mxu0
  %v571 = vpop.f32.mrb[0].mxu0
  %v572 = vadd.f32 %v523, %v571
  %v573 = vpop.f32.mrb[0].mxu0
  %574 = vmatprep.mubr.bf16.mxu0 %v476
  %575 = vmatmul.mubr.bf16.gmra.mrb[0].mxu0 %v475
  %v576 = vpop.f32.mrb[0].mxu0
  %v577 = vadd.f32 %v528, %v576
  %v578 = vpop.f32.mrb[0].mxu0
  %v579 = vpop.f32.mrb[0].mxu0
  %v580 = vadd.f32 %v531, %v579
  %v581 = vpop.f32.mrb[0].mxu0
  %582 = vdwg.mxu0
  %v583 = vmax.f32 %v569, 0.0
  %v584 = vmax.f32 %v572, 0.0
  %v585 = vmax.f32 %v577, 0.0
  %v586 = vmax.f32 %v580, 0.0
  %v587 = vmax.f32 %v433, %v583
  %v588 = vmax.f32 %v434, %v584
  %v589 = vmax.f32 %v435, %v585
  %v590 = vmax.f32 %v436, %v586
  %v591 = vld [vmem:[%s2] sm:$0xff]
  %v592 = vld [vmem:[%s2 + $0x8] sm:$0xff]
  %v593 = vld [vmem:[%s2 + $0x10] sm:$0xff]
  %v594 = vld [vmem:[%s2 + $0x18] sm:$0xff]
  %v595 = vld [vmem:[%s2 + $0x20] sm:$0xff]
  %v596 = vld [vmem:[%s2 + $0x28] sm:$0xff]
  %v597 = vld [vmem:[%s2 + $0x30] sm:$0xff]
  %v598 = vld [vmem:[%s2 + $0x38] sm:$0xff]
  %v607 = vunpack.c.l.b16 %v591
  %v608 = vunpack.c.h.b16 %v591
  %v609 = vunpack.c.l.b16 %v592
  %v610 = vunpack.c.h.b16 %v592
  %v611 = vunpack.c.l.b16 %v593
  %v612 = vunpack.c.h.b16 %v593
  %v613 = vunpack.c.l.b16 %v594
  %v614 = vunpack.c.h.b16 %v594
  %v615 = vunpack.c.l.b16 %v595
  %v616 = vunpack.c.h.b16 %v595
  %v617 = vunpack.c.l.b16 %v596
  %v618 = vunpack.c.h.b16 %v596
  %v619 = vunpack.c.l.b16 %v597
  %v620 = vunpack.c.h.b16 %v597
  %v621 = vunpack.c.l.b16 %v598
  %v622 = vunpack.c.h.b16 %v598
  %v623 = vpack.c.b16 %v611, %v607
  %v624 = vpack.c.b16 %v612, %v608
  %v625 = vpack.c.b16 %v613, %v609
  %v626 = vpack.c.b16 %v614, %v610
  %v627 = vpack.c.b16 %v619, %v615
  %v628 = vpack.c.b16 %v620, %v616
  %v629 = vpack.c.b16 %v621, %v617
  %v630 = vpack.c.b16 %v622, %v618
  %639 = vmatprep.subr.bf16.mxu0 0
  %640 = vmatpush1.bf16.msra.mxu0 %v271
  %641 = vmatprep.subr.bf16.mxu0 0
  %642 = vmatpush1.bf16.msra.mxu0 %v272
  %643 = vmatprep.subr.bf16.mxu0 0
  %644 = vmatpush1.bf16.msra.mxu0 %v273
  %645 = vmatprep.subr.bf16.mxu0 0
  %646 = vmatpush1.bf16.msra.mxu0 %v274
  %647 = vmatprep.subr.bf16.mxu0 0
  %648 = vmatpush1.bf16.msra.mxu0 %v275
  %649 = vmatprep.subr.bf16.mxu0 0
  %650 = vmatpush1.bf16.msra.mxu0 %v276
  %651 = vmatprep.subr.bf16.mxu0 0
  %652 = vmatpush1.bf16.msra.mxu0 %v277
  %653 = vmatprep.subr.bf16.mxu0 0
  %654 = vmatpush1.bf16.msra.mxu0 %v278
  %655 = vmatprep.subr.bf16.mxu0 0
  %656 = vmatpush1.bf16.msra.mxu0 %v279
  %657 = vmatprep.subr.bf16.mxu0 0
  %658 = vmatpush1.bf16.msra.mxu0 %v280
  %659 = vmatprep.subr.bf16.mxu0 0
  %660 = vmatpush1.bf16.msra.mxu0 %v281
  %661 = vmatprep.subr.bf16.mxu0 0
  %662 = vmatpush1.bf16.msra.mxu0 %v282
  %663 = vmatprep.subr.bf16.mxu0 0
  %664 = vmatpush1.bf16.msra.mxu0 %v283
  %665 = vmatprep.subr.bf16.mxu0 0
  %666 = vmatpush1.bf16.msra.mxu0 %v284
  %667 = vmatprep.subr.bf16.mxu0 0
  %668 = vmatpush1.bf16.msra.mxu0 %v285
  %669 = vmatprep.subr.bf16.mxu0 0
  %670 = vmatpush1.bf16.msra.mxu0 %v286
  %671 = vmatprep.mubr.bf16.mxu0 %v624
  %672 = vmatmul.mubr.bf16.gmra.mrb[0].mxu0 %v623
  %v673 = vpop.f32.mrb[0].mxu0
  %v674 = vadd.f32 %v101, %v673
  %v675 = vpop.f32.mrb[0].mxu0
  %v676 = vpop.f32.mrb[0].mxu0
  %v677 = vadd.f32 %v101, %v676
  %v678 = vpop.f32.mrb[0].mxu0
  %679 = vmatprep.mubr.bf16.mxu0 %v628
  %680 = vmatmul.mubr.bf16.gmra.mrb[0].mxu0 %v627
  %v681 = vpop.f32.mrb[0].mxu0
  %v682 = vadd.f32 %v101, %v681
  %v683 = vpop.f32.mrb[0].mxu0
  %v684 = vpop.f32.mrb[0].mxu0
  %v685 = vadd.f32 %v101, %v684
  %v686 = vpop.f32.mrb[0].mxu0
  %687 = vdwg.mxu0
  %688 = vmatprep.subr.bf16.mxu0 0
  %689 = vmatpush1.bf16.msra.mxu0 %v287
  %690 = vmatprep.subr.bf16.mxu0 0
  %691 = vmatpush1.bf16.msra.mxu0 %v288
  %692 = vmatprep.subr.bf16.mxu0 0
  %693 = vmatpush1.bf16.msra.mxu0 %v289
  %694 = vmatprep.subr.bf16.mxu0 0
  %695 = vmatpush1.bf16.msra.mxu0 %v290
  %696 = vmatprep.subr.bf16.mxu0 0
  %697 = vmatpush1.bf16.msra.mxu0 %v291
  %698 = vmatprep.subr.bf16.mxu0 0
  %699 = vmatpush1.bf16.msra.mxu0 %v292
  %700 = vmatprep.subr.bf16.mxu0 0
  %701 = vmatpush1.bf16.msra.mxu0 %v293
  %702 = vmatprep.subr.bf16.mxu0 0
  %703 = vmatpush1.bf16.msra.mxu0 %v294
  %704 = vmatprep.subr.bf16.mxu0 0
  %705 = vmatpush1.bf16.msra.mxu0 %v295
  %706 = vmatprep.subr.bf16.mxu0 0
  %707 = vmatpush1.bf16.msra.mxu0 %v296
  %708 = vmatprep.subr.bf16.mxu0 0
  %709 = vmatpush1.bf16.msra.mxu0 %v297
  %710 = vmatprep.subr.bf16.mxu0 0
  %711 = vmatpush1.bf16.msra.mxu0 %v298
  %712 = vmatprep.subr.bf16.mxu0 0
  %713 = vmatpush1.bf16.msra.mxu0 %v299
  %714 = vmatprep.subr.bf16.mxu0 0
  %715 = vmatpush1.bf16.msra.mxu0 %v300
  %716 = vmatprep.subr.bf16.mxu0 0
  %717 = vmatpush1.bf16.msra.mxu0 %v301
  %718 = vmatprep.subr.bf16.mxu0 0
  %719 = vmatpush1.bf16.msra.mxu0 %v302
  %720 = vmatprep.mubr.bf16.mxu0 %v626
  %721 = vmatmul.mubr.bf16.gmra.mrb[0].mxu0 %v625
  %v722 = vpop.f32.mrb[0].mxu0
  %v723 = vadd.f32 %v674, %v722
  %v724 = vpop.f32.mrb[0].mxu0
  %v725 = vpop.f32.mrb[0].mxu0
  %v726 = vadd.f32 %v677, %v725
  %v727 = vpop.f32.mrb[0].mxu0
  %728 = vmatprep.mubr.bf16.mxu0 %v630
  %729 = vmatmul.mubr.bf16.gmra.mrb[0].mxu0 %v629
  %v730 = vpop.f32.mrb[0].mxu0
  %v731 = vadd.f32 %v682, %v730
  %v732 = vpop.f32.mrb[0].mxu0
  %v733 = vpop.f32.mrb[0].mxu0
  %v734 = vadd.f32 %v685, %v733
  %v735 = vpop.f32.mrb[0].mxu0
  %736 = vdwg.mxu0
  %v737 = vmax.f32 %v723, 0.0
  %v738 = vmax.f32 %v726, 0.0
  %v739 = vmax.f32 %v731, 0.0
  %v740 = vmax.f32 %v734, 0.0
  %v741 = vld [vmem:[%s3] sm:$0xff]
  %v742 = vld [vmem:[%s3 + $0x8] sm:$0xff]
  %v743 = vld [vmem:[%s3 + $0x10] sm:$0xff]
  %v744 = vld [vmem:[%s3 + $0x18] sm:$0xff]
  %v745 = vld [vmem:[%s3 + $0x20] sm:$0xff]
  %v746 = vld [vmem:[%s3 + $0x28] sm:$0xff]
  %v747 = vld [vmem:[%s3 + $0x30] sm:$0xff]
  %v748 = vld [vmem:[%s3 + $0x38] sm:$0xff]
  %v757 = vunpack.c.l.b16 %v741
  %v758 = vunpack.c.h.b16 %v741
  %v759 = vunpack.c.l.b16 %v742
  %v760 = vunpack.c.h.b16 %v742
  %v761 = vunpack.c.l.b16 %v743
  %v762 = vunpack.c.h.b16 %v743
  %v763 = vunpack.c.l.b16 %v744
  %v764 = vunpack.c.h.b16 %v744
  %v765 = vunpack.c.l.b16 %v745
  %v766 = vunpack.c.h.b16 %v745
  %v767 = vunpack.c.l.b16 %v746
  %v768 = vunpack.c.h.b16 %v746
  %v769 = vunpack.c.l.b16 %v747
  %v770 = vunpack.c.h.b16 %v747
  %v771 = vunpack.c.l.b16 %v748
  %v772 = vunpack.c.h.b16 %v748
  %v773 = vpack.c.b16 %v761, %v757
  %v774 = vpack.c.b16 %v762, %v758
  %v775 = vpack.c.b16 %v763, %v759
  %v776 = vpack.c.b16 %v764, %v760
  %v777 = vpack.c.b16 %v769, %v765
  %v778 = vpack.c.b16 %v770, %v766
  %v779 = vpack.c.b16 %v771, %v767
  %v780 = vpack.c.b16 %v772, %v768
  %789 = vmatprep.subr.bf16.mxu0 0
  %790 = vmatpush1.bf16.msra.mxu0 %v271
  %791 = vmatprep.subr.bf16.mxu0 0
  %792 = vmatpush1.bf16.msra.mxu0 %v272
  %793 = vmatprep.subr.bf16.mxu0 0
  %794 = vmatpush1.bf16.msra.mxu0 %v273
  %795 = vmatprep.subr.bf16.mxu0 0
  %796 = vmatpush1.bf16.msra.mxu0 %v274
  %797 = vmatprep.subr.bf16.mxu0 0
  %798 = vmatpush1.bf16.msra.mxu0 %v275
  %799 = vmatprep.subr.bf16.mxu0 0
  %800 = vmatpush1.bf16.msra.mxu0 %v276
  %801 = vmatprep.subr.bf16.mxu0 0
  %802 = vmatpush1.bf16.msra.mxu0 %v277
  %803 = vmatprep.subr.bf16.mxu0 0
  %804 = vmatpush1.bf16.msra.mxu0 %v278
  %805 = vmatprep.subr.bf16.mxu0 0
  %806 = vmatpush1.bf16.msra.mxu0 %v279
  %807 = vmatprep.subr.bf16.mxu0 0
  %808 = vmatpush1.bf16.msra.mxu0 %v280
  %809 = vmatprep.subr.bf16.mxu0 0
  %810 = vmatpush1.bf16.msra.mxu0 %v281
  %811 = vmatprep.subr.bf16.mxu0 0
  %812 = vmatpush1.bf16.msra.mxu0 %v282
  %813 = vmatprep.subr.bf16.mxu0 0
  %814 = vmatpush1.bf16.msra.mxu0 %v283
  %815 = vmatprep.subr.bf16.mxu0 0
  %816 = vmatpush1.bf16.msra.mxu0 %v284
  %817 = vmatprep.subr.bf16.mxu0 0
  %818 = vmatpush1.bf16.msra.mxu0 %v285
  %819 = vmatprep.subr.bf16.mxu0 0
  %820 = vmatpush1.bf16.msra.mxu0 %v286
  %821 = vmatprep.mubr.bf16.mxu0 %v774
  %822 = vmatmul.mubr.bf16.gmra.mrb[0].mxu0 %v773
  %v823 = vpop.f32.mrb[0].mxu0
  %v824 = vadd.f32 %v101, %v823
  %v825 = vpop.f32.mrb[0].mxu0
  %v826 = vpop.f32.mrb[0].mxu0
  %v827 = vadd.f32 %v101, %v826
  %v828 = vpop.f32.mrb[0].mxu0
  %829 = vmatprep.mubr.bf16.mxu0 %v778
  %830 = vmatmul.mubr.bf16.gmra.mrb[0].mxu0 %v777
  %v831 = vpop.f32.mrb[0].mxu0
  %v832 = vadd.f32 %v101, %v831
  %v833 = vpop.f32.mrb[0].mxu0
  %v834 = vpop.f32.mrb[0].mxu0
  %v835 = vadd.f32 %v101, %v834
  %v836 = vpop.f32.mrb[0].mxu0
  %837 = vdwg.mxu0
  %838 = vmatprep.subr.bf16.mxu0 0
  %839 = vmatpush1.bf16.msra.mxu0 %v287
  %840 = vmatprep.subr.bf16.mxu0 0
  %841 = vmatpush1.bf16.msra.mxu0 %v288
  %842 = vmatprep.subr.bf16.mxu0 0
  %843 = vmatpush1.bf16.msra.mxu0 %v289
  %844 = vmatprep.subr.bf16.mxu0 0
  %845 = vmatpush1.bf16.msra.mxu0 %v290
  %846 = vmatprep.subr.bf16.mxu0 0
  %847 = vmatpush1.bf16.msra.mxu0 %v291
  %848 = vmatprep.subr.bf16.mxu0 0
  %849 = vmatpush1.bf16.msra.mxu0 %v292
  %850 = vmatprep.subr.bf16.mxu0 0
  %851 = vmatpush1.bf16.msra.mxu0 %v293
  %852 = vmatprep.subr.bf16.mxu0 0
  %853 = vmatpush1.bf16.msra.mxu0 %v294
  %854 = vmatprep.subr.bf16.mxu0 0
  %855 = vmatpush1.bf16.msra.mxu0 %v295
  %856 = vmatprep.subr.bf16.mxu0 0
  %857 = vmatpush1.bf16.msra.mxu0 %v296
  %858 = vmatprep.subr.bf16.mxu0 0
  %859 = vmatpush1.bf16.msra.mxu0 %v297
  %860 = vmatprep.subr.bf16.mxu0 0
  %861 = vmatpush1.bf16.msra.mxu0 %v298
  %862 = vmatprep.subr.bf16.mxu0 0
  %863 = vmatpush1.bf16.msra.mxu0 %v299
  %864 = vmatprep.subr.bf16.mxu0 0
  %865 = vmatpush1.bf16.msra.mxu0 %v300
  %866 = vmatprep.subr.bf16.mxu0 0
  %867 = vmatpush1.bf16.msra.mxu0 %v301
  %868 = vmatprep.subr.bf16.mxu0 0
  %869 = vmatpush1.bf16.msra.mxu0 %v302
  %870 = vmatprep.mubr.bf16.mxu0 %v776
  %871 = vmatmul.mubr.bf16.gmra.mrb[0].mxu0 %v775
  %v872 = vpop.f32.mrb[0].mxu0
  %v873 = vadd.f32 %v824, %v872
  %v874 = vpop.f32.mrb[0].mxu0
  %v875 = vpop.f32.mrb[0].mxu0
  %v876 = vadd.f32 %v827, %v875
  %v877 = vpop.f32.mrb[0].mxu0
  %878 = vmatprep.mubr.bf16.mxu0 %v780
  %879 = vmatmul.mubr.bf16.gmra.mrb[0].mxu0 %v779
  %v880 = vpop.f32.mrb[0].mxu0
  %v881 = vadd.f32 %v832, %v880
  %v882 = vpop.f32.mrb[0].mxu0
  %v883 = vpop.f32.mrb[0].mxu0
  %v884 = vadd.f32 %v835, %v883
  %v885 = vpop.f32.mrb[0].mxu0
  %886 = vdwg.mxu0
  %v887 = vmax.f32 %v873, 0.0
  %v888 = vmax.f32 %v876, 0.0
  %v889 = vmax.f32 %v881, 0.0
  %v890 = vmax.f32 %v884, 0.0
  %v891 = vmax.f32 %v737, %v887
  %v892 = vmax.f32 %v738, %v888
  %v893 = vmax.f32 %v739, %v889
  %v894 = vmax.f32 %v740, %v890
  %v895 = vmax.f32 %v587, %v891
  %v896 = vmax.f32 %v588, %v892
  %v897 = vmax.f32 %v589, %v893
  %v898 = vmax.f32 %v590, %v894
  %899 = vst [vmem:[%s6] sm:$0xff] %v895
  %900 = vst [vmem:[%s6 + $0x8] sm:$0xff] %v896
  %901 = vst [vmem:[%s6 + $0x10] sm:$0xff] %v897
  %902 = vst [vmem:[%s6 + $0x18] sm:$0xff] %v898
  // Predicated region
  $region26: #{net_forward.4} parent=0 // pred_check
    _
  $region27: #{net_forward.4} parent=0 // pred_check_branch
    %904 = sbr.rel (0) target = $region29
  $region28: #{net_forward.4} parent=0 // pred_region
    _
  $region29: #{net_forward.4} parent=0 // pred_fallthru
    _
  // Predicated region
  $region30: #{net_forward.4} parent=0 // pred_check
    _
  $region31: #{net_forward.4} parent=0 // pred_check_branch
    %906 = sbr.rel (0) target = $region33
  $region32: #{net_forward.4} parent=0 // pred_region
    _
  $region33: #{net_forward.4} parent=0 // pred_fallthru
    _

// kernel: net_forward.5
$region0: #{net_forward.5}
  #allocation0 [shape = 'u32[]', space=smem, size = 0x4, offset = 0x4, fixed_abs, tag = 'smem constant byte address 0x4 - core index']
  #allocation1 [shape = 'u32[144,128]{1,0:T(1,128)}', space=vmem, size = 0x12000, scoped, tag = 'internal scratch']
  %s0 = inlined_call_operand.vmem [shape: bf16[8,800], index: 0, kind: input, shape index: {}]
  %s1 = inlined_call_operand.vmem [shape: bf16[800,512], index: 1, kind: input, shape index: {}]
  %s2 = inlined_call_operand.vmem [shape: f32[1,512], index: 2, kind: input, shape index: {}]
  %s3 = inlined_call_operand.vmem [shape: bf16[512,128], index: 3, kind: input, shape index: {}]
  %s4 = inlined_call_operand.vmem [shape: f32[1,128], index: 4, kind: input, shape index: {}]
  %s5 = inlined_call_operand.vmem [shape: f32[8,128], index: 5, kind: output, shape index: {}]
  %s6 = sld [smem:[#allocation0]]
  $region30: #{net_forward.5} parent=0
    _
  %s8 = ssub.s32 1, %s6
  %s9 = scalar_select 0, %s8, %s6
  // Predicated region
  $region2: #{net_forward.5} parent=0 // pred_check
    _
  $region3: #{net_forward.5} parent=0 // pred_check_branch
    %11 = sbr.rel (0) target = $region5
  $region4: #{net_forward.5} parent=0 // pred_region
    _
  $region5: #{net_forward.5} parent=0 // pred_fallthru
    _
  // Predicated region
  $region6: #{net_forward.5} parent=0 // pred_check
    _
  $region7: #{net_forward.5} parent=0 // pred_check_branch
    %13 = sbr.rel (0) target = $region9
  $region8: #{net_forward.5} parent=0 // pred_region
    _
  $region9: #{net_forward.5} parent=0 // pred_fallthru
    _
  // Predicated region
  $region10: #{net_forward.5} parent=0 // pred_check
    _
  $region11: #{net_forward.5} parent=0 // pred_check_branch
    %15 = sbr.rel (0) target = $region13
  $region12: #{net_forward.5} parent=0 // pred_region
    _
  $region13: #{net_forward.5} parent=0 // pred_fallthru
    _
  // Predicated region
  $region14: #{net_forward.5} parent=0 // pred_check
    _
  $region15: #{net_forward.5} parent=0 // pred_check_branch
    %17 = sbr.rel (0) target = $region17
  $region16: #{net_forward.5} parent=0 // pred_region
    _
  $region17: #{net_forward.5} parent=0 // pred_fallthru
    _
  // Predicated region
  $region18: #{net_forward.5} parent=0 // pred_check
    _
  $region19: #{net_forward.5} parent=0 // pred_check_branch
    %19 = sbr.rel (0) target = $region21
  $region20: #{net_forward.5} parent=0 // pred_region
    _
  $region21: #{net_forward.5} parent=0 // pred_fallthru
    _
  %v21 = vld [vmem:[%s0] sm:$0xff]
  %v22 = vld [vmem:[%s0 + $0x8] sm:$0xff]
  %v23 = vld [vmem:[%s0 + $0x10] sm:$0xff]
  %v24 = vld [vmem:[%s0 + $0x18] sm:$0xf]
  %v25 = vld [vmem:[%s1] sm:$0xff]
  %v26 = vld [vmem:[%s1 + $0x8] sm:$0xff]
  %v27 = vld [vmem:[%s1 + $0x10] sm:$0xff]
  %v28 = vld [vmem:[%s1 + $0x18] sm:$0xff]
  %v29 = vld [vmem:[%s1 + $0x20] sm:$0xff]
  %v30 = vld [vmem:[%s1 + $0x28] sm:$0xff]
  %v31 = vld [vmem:[%s1 + $0x30] sm:$0xff]
  %v32 = vld [vmem:[%s1 + $0x38] sm:$0xff]
  %v33 = vld [vmem:[%s1 + $0x40] sm:$0xff]
  %v34 = vld [vmem:[%s1 + $0x48] sm:$0xff]
  %v35 = vld [vmem:[%s1 + $0x50] sm:$0xff]
  %v36 = vld [vmem:[%s1 + $0x58] sm:$0xff]
  %v37 = vld [vmem:[%s1 + $0x60] sm:$0xff]
  %v38 = vld [vmem:[%s1 + $0x68] sm:$0xff]
  %v39 = vld [vmem:[%s1 + $0x70] sm:$0xff]
  %v40 = vld [vmem:[%s1 + $0x78] sm:$0xff]
  %v41 = vld [vmem:[%s1 + $0x80] sm:$0xff]
  %v42 = vld [vmem:[%s1 + $0x88] sm:$0xff]
  %v43 = vld [vmem:[%s1 + $0x90] sm:$0xff]
  %v44 = vld [vmem:[%s1 + $0x98] sm:$0xff]
  %v45 = vld [vmem:[%s1 + $0xa0] sm:$0xff]
  %v46 = vld [vmem:[%s1 + $0xa8] sm:$0xff]
  %v47 = vld [vmem:[%s1 + $0xb0] sm:$0xff]
  %v48 = vld [vmem:[%s1 + $0xb8] sm:$0xff]
  %v49 = vld [vmem:[%s1 + $0xc0] sm:$0xff]
  %v50 = vld [vmem:[%s1 + $0xc8] sm:$0xff]
  %v51 = vld [vmem:[%s1 + $0xd0] sm:$0xff]
  %v52 = vld [vmem:[%s1 + $0xd8] sm:$0xff]
  %v53 = vld [vmem:[%s1 + $0xe0] sm:$0xff]
  %v54 = vld [vmem:[%s1 + $0xe8] sm:$0xff]
  %v55 = vld [vmem:[%s1 + $0xf0] sm:$0xff]
  %v56 = vld [vmem:[%s1 + $0xf8] sm:$0xff]
  %v57 = vld [vmem:[%s1 + $0x100] sm:$0xff]
  %v58 = vld [vmem:[%s1 + $0x108] sm:$0xff]
  %v59 = vld [vmem:[%s1 + $0x110] sm:$0xff]
  %v60 = vld [vmem:[%s1 + $0x118] sm:$0xff]
  %v61 = vld [vmem:[%s1 + $0x120] sm:$0xff]
  %v62 = vld [vmem:[%s1 + $0x128] sm:$0xff]
  %v63 = vld [vmem:[%s1 + $0x130] sm:$0xff]
  %v64 = vld [vmem:[%s1 + $0x138] sm:$0xff]
  %v65 = vld [vmem:[%s1 + $0x140] sm:$0xff]
  %v66 = vld [vmem:[%s1 + $0x148] sm:$0xff]
  %v67 = vld [vmem:[%s1 + $0x150] sm:$0xff]
  %v68 = vld [vmem:[%s1 + $0x158] sm:$0xff]
  %v69 = vld [vmem:[%s1 + $0x160] sm:$0xff]
  %v70 = vld [vmem:[%s1 + $0x168] sm:$0xff]
  %v71 = vld [vmem:[%s1 + $0x170] sm:$0xff]
  %v72 = vld [vmem:[%s1 + $0x178] sm:$0xff]
  %v73 = vld [vmem:[%s1 + $0x180] sm:$0xff]
  %v74 = vld [vmem:[%s1 + $0x188] sm:$0xff]
  %v75 = vld [vmem:[%s1 + $0x190] sm:$0xff]
  %v76 = vld [vmem:[%s1 + $0x198] sm:$0xff]
  %v77 = vld [vmem:[%s1 + $0x1a0] sm:$0xff]
  %v78 = vld [vmem:[%s1 + $0x1a8] sm:$0xff]
  %v79 = vld [vmem:[%s1 + $0x1b0] sm:$0xff]
  %v80 = vld [vmem:[%s1 + $0x1b8] sm:$0xff]
  %v81 = vld [vmem:[%s1 + $0x1c0] sm:$0xff]
  %v82 = vld [vmem:[%s1 + $0x1c8] sm:$0xff]
  %v83 = vld [vmem:[%s1 + $0x1d0] sm:$0xff]
  %v84 = vld [vmem:[%s1 + $0x1d8] sm:$0xff]
  %v85 = vld [vmem:[%s1 + $0x1e0] sm:$0xff]
  %v86 = vld [vmem:[%s1 + $0x1e8] sm:$0xff]
  %v87 = vld [vmem:[%s1 + $0x1f0] sm:$0xff]
  %v88 = vld [vmem:[%s1 + $0x1f8] sm:$0xff]
  %v89 = vld [vmem:[%s1 + $0x200] sm:$0xff]
  %v90 = vld [vmem:[%s1 + $0x208] sm:$0xff]
  %v91 = vld [vmem:[%s1 + $0x210] sm:$0xff]
  %v92 = vld [vmem:[%s1 + $0x218] sm:$0xff]
  %v93 = vld [vmem:[%s1 + $0x220] sm:$0xff]
  %v94 = vld [vmem:[%s1 + $0x228] sm:$0xff]
  %v95 = vld [vmem:[%s1 + $0x230] sm:$0xff]
  %v96 = vld [vmem:[%s1 + $0x238] sm:$0xff]
  %v97 = vld [vmem:[%s1 + $0x240] sm:$0xff]
  %v98 = vld [vmem:[%s1 + $0x248] sm:$0xff]
  %v99 = vld [vmem:[%s1 + $0x250] sm:$0xff]
  %v100 = vld [vmem:[%s1 + $0x258] sm:$0xff]
  %v101 = vld [vmem:[%s1 + $0x260] sm:$0xff]
  %v102 = vld [vmem:[%s1 + $0x268] sm:$0xff]
  %v103 = vld [vmem:[%s1 + $0x270] sm:$0xff]
  %v104 = vld [vmem:[%s1 + $0x278] sm:$0xff]
  %v105 = vld [vmem:[%s1 + $0x280] sm:$0xff]
  %v106 = vld [vmem:[%s1 + $0x288] sm:$0xff]
  %v107 = vld [vmem:[%s1 + $0x290] sm:$0xff]
  %v108 = vld [vmem:[%s1 + $0x298] sm:$0xff]
  %v109 = vld [vmem:[%s1 + $0x2a0] sm:$0xff]
  %v110 = vld [vmem:[%s1 + $0x2a8] sm:$0xff]
  %v111 = vld [vmem:[%s1 + $0x2b0] sm:$0xff]
  %v112 = vld [vmem:[%s1 + $0x2b8] sm:$0xff]
  %v113 = vld [vmem:[%s1 + $0x2c0] sm:$0xff]
  %v114 = vld [vmem:[%s1 + $0x2c8] sm:$0xff]
  %v115 = vld [vmem:[%s1 + $0x2d0] sm:$0xff]
  %v116 = vld [vmem:[%s1 + $0x2d8] sm:$0xff]
  %v117 = vld [vmem:[%s1 + $0x2e0] sm:$0xff]
  %v118 = vld [vmem:[%s1 + $0x2e8] sm:$0xff]
  %v119 = vld [vmem:[%s1 + $0x2f0] sm:$0xff]
  %v120 = vld [vmem:[%s1 + $0x2f8] sm:$0xff]
  %v121 = vld [vmem:[%s1 + $0x300] sm:$0xff]
  %v122 = vld [vmem:[%s1 + $0x308] sm:$0xff]
  %v123 = vld [vmem:[%s1 + $0x310] sm:$0xff]
  %v124 = vld [vmem:[%s1 + $0x318] sm:$0xff]
  %v125 = vld [vmem:[%s1 + $0x320] sm:$0xff]
  %v126 = vld [vmem:[%s1 + $0x328] sm:$0xff]
  %v127 = vld [vmem:[%s1 + $0x330] sm:$0xff]
  %v128 = vld [vmem:[%s1 + $0x338] sm:$0xff]
  %v129 = vld [vmem:[%s1 + $0x340] sm:$0xff]
  %v130 = vld [vmem:[%s1 + $0x348] sm:$0xff]
  %v131 = vld [vmem:[%s1 + $0x350] sm:$0xff]
  %v132 = vld [vmem:[%s1 + $0x358] sm:$0xff]
  %v133 = vld [vmem:[%s1 + $0x360] sm:$0xff]
  %v134 = vld [vmem:[%s1 + $0x368] sm:$0xff]
  %v135 = vld [vmem:[%s1 + $0x370] sm:$0xff]
  %v136 = vld [vmem:[%s1 + $0x378] sm:$0xff]
  %v137 = vld [vmem:[%s1 + $0x380] sm:$0xff]
  %v138 = vld [vmem:[%s1 + $0x388] sm:$0xff]
  %v139 = vld [vmem:[%s1 + $0x390] sm:$0xff]
  %v140 = vld [vmem:[%s1 + $0x398] sm:$0xff]
  %v141 = vld [vmem:[%s1 + $0x3a0] sm:$0xff]
  %v142 = vld [vmem:[%s1 + $0x3a8] sm:$0xff]
  %v143 = vld [vmem:[%s1 + $0x3b0] sm:$0xff]
  %v144 = vld [vmem:[%s1 + $0x3b8] sm:$0xff]
  %v145 = vld [vmem:[%s1 + $0x3c0] sm:$0xff]
  %v146 = vld [vmem:[%s1 + $0x3c8] sm:$0xff]
  %v147 = vld [vmem:[%s1 + $0x3d0] sm:$0xff]
  %v148 = vld [vmem:[%s1 + $0x3d8] sm:$0xff]
  %v149 = vld [vmem:[%s1 + $0x3e0] sm:$0xff]
  %v150 = vld [vmem:[%s1 + $0x3e8] sm:$0xff]
  %v151 = vld [vmem:[%s1 + $0x3f0] sm:$0xff]
  %v152 = vld [vmem:[%s1 + $0x3f8] sm:$0xff]
  %v153 = vld [vmem:[%s1 + $0x400] sm:$0xff]
  %v154 = vld [vmem:[%s1 + $0x408] sm:$0xff]
  %v155 = vld [vmem:[%s1 + $0x410] sm:$0xff]
  %v156 = vld [vmem:[%s1 + $0x418] sm:$0xff]
  %v157 = vld [vmem:[%s1 + $0x420] sm:$0xff]
  %v158 = vld [vmem:[%s1 + $0x428] sm:$0xff]
  %v159 = vld [vmem:[%s1 + $0x430] sm:$0xff]
  %v160 = vld [vmem:[%s1 + $0x438] sm:$0xff]
  %v161 = vld [vmem:[%s1 + $0x440] sm:$0xff]
  %v162 = vld [vmem:[%s1 + $0x448] sm:$0xff]
  %v163 = vld [vmem:[%s1 + $0x450] sm:$0xff]
  %v164 = vld [vmem:[%s1 + $0x458] sm:$0xff]
  %v165 = vld [vmem:[%s1 + $0x460] sm:$0xff]
  %v166 = vld [vmem:[%s1 + $0x468] sm:$0xff]
  %v167 = vld [vmem:[%s1 + $0x470] sm:$0xff]
  %v168 = vld [vmem:[%s1 + $0x478] sm:$0xff]
  %v169 = vld [vmem:[%s1 + $0x480] sm:$0xff]
  %v170 = vld [vmem:[%s1 + $0x488] sm:$0xff]
  %v171 = vld [vmem:[%s1 + $0x490] sm:$0xff]
  %v172 = vld [vmem:[%s1 + $0x498] sm:$0xff]
  %v173 = vld [vmem:[%s1 + $0x4a0] sm:$0xff]
  %v174 = vld [vmem:[%s1 + $0x4a8] sm:$0xff]
  %v175 = vld [vmem:[%s1 + $0x4b0] sm:$0xff]
  %v176 = vld [vmem:[%s1 + $0x4b8] sm:$0xff]
  %v177 = vld [vmem:[%s1 + $0x4c0] sm:$0xff]
  %v178 = vld [vmem:[%s1 + $0x4c8] sm:$0xff]
  %v179 = vld [vmem:[%s1 + $0x4d0] sm:$0xff]
  %v180 = vld [vmem:[%s1 + $0x4d8] sm:$0xff]
  %v181 = vld [vmem:[%s1 + $0x4e0] sm:$0xff]
  %v182 = vld [vmem:[%s1 + $0x4e8] sm:$0xff]
  %v183 = vld [vmem:[%s1 + $0x4f0] sm:$0xff]
  %v184 = vld [vmem:[%s1 + $0x4f8] sm:$0xff]
  %v185 = vld [vmem:[%s1 + $0x500] sm:$0xff]
  %v186 = vld [vmem:[%s1 + $0x508] sm:$0xff]
  %v187 = vld [vmem:[%s1 + $0x510] sm:$0xff]
  %v188 = vld [vmem:[%s1 + $0x518] sm:$0xff]
  %v189 = vld [vmem:[%s1 + $0x520] sm:$0xff]
  %v190 = vld [vmem:[%s1 + $0x528] sm:$0xff]
  %v191 = vld [vmem:[%s1 + $0x530] sm:$0xff]
  %v192 = vld [vmem:[%s1 + $0x538] sm:$0xff]
  %v193 = vld [vmem:[%s1 + $0x540] sm:$0xff]
  %v194 = vld [vmem:[%s1 + $0x548] sm:$0xff]
  %v195 = vld [vmem:[%s1 + $0x550] sm:$0xff]
  %v196 = vld [vmem:[%s1 + $0x558] sm:$0xff]
  %v197 = vld [vmem:[%s1 + $0x560] sm:$0xff]
  %v198 = vld [vmem:[%s1 + $0x568] sm:$0xff]
  %v199 = vld [vmem:[%s1 + $0x570] sm:$0xff]
  %v200 = vld [vmem:[%s1 + $0x578] sm:$0xff]
  %v201 = vld [vmem:[%s1 + $0x580] sm:$0xff]
  %v202 = vld [vmem:[%s1 + $0x588] sm:$0xff]
  %v203 = vld [vmem:[%s1 + $0x590] sm:$0xff]
  %v204 = vld [vmem:[%s1 + $0x598] sm:$0xff]
  %v205 = vld [vmem:[%s1 + $0x5a0] sm:$0xff]
  %v206 = vld [vmem:[%s1 + $0x5a8] sm:$0xff]
  %v207 = vld [vmem:[%s1 + $0x5b0] sm:$0xff]
  %v208 = vld [vmem:[%s1 + $0x5b8] sm:$0xff]
  %v209 = vld [vmem:[%s1 + $0x5c0] sm:$0xff]
  %v210 = vld [vmem:[%s1 + $0x5c8] sm:$0xff]
  %v211 = vld [vmem:[%s1 + $0x5d0] sm:$0xff]
  %v212 = vld [vmem:[%s1 + $0x5d8] sm:$0xff]
  %v213 = vld [vmem:[%s1 + $0x5e0] sm:$0xff]
  %v214 = vld [vmem:[%s1 + $0x5e8] sm:$0xff]
  %v215 = vld [vmem:[%s1 + $0x5f0] sm:$0xff]
  %v216 = vld [vmem:[%s1 + $0x5f8] sm:$0xff]
  %v217 = vld [vmem:[%s1 + $0x600] sm:$0xff]
  %v218 = vld [vmem:[%s1 + $0x608] sm:$0xff]
  %v219 = vld [vmem:[%s1 + $0x610] sm:$0xff]
  %v220 = vld [vmem:[%s1 + $0x618] sm:$0xff]
  %v221 = vld [vmem:[%s1 + $0x620] sm:$0xff]
  %v222 = vld [vmem:[%s1 + $0x628] sm:$0xff]
  %v223 = vld [vmem:[%s1 + $0x630] sm:$0xff]
  %v224 = vld [vmem:[%s1 + $0x638] sm:$0xff]
  %v225 = vld [vmem:[%s2] sm:$0xf]
  %v227 = vlaneseq
  %v228 = vshrl.u32 %v227, 7
  %v229 = vsub.s32 0, %v228
  %v230 = vrot.slane %v225, %v229
  %v231 = vlaneseq
  %v232 = vshrl.u32 %v231, 7
  %v233 = vsub.s32 1, %v232
  %v234 = vrot.slane %v225, %v233
  %v235 = vlaneseq
  %v236 = vshrl.u32 %v235, 7
  %v237 = vsub.s32 2, %v236
  %v238 = vrot.slane %v225, %v237
  %v239 = vlaneseq
  %v240 = vshrl.u32 %v239, 7
  %v241 = vsub.s32 3, %v240
  %v242 = vrot.slane %v225, %v241
  %v251 = vunpack.c.l.b16 %v21
  %v252 = vunpack.c.h.b16 %v21
  %v253 = vunpack.c.l.b16 %v22
  %v254 = vunpack.c.h.b16 %v22
  %v255 = vunpack.c.l.b16 %v23
  %v256 = vunpack.c.h.b16 %v23
  %v257 = vunpack.c.l.b16 %v24
  %v258 = vpack.c.b16 %v251, %v251
  %v259 = vpack.c.b16 %v252, %v252
  %v260 = vpack.c.b16 %v253, %v253
  %v261 = vpack.c.b16 %v254, %v254
  %v262 = vpack.c.b16 %v255, %v255
  %v263 = vpack.c.b16 %v256, %v256
  %v264 = vpack.c.b16 %v257, %v257
  %v471 = vunpack.c.l.b16 %v25
  %v472 = vunpack.c.h.b16 %v25
  %v473 = vunpack.c.l.b16 %v26
  %v474 = vunpack.c.h.b16 %v26
  %v475 = vunpack.c.l.b16 %v27
  %v476 = vunpack.c.h.b16 %v27
  %v477 = vunpack.c.l.b16 %v28
  %v478 = vunpack.c.h.b16 %v28
  %v479 = vunpack.c.l.b16 %v29
  %v480 = vunpack.c.h.b16 %v29
  %v481 = vunpack.c.l.b16 %v30
  %v482 = vunpack.c.h.b16 %v30
  %v483 = vunpack.c.l.b16 %v31
  %v484 = vunpack.c.h.b16 %v31
  %v485 = vunpack.c.l.b16 %v32
  %v486 = vunpack.c.h.b16 %v32
  %v487 = vunpack.c.l.b16 %v33
  %v488 = vunpack.c.h.b16 %v33
  %v489 = vunpack.c.l.b16 %v34
  %v490 = vunpack.c.h.b16 %v34
  %v491 = vunpack.c.l.b16 %v35
  %v492 = vunpack.c.h.b16 %v35
  %v493 = vunpack.c.l.b16 %v36
  %v494 = vunpack.c.h.b16 %v36
  %v495 = vunpack.c.l.b16 %v37
  %v496 = vunpack.c.h.b16 %v37
  %v497 = vunpack.c.l.b16 %v38
  %v498 = vunpack.c.h.b16 %v38
  %v499 = vunpack.c.l.b16 %v39
  %v500 = vunpack.c.h.b16 %v39
  %v501 = vunpack.c.l.b16 %v40
  %v502 = vunpack.c.h.b16 %v40
  %v503 = vunpack.c.l.b16 %v41
  %v504 = vunpack.c.h.b16 %v41
  %v505 = vunpack.c.l.b16 %v42
  %v506 = vunpack.c.h.b16 %v42
  %v507 = vunpack.c.l.b16 %v43
  %v508 = vunpack.c.h.b16 %v43
  %v509 = vunpack.c.l.b16 %v44
  %v510 = vunpack.c.h.b16 %v44
  %v511 = vunpack.c.l.b16 %v45
  %v512 = vunpack.c.h.b16 %v45
  %v513 = vunpack.c.l.b16 %v46
  %v514 = vunpack.c.h.b16 %v46
  %v515 = vunpack.c.l.b16 %v47
  %v516 = vunpack.c.h.b16 %v47
  %v517 = vunpack.c.l.b16 %v48
  %v518 = vunpack.c.h.b16 %v48
  %v519 = vunpack.c.l.b16 %v49
  %v520 = vunpack.c.h.b16 %v49
  %v521 = vunpack.c.l.b16 %v50
  %v522 = vunpack.c.h.b16 %v50
  %v523 = vunpack.c.l.b16 %v51
  %v524 = vunpack.c.h.b16 %v51
  %v525 = vunpack.c.l.b16 %v52
  %v526 = vunpack.c.h.b16 %v52
  %v527 = vunpack.c.l.b16 %v53
  %v528 = vunpack.c.h.b16 %v53
  %v529 = vunpack.c.l.b16 %v54
  %v530 = vunpack.c.h.b16 %v54
  %v531 = vunpack.c.l.b16 %v55
  %v532 = vunpack.c.h.b16 %v55
  %v533 = vunpack.c.l.b16 %v56
  %v534 = vunpack.c.h.b16 %v56
  %v535 = vunpack.c.l.b16 %v57
  %v536 = vunpack.c.h.b16 %v57
  %v537 = vunpack.c.l.b16 %v58
  %v538 = vunpack.c.h.b16 %v58
  %v539 = vunpack.c.l.b16 %v59
  %v540 = vunpack.c.h.b16 %v59
  %v541 = vunpack.c.l.b16 %v60
  %v542 = vunpack.c.h.b16 %v60
  %v543 = vunpack.c.l.b16 %v61
  %v544 = vunpack.c.h.b16 %v61
  %v545 = vunpack.c.l.b16 %v62
  %v546 = vunpack.c.h.b16 %v62
  %v547 = vunpack.c.l.b16 %v63
  %v548 = vunpack.c.h.b16 %v63
  %v549 = vunpack.c.l.b16 %v64
  %v550 = vunpack.c.h.b16 %v64
  %v551 = vunpack.c.l.b16 %v65
  %v552 = vunpack.c.h.b16 %v65
  %v553 = vunpack.c.l.b16 %v66
  %v554 = vunpack.c.h.b16 %v66
  %v555 = vunpack.c.l.b16 %v67
  %v556 = vunpack.c.h.b16 %v67
  %v557 = vunpack.c.l.b16 %v68
  %v558 = vunpack.c.h.b16 %v68
  %v559 = vunpack.c.l.b16 %v69
  %v560 = vunpack.c.h.b16 %v69
  %v561 = vunpack.c.l.b16 %v70
  %v562 = vunpack.c.h.b16 %v70
  %v563 = vunpack.c.l.b16 %v71
  %v564 = vunpack.c.h.b16 %v71
  %v565 = vunpack.c.l.b16 %v72
  %v566 = vunpack.c.h.b16 %v72
  %v567 = vunpack.c.l.b16 %v73
  %v568 = vunpack.c.h.b16 %v73
  %v569 = vunpack.c.l.b16 %v74
  %v570 = vunpack.c.h.b16 %v74
  %v571 = vunpack.c.l.b16 %v75
  %v572 = vunpack.c.h.b16 %v75
  %v573 = vunpack.c.l.b16 %v76
  %v574 = vunpack.c.h.b16 %v76
  %v575 = vunpack.c.l.b16 %v77
  %v576 = vunpack.c.h.b16 %v77
  %v577 = vunpack.c.l.b16 %v78
  %v578 = vunpack.c.h.b16 %v78
  %v579 = vunpack.c.l.b16 %v79
  %v580 = vunpack.c.h.b16 %v79
  %v581 = vunpack.c.l.b16 %v80
  %v582 = vunpack.c.h.b16 %v80
  %v583 = vunpack.c.l.b16 %v81
  %v584 = vunpack.c.h.b16 %v81
  %v585 = vunpack.c.l.b16 %v82
  %v586 = vunpack.c.h.b16 %v82
  %v587 = vunpack.c.l.b16 %v83
  %v588 = vunpack.c.h.b16 %v83
  %v589 = vunpack.c.l.b16 %v84
  %v590 = vunpack.c.h.b16 %v84
  %v591 = vunpack.c.l.b16 %v85
  %v592 = vunpack.c.h.b16 %v85
  %v593 = vunpack.c.l.b16 %v86
  %v594 = vunpack.c.h.b16 %v86
  %v595 = vunpack.c.l.b16 %v87
  %v596 = vunpack.c.h.b16 %v87
  %v597 = vunpack.c.l.b16 %v88
  %v598 = vunpack.c.h.b16 %v88
  %v599 = vunpack.c.l.b16 %v89
  %v600 = vunpack.c.h.b16 %v89
  %v601 = vunpack.c.l.b16 %v90
  %v602 = vunpack.c.h.b16 %v90
  %v603 = vunpack.c.l.b16 %v91
  %v604 = vunpack.c.h.b16 %v91
  %v605 = vunpack.c.l.b16 %v92
  %v606 = vunpack.c.h.b16 %v92
  %v607 = vunpack.c.l.b16 %v93
  %v608 = vunpack.c.h.b16 %v93
  %v609 = vunpack.c.l.b16 %v94
  %v610 = vunpack.c.h.b16 %v94
  %v611 = vunpack.c.l.b16 %v95
  %v612 = vunpack.c.h.b16 %v95
  %v613 = vunpack.c.l.b16 %v96
  %v614 = vunpack.c.h.b16 %v96
  %v615 = vunpack.c.l.b16 %v97
  %v616 = vunpack.c.h.b16 %v97
  %v617 = vunpack.c.l.b16 %v98
  %v618 = vunpack.c.h.b16 %v98
  %v619 = vunpack.c.l.b16 %v99
  %v620 = vunpack.c.h.b16 %v99
  %v621 = vunpack.c.l.b16 %v100
  %v622 = vunpack.c.h.b16 %v100
  %v623 = vunpack.c.l.b16 %v101
  %v624 = vunpack.c.h.b16 %v101
  %v625 = vunpack.c.l.b16 %v102
  %v626 = vunpack.c.h.b16 %v102
  %v627 = vunpack.c.l.b16 %v103
  %v628 = vunpack.c.h.b16 %v103
  %v629 = vunpack.c.l.b16 %v104
  %v630 = vunpack.c.h.b16 %v104
  %v631 = vunpack.c.l.b16 %v105
  %v632 = vunpack.c.h.b16 %v105
  %v633 = vunpack.c.l.b16 %v106
  %v634 = vunpack.c.h.b16 %v106
  %v635 = vunpack.c.l.b16 %v107
  %v636 = vunpack.c.h.b16 %v107
  %v637 = vunpack.c.l.b16 %v108
  %v638 = vunpack.c.h.b16 %v108
  %v639 = vunpack.c.l.b16 %v109
  %v640 = vunpack.c.h.b16 %v109
  %v641 = vunpack.c.l.b16 %v110
  %v642 = vunpack.c.h.b16 %v110
  %v643 = vunpack.c.l.b16 %v111
  %v644 = vunpack.c.h.b16 %v111
  %v645 = vunpack.c.l.b16 %v112
  %v646 = vunpack.c.h.b16 %v112
  %v647 = vunpack.c.l.b16 %v113
  %v648 = vunpack.c.h.b16 %v113
  %v649 = vunpack.c.l.b16 %v114
  %v650 = vunpack.c.h.b16 %v114
  %v651 = vunpack.c.l.b16 %v115
  %v652 = vunpack.c.h.b16 %v115
  %v653 = vunpack.c.l.b16 %v116
  %v654 = vunpack.c.h.b16 %v116
  %v655 = vunpack.c.l.b16 %v117
  %v656 = vunpack.c.h.b16 %v117
  %v657 = vunpack.c.l.b16 %v118
  %v658 = vunpack.c.h.b16 %v118
  %v659 = vunpack.c.l.b16 %v119
  %v660 = vunpack.c.h.b16 %v119
  %v661 = vunpack.c.l.b16 %v120
  %v662 = vunpack.c.h.b16 %v120
  %v663 = vunpack.c.l.b16 %v121
  %v664 = vunpack.c.h.b16 %v121
  %v665 = vunpack.c.l.b16 %v122
  %v666 = vunpack.c.h.b16 %v122
  %v667 = vunpack.c.l.b16 %v123
  %v668 = vunpack.c.h.b16 %v123
  %v669 = vunpack.c.l.b16 %v124
  %v670 = vunpack.c.h.b16 %v124
  %v671 = vunpack.c.l.b16 %v125
  %v672 = vunpack.c.h.b16 %v125
  %v673 = vunpack.c.l.b16 %v126
  %v674 = vunpack.c.h.b16 %v126
  %v675 = vunpack.c.l.b16 %v127
  %v676 = vunpack.c.h.b16 %v127
  %v677 = vunpack.c.l.b16 %v128
  %v678 = vunpack.c.h.b16 %v128
  %v679 = vunpack.c.l.b16 %v129
  %v680 = vunpack.c.h.b16 %v129
  %v681 = vunpack.c.l.b16 %v130
  %v682 = vunpack.c.h.b16 %v130
  %v683 = vunpack.c.l.b16 %v131
  %v684 = vunpack.c.h.b16 %v131
  %v685 = vunpack.c.l.b16 %v132
  %v686 = vunpack.c.h.b16 %v132
  %v687 = vunpack.c.l.b16 %v133
  %v688 = vunpack.c.h.b16 %v133
  %v689 = vunpack.c.l.b16 %v134
  %v690 = vunpack.c.h.b16 %v134
  %v691 = vunpack.c.l.b16 %v135
  %v692 = vunpack.c.h.b16 %v135
  %v693 = vunpack.c.l.b16 %v136
  %v694 = vunpack.c.h.b16 %v136
  %v695 = vunpack.c.l.b16 %v137
  %v696 = vunpack.c.h.b16 %v137
  %v697 = vunpack.c.l.b16 %v138
  %v698 = vunpack.c.h.b16 %v138
  %v699 = vunpack.c.l.b16 %v139
  %v700 = vunpack.c.h.b16 %v139
  %v701 = vunpack.c.l.b16 %v140
  %v702 = vunpack.c.h.b16 %v140
  %v703 = vunpack.c.l.b16 %v141
  %v704 = vunpack.c.h.b16 %v141
  %v705 = vunpack.c.l.b16 %v142
  %v706 = vunpack.c.h.b16 %v142
  %v707 = vunpack.c.l.b16 %v143
  %v708 = vunpack.c.h.b16 %v143
  %v709 = vunpack.c.l.b16 %v144
  %v710 = vunpack.c.h.b16 %v144
  %v711 = vunpack.c.l.b16 %v145
  %v712 = vunpack.c.h.b16 %v145
  %v713 = vunpack.c.l.b16 %v146
  %v714 = vunpack.c.h.b16 %v146
  %v715 = vunpack.c.l.b16 %v147
  %v716 = vunpack.c.h.b16 %v147
  %v717 = vunpack.c.l.b16 %v148
  %v718 = vunpack.c.h.b16 %v148
  %v719 = vunpack.c.l.b16 %v149
  %v720 = vunpack.c.h.b16 %v149
  %v721 = vunpack.c.l.b16 %v150
  %v722 = vunpack.c.h.b16 %v150
  %v723 = vunpack.c.l.b16 %v151
  %v724 = vunpack.c.h.b16 %v151
  %v725 = vunpack.c.l.b16 %v152
  %v726 = vunpack.c.h.b16 %v152
  %v727 = vunpack.c.l.b16 %v153
  %v728 = vunpack.c.h.b16 %v153
  %v729 = vunpack.c.l.b16 %v154
  %v730 = vunpack.c.h.b16 %v154
  %v731 = vunpack.c.l.b16 %v155
  %v732 = vunpack.c.h.b16 %v155
  %v733 = vunpack.c.l.b16 %v156
  %v734 = vunpack.c.h.b16 %v156
  %v735 = vunpack.c.l.b16 %v157
  %v736 = vunpack.c.h.b16 %v157
  %v737 = vunpack.c.l.b16 %v158
  %v738 = vunpack.c.h.b16 %v158
  %v739 = vunpack.c.l.b16 %v159
  %v740 = vunpack.c.h.b16 %v159
  %v741 = vunpack.c.l.b16 %v160
  %v742 = vunpack.c.h.b16 %v160
  %v743 = vunpack.c.l.b16 %v161
  %v744 = vunpack.c.h.b16 %v161
  %v745 = vunpack.c.l.b16 %v162
  %v746 = vunpack.c.h.b16 %v162
  %v747 = vunpack.c.l.b16 %v163
  %v748 = vunpack.c.h.b16 %v163
  %v749 = vunpack.c.l.b16 %v164
  %v750 = vunpack.c.h.b16 %v164
  %v751 = vunpack.c.l.b16 %v165
  %v752 = vunpack.c.h.b16 %v165
  %v753 = vunpack.c.l.b16 %v166
  %v754 = vunpack.c.h.b16 %v166
  %v755 = vunpack.c.l.b16 %v167
  %v756 = vunpack.c.h.b16 %v167
  %v757 = vunpack.c.l.b16 %v168
  %v758 = vunpack.c.h.b16 %v168
  %v759 = vunpack.c.l.b16 %v169
  %v760 = vunpack.c.h.b16 %v169
  %v761 = vunpack.c.l.b16 %v170
  %v762 = vunpack.c.h.b16 %v170
  %v763 = vunpack.c.l.b16 %v171
  %v764 = vunpack.c.h.b16 %v171
  %v765 = vunpack.c.l.b16 %v172
  %v766 = vunpack.c.h.b16 %v172
  %v767 = vunpack.c.l.b16 %v173
  %v768 = vunpack.c.h.b16 %v173
  %v769 = vunpack.c.l.b16 %v174
  %v770 = vunpack.c.h.b16 %v174
  %v771 = vunpack.c.l.b16 %v175
  %v772 = vunpack.c.h.b16 %v175
  %v773 = vunpack.c.l.b16 %v176
  %v774 = vunpack.c.h.b16 %v176
  %v775 = vunpack.c.l.b16 %v177
  %v776 = vunpack.c.h.b16 %v177
  %v777 = vunpack.c.l.b16 %v178
  %v778 = vunpack.c.h.b16 %v178
  %v779 = vunpack.c.l.b16 %v179
  %v780 = vunpack.c.h.b16 %v179
  %v781 = vunpack.c.l.b16 %v180
  %v782 = vunpack.c.h.b16 %v180
  %v783 = vunpack.c.l.b16 %v181
  %v784 = vunpack.c.h.b16 %v181
  %v785 = vunpack.c.l.b16 %v182
  %v786 = vunpack.c.h.b16 %v182
  %v787 = vunpack.c.l.b16 %v183
  %v788 = vunpack.c.h.b16 %v183
  %v789 = vunpack.c.l.b16 %v184
  %v790 = vunpack.c.h.b16 %v184
  %v791 = vunpack.c.l.b16 %v185
  %v792 = vunpack.c.h.b16 %v185
  %v793 = vunpack.c.l.b16 %v186
  %v794 = vunpack.c.h.b16 %v186
  %v795 = vunpack.c.l.b16 %v187
  %v796 = vunpack.c.h.b16 %v187
  %v797 = vunpack.c.l.b16 %v188
  %v798 = vunpack.c.h.b16 %v188
  %v799 = vunpack.c.l.b16 %v189
  %v800 = vunpack.c.h.b16 %v189
  %v801 = vunpack.c.l.b16 %v190
  %v802 = vunpack.c.h.b16 %v190
  %v803 = vunpack.c.l.b16 %v191
  %v804 = vunpack.c.h.b16 %v191
  %v805 = vunpack.c.l.b16 %v192
  %v806 = vunpack.c.h.b16 %v192
  %v807 = vunpack.c.l.b16 %v193
  %v808 = vunpack.c.h.b16 %v193
  %v809 = vunpack.c.l.b16 %v194
  %v810 = vunpack.c.h.b16 %v194
  %v811 = vunpack.c.l.b16 %v195
  %v812 = vunpack.c.h.b16 %v195
  %v813 = vunpack.c.l.b16 %v196
  %v814 = vunpack.c.h.b16 %v196
  %v815 = vunpack.c.l.b16 %v197
  %v816 = vunpack.c.h.b16 %v197
  %v817 = vunpack.c.l.b16 %v198
  %v818 = vunpack.c.h.b16 %v198
  %v819 = vunpack.c.l.b16 %v199
  %v820 = vunpack.c.h.b16 %v199
  %v821 = vunpack.c.l.b16 %v200
  %v822 = vunpack.c.h.b16 %v200
  %v823 = vunpack.c.l.b16 %v201
  %v824 = vunpack.c.h.b16 %v201
  %v825 = vunpack.c.l.b16 %v202
  %v826 = vunpack.c.h.b16 %v202
  %v827 = vunpack.c.l.b16 %v203
  %v828 = vunpack.c.h.b16 %v203
  %v829 = vunpack.c.l.b16 %v204
  %v830 = vunpack.c.h.b16 %v204
  %v831 = vunpack.c.l.b16 %v205
  %v832 = vunpack.c.h.b16 %v205
  %v833 = vunpack.c.l.b16 %v206
  %v834 = vunpack.c.h.b16 %v206
  %v835 = vunpack.c.l.b16 %v207
  %v836 = vunpack.c.h.b16 %v207
  %v837 = vunpack.c.l.b16 %v208
  %v838 = vunpack.c.h.b16 %v208
  %v839 = vunpack.c.l.b16 %v209
  %v840 = vunpack.c.h.b16 %v209
  %v841 = vunpack.c.l.b16 %v210
  %v842 = vunpack.c.h.b16 %v210
  %v843 = vunpack.c.l.b16 %v211
  %v844 = vunpack.c.h.b16 %v211
  %v845 = vunpack.c.l.b16 %v212
  %v846 = vunpack.c.h.b16 %v212
  %v847 = vunpack.c.l.b16 %v213
  %v848 = vunpack.c.h.b16 %v213
  %v849 = vunpack.c.l.b16 %v214
  %v850 = vunpack.c.h.b16 %v214
  %v851 = vunpack.c.l.b16 %v215
  %v852 = vunpack.c.h.b16 %v215
  %v853 = vunpack.c.l.b16 %v216
  %v854 = vunpack.c.h.b16 %v216
  %v855 = vunpack.c.l.b16 %v217
  %v856 = vunpack.c.h.b16 %v217
  %v857 = vunpack.c.l.b16 %v218
  %v858 = vunpack.c.h.b16 %v218
  %v859 = vunpack.c.l.b16 %v219
  %v860 = vunpack.c.h.b16 %v219
  %v861 = vunpack.c.l.b16 %v220
  %v862 = vunpack.c.h.b16 %v220
  %v863 = vunpack.c.l.b16 %v221
  %v864 = vunpack.c.h.b16 %v221
  %v865 = vunpack.c.l.b16 %v222
  %v866 = vunpack.c.h.b16 %v222
  %v867 = vunpack.c.l.b16 %v223
  %v868 = vunpack.c.h.b16 %v223
  %v869 = vunpack.c.l.b16 %v224
  %v870 = vunpack.c.h.b16 %v224
  %v871 = vpack.c.b16 %v475, %v471
  %v872 = vpack.c.b16 %v476, %v472
  %v873 = vpack.c.b16 %v477, %v473
  %v874 = vpack.c.b16 %v478, %v474
  %v875 = vpack.c.b16 %v483, %v479
  %v876 = vpack.c.b16 %v484, %v480
  %v877 = vpack.c.b16 %v485, %v481
  %v878 = vpack.c.b16 %v486, %v482
  %v879 = vpack.c.b16 %v491, %v487
  %v880 = vpack.c.b16 %v492, %v488
  %v881 = vpack.c.b16 %v493, %v489
  %v882 = vpack.c.b16 %v494, %v490
  %v883 = vpack.c.b16 %v499, %v495
  %v884 = vpack.c.b16 %v500, %v496
  %v885 = vpack.c.b16 %v501, %v497
  %v886 = vpack.c.b16 %v502, %v498
  %v887 = vpack.c.b16 %v507, %v503
  %v888 = vpack.c.b16 %v508, %v504
  %v889 = vpack.c.b16 %v509, %v505
  %v890 = vpack.c.b16 %v510, %v506
  %v891 = vpack.c.b16 %v515, %v511
  %v892 = vpack.c.b16 %v516, %v512
  %v893 = vpack.c.b16 %v517, %v513
  %v894 = vpack.c.b16 %v518, %v514
  %v895 = vpack.c.b16 %v523, %v519
  %v896 = vpack.c.b16 %v524, %v520
  %v897 = vpack.c.b16 %v525, %v521
  %v898 = vpack.c.b16 %v526, %v522
  %v899 = vpack.c.b16 %v531, %v527
  %v900 = vpack.c.b16 %v532, %v528
  %v901 = vpack.c.b16 %v533, %v529
  %v902 = vpack.c.b16 %v534, %v530
  %v903 = vpack.c.b16 %v539, %v535
  %v904 = vpack.c.b16 %v540, %v536
  %v905 = vpack.c.b16 %v541, %v537
  %v906 = vpack.c.b16 %v542, %v538
  %v907 = vpack.c.b16 %v547, %v543
  %v908 = vpack.c.b16 %v548, %v544
  %v909 = vpack.c.b16 %v549, %v545
  %v910 = vpack.c.b16 %v550, %v546
  %v911 = vpack.c.b16 %v555, %v551
  %v912 = vpack.c.b16 %v556, %v552
  %v913 = vpack.c.b16 %v557, %v553
  %v914 = vpack.c.b16 %v558, %v554
  %v915 = vpack.c.b16 %v563, %v559
  %v916 = vpack.c.b16 %v564, %v560
  %v917 = vpack.c.b16 %v565, %v561
  %v918 = vpack.c.b16 %v566, %v562
  %v919 = vpack.c.b16 %v571, %v567
  %v920 = vpack.c.b16 %v572, %v568
  %v921 = vpack.c.b16 %v573, %v569
  %v922 = vpack.c.b16 %v574, %v570
  %v923 = vpack.c.b16 %v579, %v575
  %v924 = vpack.c.b16 %v580, %v576
  %v925 = vpack.c.b16 %v581, %v577
  %v926 = vpack.c.b16 %v582, %v578
  %v927 = vpack.c.b16 %v587, %v583
  %v928 = vpack.c.b16 %v588, %v584
  %v929 = vpack.c.b16 %v589, %v585
  %v930 = vpack.c.b16 %v590, %v586
  %v931 = vpack.c.b16 %v595, %v591
  %v932 = vpack.c.b16 %v596, %v592
  %v933 = vpack.c.b16 %v597, %v593
  %v934 = vpack.c.b16 %v598, %v594
  %v935 = vpack.c.b16 %v603, %v599
  %v936 = vpack.c.b16 %v604, %v600
  %v937 = vpack.c.b16 %v605, %v601
  %v938 = vpack.c.b16 %v606, %v602
  %v939 = vpack.c.b16 %v611, %v607
  %v940 = vpack.c.b16 %v612, %v608
  %v941 = vpack.c.b16 %v613, %v609
  %v942 = vpack.c.b16 %v614, %v610
  %v943 = vpack.c.b16 %v619, %v615
  %v944 = vpack.c.b16 %v620, %v616
  %v945 = vpack.c.b16 %v621, %v617
  %v946 = vpack.c.b16 %v622, %v618
  %v947 = vpack.c.b16 %v627, %v623
  %v948 = vpack.c.b16 %v628, %v624
  %v949 = vpack.c.b16 %v629, %v625
  %v950 = vpack.c.b16 %v630, %v626
  %v951 = vpack.c.b16 %v635, %v631
  %v952 = vpack.c.b16 %v636, %v632
  %v953 = vpack.c.b16 %v637, %v633
  %v954 = vpack.c.b16 %v638, %v634
  %v955 = vpack.c.b16 %v643, %v639
  %v956 = vpack.c.b16 %v644, %v640
  %v957 = vpack.c.b16 %v645, %v641
  %v958 = vpack.c.b16 %v646, %v642
  %v959 = vpack.c.b16 %v651, %v647
  %v960 = vpack.c.b16 %v652, %v648
  %v961 = vpack.c.b16 %v653, %v649
  %v962 = vpack.c.b16 %v654, %v650
  %v963 = vpack.c.b16 %v659, %v655
  %v964 = vpack.c.b16 %v660, %v656
  %v965 = vpack.c.b16 %v661, %v657
  %v966 = vpack.c.b16 %v662, %v658
  %v967 = vpack.c.b16 %v667, %v663
  %v968 = vpack.c.b16 %v668, %v664
  %v969 = vpack.c.b16 %v669, %v665
  %v970 = vpack.c.b16 %v670, %v666
  %v971 = vpack.c.b16 %v675, %v671
  %v972 = vpack.c.b16 %v676, %v672
  %v973 = vpack.c.b16 %v677, %v673
  %v974 = vpack.c.b16 %v678, %v674
  %v975 = vpack.c.b16 %v683, %v679
  %v976 = vpack.c.b16 %v684, %v680
  %v977 = vpack.c.b16 %v685, %v681
  %v978 = vpack.c.b16 %v686, %v682
  %v979 = vpack.c.b16 %v691, %v687
  %v980 = vpack.c.b16 %v692, %v688
  %v981 = vpack.c.b16 %v693, %v689
  %v982 = vpack.c.b16 %v694, %v690
  %v983 = vpack.c.b16 %v699, %v695
  %v984 = vpack.c.b16 %v700, %v696
  %v985 = vpack.c.b16 %v701, %v697
  %v986 = vpack.c.b16 %v702, %v698
  %v987 = vpack.c.b16 %v707, %v703
  %v988 = vpack.c.b16 %v708, %v704
  %v989 = vpack.c.b16 %v709, %v705
  %v990 = vpack.c.b16 %v710, %v706
  %v991 = vpack.c.b16 %v715, %v711
  %v992 = vpack.c.b16 %v716, %v712
  %v993 = vpack.c.b16 %v717, %v713
  %v994 = vpack.c.b16 %v718, %v714
  %v995 = vpack.c.b16 %v723, %v719
  %v996 = vpack.c.b16 %v724, %v720
  %v997 = vpack.c.b16 %v725, %v721
  %v998 = vpack.c.b16 %v726, %v722
  %v999 = vpack.c.b16 %v731, %v727
  %v1000 = vpack.c.b16 %v732, %v728
  %v1001 = vpack.c.b16 %v733, %v729
  %v1002 = vpack.c.b16 %v734, %v730
  %v1003 = vpack.c.b16 %v739, %v735
  %v1004 = vpack.c.b16 %v740, %v736
  %v1005 = vpack.c.b16 %v741, %v737
  %v1006 = vpack.c.b16 %v742, %v738
  %v1007 = vpack.c.b16 %v747, %v743
  %v1008 = vpack.c.b16 %v748, %v744
  %v1009 = vpack.c.b16 %v749, %v745
  %v1010 = vpack.c.b16 %v750, %v746
  %v1011 = vpack.c.b16 %v755, %v751
  %v1012 = vpack.c.b16 %v756, %v752
  %v1013 = vpack.c.b16 %v757, %v753
  %v1014 = vpack.c.b16 %v758, %v754
  %v1015 = vpack.c.b16 %v763, %v759
  %v1016 = vpack.c.b16 %v764, %v760
  %v1017 = vpack.c.b16 %v765, %v761
  %v1018 = vpack.c.b16 %v766, %v762
  %v1019 = vpack.c.b16 %v771, %v767
  %v1020 = vpack.c.b16 %v772, %v768
  %v1021 = vpack.c.b16 %v773, %v769
  %v1022 = vpack.c.b16 %v774, %v770
  %v1023 = vpack.c.b16 %v779, %v775
  %v1024 = vpack.c.b16 %v780, %v776
  %v1025 = vpack.c.b16 %v781, %v777
  %v1026 = vpack.c.b16 %v782, %v778
  %v1027 = vpack.c.b16 %v787, %v783
  %v1028 = vpack.c.b16 %v788, %v784
  %v1029 = vpack.c.b16 %v789, %v785
  %v1030 = vpack.c.b16 %v790, %v786
  %v1031 = vpack.c.b16 %v795, %v791
  %v1032 = vpack.c.b16 %v796, %v792
  %v1033 = vpack.c.b16 %v797, %v793
  %v1034 = vpack.c.b16 %v798, %v794
  %v1035 = vpack.c.b16 %v803, %v799
  %v1036 = vpack.c.b16 %v804, %v800
  %v1037 = vpack.c.b16 %v805, %v801
  %v1038 = vpack.c.b16 %v806, %v802
  %v1039 = vpack.c.b16 %v811, %v807
  %v1040 = vpack.c.b16 %v812, %v808
  %v1041 = vpack.c.b16 %v813, %v809
  %v1042 = vpack.c.b16 %v814, %v810
  %v1043 = vpack.c.b16 %v819, %v815
  %v1044 = vpack.c.b16 %v820, %v816
  %v1045 = vpack.c.b16 %v821, %v817
  %v1046 = vpack.c.b16 %v822, %v818
  %v1047 = vpack.c.b16 %v827, %v823
  %v1048 = vpack.c.b16 %v828, %v824
  %v1049 = vpack.c.b16 %v829, %v825
  %v1050 = vpack.c.b16 %v830, %v826
  %v1051 = vpack.c.b16 %v835, %v831
  %v1052 = vpack.c.b16 %v836, %v832
  %v1053 = vpack.c.b16 %v837, %v833
  %v1054 = vpack.c.b16 %v838, %v834
  %v1055 = vpack.c.b16 %v843, %v839
  %v1056 = vpack.c.b16 %v844, %v840
  %v1057 = vpack.c.b16 %v845, %v841
  %v1058 = vpack.c.b16 %v846, %v842
  %v1059 = vpack.c.b16 %v851, %v847
  %v1060 = vpack.c.b16 %v852, %v848
  %v1061 = vpack.c.b16 %v853, %v849
  %v1062 = vpack.c.b16 %v854, %v850
  %v1063 = vpack.c.b16 %v859, %v855
  %v1064 = vpack.c.b16 %v860, %v856
  %v1065 = vpack.c.b16 %v861, %v857
  %v1066 = vpack.c.b16 %v862, %v858
  %v1067 = vpack.c.b16 %v867, %v863
  %v1068 = vpack.c.b16 %v868, %v864
  %v1069 = vpack.c.b16 %v869, %v865
  %v1070 = vpack.c.b16 %v870, %v866
  %vm1271 = vcmask 261120
  %v1273 = vsel %vm1271, %v264, 0
  %1275 = vmatprep.subr.bf16.mxu0 %v872
  %1276 = vmatpush1.bf16.msra.mxu0 %v871
  %1277 = vmatprep.subr.bf16.mxu0 %v876
  %1278 = vmatpush1.bf16.msra.mxu0 %v875
  %1279 = vmatprep.subr.bf16.mxu0 %v880
  %1280 = vmatpush1.bf16.msra.mxu0 %v879
  %1281 = vmatprep.subr.bf16.mxu0 %v884
  %1282 = vmatpush1.bf16.msra.mxu0 %v883
  %1283 = vmatprep.subr.bf16.mxu0 %v888
  %1284 = vmatpush1.bf16.msra.mxu0 %v887
  %1285 = vmatprep.subr.bf16.mxu0 %v892
  %1286 = vmatpush1.bf16.msra.mxu0 %v891
  %1287 = vmatprep.subr.bf16.mxu0 %v896
  %1288 = vmatpush1.bf16.msra.mxu0 %v895
  %1289 = vmatprep.subr.bf16.mxu0 %v900
  %1290 = vmatpush1.bf16.msra.mxu0 %v899
  %1291 = vmatprep.subr.bf16.mxu0 %v904
  %1292 = vmatpush1.bf16.msra.mxu0 %v903
  %1293 = vmatprep.subr.bf16.mxu0 %v908
  %1294 = vmatpush1.bf16.msra.mxu0 %v907
  %1295 = vmatprep.subr.bf16.mxu0 %v912
  %1296 = vmatpush1.bf16.msra.mxu0 %v911
  %1297 = vmatprep.subr.bf16.mxu0 %v916
  %1298 = vmatpush1.bf16.msra.mxu0 %v915
  %1299 = vmatprep.subr.bf16.mxu0 %v920
  %1300 = vmatpush1.bf16.msra.mxu0 %v919
  %1301 = vmatprep.subr.bf16.mxu0 %v924
  %1302 = vmatpush1.bf16.msra.mxu0 %v923
  %1303 = vmatprep.subr.bf16.mxu0 %v928
  %1304 = vmatpush1.bf16.msra.mxu0 %v927
  %1305 = vmatprep.subr.bf16.mxu0 %v932
  %1306 = vmatpush1.bf16.msra.mxu0 %v931
  %1307 = vmatprep.mubr.bf16.mxu0 %v259
  %1308 = vmatmul.mubr.bf16.gmra.mrb[0].mxu0 %v258
  %v1309 = vpop.f32.mrb[0].mxu0
  %v1310 = vadd.f32 %v230, %v1309
  %v1311 = vpop.f32.mrb[0].mxu0
  %v1312 = vadd.f32 %v234, %v1311
  %v1313 = vpop.f32.mrb[0].mxu0
  %v1314 = vpop.f32.mrb[0].mxu0
  %1315 = vdwg.mxu0
  %1316 = vmatprep.subr.bf16.mxu0 %v936
  %1317 = vmatpush1.bf16.msra.mxu0 %v935
  %1318 = vmatprep.subr.bf16.mxu0 %v940
  %1319 = vmatpush1.bf16.msra.mxu0 %v939
  %1320 = vmatprep.subr.bf16.mxu0 %v944
  %1321 = vmatpush1.bf16.msra.mxu0 %v943
  %1322 = vmatprep.subr.bf16.mxu0 %v948
  %1323 = vmatpush1.bf16.msra.mxu0 %v947
  %1324 = vmatprep.subr.bf16.mxu0 %v952
  %1325 = vmatpush1.bf16.msra.mxu0 %v951
  %1326 = vmatprep.subr.bf16.mxu0 %v956
  %1327 = vmatpush1.bf16.msra.mxu0 %v955
  %1328 = vmatprep.subr.bf16.mxu0 %v960
  %1329 = vmatpush1.bf16.msra.mxu0 %v959
  %1330 = vmatprep.subr.bf16.mxu0 %v964
  %1331 = vmatpush1.bf16.msra.mxu0 %v963
  %1332 = vmatprep.subr.bf16.mxu0 %v968
  %1333 = vmatpush1.bf16.msra.mxu0 %v967
  %1334 = vmatprep.subr.bf16.mxu0 %v972
  %1335 = vmatpush1.bf16.msra.mxu0 %v971
  %1336 = vmatprep.subr.bf16.mxu0 %v976
  %1337 = vmatpush1.bf16.msra.mxu0 %v975
  %1338 = vmatprep.subr.bf16.mxu0 %v980
  %1339 = vmatpush1.bf16.msra.mxu0 %v979
  %1340 = vmatprep.subr.bf16.mxu0 %v984
  %1341 = vmatpush1.bf16.msra.mxu0 %v983
  %1342 = vmatprep.subr.bf16.mxu0 %v988
  %1343 = vmatpush1.bf16.msra.mxu0 %v987
  %1344 = vmatprep.subr.bf16.mxu0 %v992
  %1345 = vmatpush1.bf16.msra.mxu0 %v991
  %1346 = vmatprep.subr.bf16.mxu0 %v996
  %1347 = vmatpush1.bf16.msra.mxu0 %v995
  %1348 = vmatprep.mubr.bf16.mxu0 %v261
  %1349 = vmatmul.mubr.bf16.gmra.mrb[0].mxu0 %v260
  %v1350 = vpop.f32.mrb[0].mxu0
  %v1351 = vadd.f32 %v1310, %v1350
  %v1352 = vpop.f32.mrb[0].mxu0
  %v1353 = vadd.f32 %v1312, %v1352
  %v1354 = vpop.f32.mrb[0].mxu0
  %v1355 = vpop.f32.mrb[0].mxu0
  %1356 = vdwg.mxu0
  %1357 = vmatprep.subr.bf16.mxu0 %v1000
  %1358 = vmatpush1.bf16.msra.mxu0 %v999
  %1359 = vmatprep.subr.bf16.mxu0 %v1004
  %1360 = vmatpush1.bf16.msra.mxu0 %v1003
  %1361 = vmatprep.subr.bf16.mxu0 %v1008
  %1362 = vmatpush1.bf16.msra.mxu0 %v1007
  %1363 = vmatprep.subr.bf16.mxu0 %v1012
  %1364 = vmatpush1.bf16.msra.mxu0 %v1011
  %1365 = vmatprep.subr.bf16.mxu0 %v1016
  %1366 = vmatpush1.bf16.msra.mxu0 %v1015
  %1367 = vmatprep.subr.bf16.mxu0 %v1020
  %1368 = vmatpush1.bf16.msra.mxu0 %v1019
  %1369 = vmatprep.subr.bf16.mxu0 %v1024
  %1370 = vmatpush1.bf16.msra.mxu0 %v1023
  %1371 = vmatprep.subr.bf16.mxu0 %v1028
  %1372 = vmatpush1.bf16.msra.mxu0 %v1027
  %1373 = vmatprep.subr.bf16.mxu0 %v1032
  %1374 = vmatpush1.bf16.msra.mxu0 %v1031
  %1375 = vmatprep.subr.bf16.mxu0 %v1036
  %1376 = vmatpush1.bf16.msra.mxu0 %v1035
  %1377 = vmatprep.subr.bf16.mxu0 %v1040
  %1378 = vmatpush1.bf16.msra.mxu0 %v1039
  %1379 = vmatprep.subr.bf16.mxu0 %v1044
  %1380 = vmatpush1.bf16.msra.mxu0 %v1043
  %1381 = vmatprep.subr.bf16.mxu0 %v1048
  %1382 = vmatpush1.bf16.msra.mxu0 %v1047
  %1383 = vmatprep.subr.bf16.mxu0 %v1052
  %1384 = vmatpush1.bf16.msra.mxu0 %v1051
  %1385 = vmatprep.subr.bf16.mxu0 %v1056
  %1386 = vmatpush1.bf16.msra.mxu0 %v1055
  %1387 = vmatprep.subr.bf16.mxu0 %v1060
  %1388 = vmatpush1.bf16.msra.mxu0 %v1059
  %1389 = vmatprep.mubr.bf16.mxu0 %v263
  %1390 = vmatmul.mubr.bf16.gmra.mrb[0].mxu0 %v262
  %v1391 = vpop.f32.mrb[0].mxu0
  %v1392 = vadd.f32 %v1351, %v1391
  %v1393 = vpop.f32.mrb[0].mxu0
  %v1394 = vadd.f32 %v1353, %v1393
  %v1395 = vpop.f32.mrb[0].mxu0
  %v1396 = vpop.f32.mrb[0].mxu0
  %1397 = vdwg.mxu0
  %1398 = vmatprep.subr.bf16.mxu0 %v1064
  %1399 = vmatpush1.bf16.msra.mxu0 %v1063
  %1400 = vmatprep.subr.bf16.mxu0 %v1068
  %1401 = vmatpush1.bf16.msra.mxu0 %v1067
  %1402 = vmatprep.subr.bf16.mxu0 0
  %1403 = vmatpush1.bf16.msra.mxu0 0
  %1404 = vmatprep.subr.bf16.mxu0 0
  %1405 = vmatpush1.bf16.msra.mxu0 0
  %1406 = vmatprep.subr.bf16.mxu0 0
  %1407 = vmatpush1.bf16.msra.mxu0 0
  %1408 = vmatprep.subr.bf16.mxu0 0
  %1409 = vmatpush1.bf16.msra.mxu0 0
  %1410 = vmatprep.subr.bf16.mxu0 0
  %1411 = vmatpush1.bf16.msra.mxu0 0
  %1412 = vmatprep.subr.bf16.mxu0 0
  %1413 = vmatpush1.bf16.msra.mxu0 0
  %1414 = vmatprep.subr.bf16.mxu0 0
  %1415 = vmatpush1.bf16.msra.mxu0 0
  %1416 = vmatprep.subr.bf16.mxu0 0
  %1417 = vmatpush1.bf16.msra.mxu0 0
  %1418 = vmatprep.subr.bf16.mxu0 0
  %1419 = vmatpush1.bf16.msra.mxu0 0
  %1420 = vmatprep.subr.bf16.mxu0 0
  %1421 = vmatpush1.bf16.msra.mxu0 0
  %1422 = vmatprep.subr.bf16.mxu0 0
  %1423 = vmatpush1.bf16.msra.mxu0 0
  %1424 = vmatprep.subr.bf16.mxu0 0
  %1425 = vmatpush1.bf16.msra.mxu0 0
  %1426 = vmatprep.subr.bf16.mxu0 0
  %1427 = vmatpush1.bf16.msra.mxu0 0
  %1428 = vmatprep.subr.bf16.mxu0 0
  %1429 = vmatpush1.bf16.msra.mxu0 0
  %1430 = vmatprep.mubr.bf16.mxu0 0
  %1431 = vmatmul.mubr.bf16.gmra.mrb[0].mxu0 %v1273
  %v1432 = vpop.f32.mrb[0].mxu0
  %v1433 = vadd.f32 %v1392, %v1432
  %v1434 = vpop.f32.mrb[0].mxu0
  %v1435 = vadd.f32 %v1394, %v1434
  %v1436 = vpop.f32.mrb[0].mxu0
  %v1437 = vpop.f32.mrb[0].mxu0
  %1438 = vdwg.mxu0
  %1439 = vmatprep.subr.bf16.mxu0 %v874
  %1440 = vmatpush1.bf16.msra.mxu0 %v873
  %1441 = vmatprep.subr.bf16.mxu0 %v878
  %1442 = vmatpush1.bf16.msra.mxu0 %v877
  %1443 = vmatprep.subr.bf16.mxu0 %v882
  %1444 = vmatpush1.bf16.msra.mxu0 %v881
  %1445 = vmatprep.subr.bf16.mxu0 %v886
  %1446 = vmatpush1.bf16.msra.mxu0 %v885
  %1447 = vmatprep.subr.bf16.mxu0 %v890
  %1448 = vmatpush1.bf16.msra.mxu0 %v889
  %1449 = vmatprep.subr.bf16.mxu0 %v894
  %1450 = vmatpush1.bf16.msra.mxu0 %v893
  %1451 = vmatprep.subr.bf16.mxu0 %v898
  %1452 = vmatpush1.bf16.msra.mxu0 %v897
  %1453 = vmatprep.subr.bf16.mxu0 %v902
  %1454 = vmatpush1.bf16.msra.mxu0 %v901
  %1455 = vmatprep.subr.bf16.mxu0 %v906
  %1456 = vmatpush1.bf16.msra.mxu0 %v905
  %1457 = vmatprep.subr.bf16.mxu0 %v910
  %1458 = vmatpush1.bf16.msra.mxu0 %v909
  %1459 = vmatprep.subr.bf16.mxu0 %v914
  %1460 = vmatpush1.bf16.msra.mxu0 %v913
  %1461 = vmatprep.subr.bf16.mxu0 %v918
  %1462 = vmatpush1.bf16.msra.mxu0 %v917
  %1463 = vmatprep.subr.bf16.mxu0 %v922
  %1464 = vmatpush1.bf16.msra.mxu0 %v921
  %1465 = vmatprep.subr.bf16.mxu0 %v926
  %1466 = vmatpush1.bf16.msra.mxu0 %v925
  %1467 = vmatprep.subr.bf16.mxu0 %v930
  %1468 = vmatpush1.bf16.msra.mxu0 %v929
  %1469 = vmatprep.subr.bf16.mxu0 %v934
  %1470 = vmatpush1.bf16.msra.mxu0 %v933
  %1471 = vmatprep.mubr.bf16.mxu0 %v259
  %1472 = vmatmul.mubr.bf16.gmra.mrb[0].mxu0 %v258
  %v1473 = vpop.f32.mrb[0].mxu0
  %v1474 = vadd.f32 %v238, %v1473
  %v1475 = vpop.f32.mrb[0].mxu0
  %v1476 = vadd.f32 %v242, %v1475
  %v1477 = vpop.f32.mrb[0].mxu0
  %v1478 = vpop.f32.mrb[0].mxu0
  %1479 = vdwg.mxu0
  %1480 = vmatprep.subr.bf16.mxu0 %v938
  %1481 = vmatpush1.bf16.msra.mxu0 %v937
  %1482 = vmatprep.subr.bf16.mxu0 %v942
  %1483 = vmatpush1.bf16.msra.mxu0 %v941
  %1484 = vmatprep.subr.bf16.mxu0 %v946
  %1485 = vmatpush1.bf16.msra.mxu0 %v945
  %1486 = vmatprep.subr.bf16.mxu0 %v950
  %1487 = vmatpush1.bf16.msra.mxu0 %v949
  %1488 = vmatprep.subr.bf16.mxu0 %v954
  %1489 = vmatpush1.bf16.msra.mxu0 %v953
  %1490 = vmatprep.subr.bf16.mxu0 %v958
  %1491 = vmatpush1.bf16.msra.mxu0 %v957
  %1492 = vmatprep.subr.bf16.mxu0 %v962
  %1493 = vmatpush1.bf16.msra.mxu0 %v961
  %1494 = vmatprep.subr.bf16.mxu0 %v966
  %1495 = vmatpush1.bf16.msra.mxu0 %v965
  %1496 = vmatprep.subr.bf16.mxu0 %v970
  %1497 = vmatpush1.bf16.msra.mxu0 %v969
  %1498 = vmatprep.subr.bf16.mxu0 %v974
  %1499 = vmatpush1.bf16.msra.mxu0 %v973
  %1500 = vmatprep.subr.bf16.mxu0 %v978
  %1501 = vmatpush1.bf16.msra.mxu0 %v977
  %1502 = vmatprep.subr.bf16.mxu0 %v982
  %1503 = vmatpush1.bf16.msra.mxu0 %v981
  %1504 = vmatprep.subr.bf16.mxu0 %v986
  %1505 = vmatpush1.bf16.msra.mxu0 %v985
  %1506 = vmatprep.subr.bf16.mxu0 %v990
  %1507 = vmatpush1.bf16.msra.mxu0 %v989
  %1508 = vmatprep.subr.bf16.mxu0 %v994
  %1509 = vmatpush1.bf16.msra.mxu0 %v993
  %1510 = vmatprep.subr.bf16.mxu0 %v998
  %1511 = vmatpush1.bf16.msra.mxu0 %v997
  %1512 = vmatprep.mubr.bf16.mxu0 %v261
  %1513 = vmatmul.mubr.bf16.gmra.mrb[0].mxu0 %v260
  %v1514 = vpop.f32.mrb[0].mxu0
  %v1515 = vadd.f32 %v1474, %v1514
  %v1516 = vpop.f32.mrb[0].mxu0
  %v1517 = vadd.f32 %v1476, %v1516
  %v1518 = vpop.f32.mrb[0].mxu0
  %v1519 = vpop.f32.mrb[0].mxu0
  %1520 = vdwg.mxu0
  %1521 = vmatprep.subr.bf16.mxu0 %v1002
  %1522 = vmatpush1.bf16.msra.mxu0 %v1001
  %1523 = vmatprep.subr.bf16.mxu0 %v1006
  %1524 = vmatpush1.bf16.msra.mxu0 %v1005
  %1525 = vmatprep.subr.bf16.mxu0 %v1010
  %1526 = vmatpush1.bf16.msra.mxu0 %v1009
  %1527 = vmatprep.subr.bf16.mxu0 %v1014
  %1528 = vmatpush1.bf16.msra.mxu0 %v1013
  %1529 = vmatprep.subr.bf16.mxu0 %v1018
  %1530 = vmatpush1.bf16.msra.mxu0 %v1017
  %1531 = vmatprep.subr.bf16.mxu0 %v1022
  %1532 = vmatpush1.bf16.msra.mxu0 %v1021
  %1533 = vmatprep.subr.bf16.mxu0 %v1026
  %1534 = vmatpush1.bf16.msra.mxu0 %v1025
  %1535 = vmatprep.subr.bf16.mxu0 %v1030
  %1536 = vmatpush1.bf16.msra.mxu0 %v1029
  %1537 = vmatprep.subr.bf16.mxu0 %v1034
  %1538 = vmatpush1.bf16.msra.mxu0 %v1033
  %1539 = vmatprep.subr.bf16.mxu0 %v1038
  %1540 = vmatpush1.bf16.msra.mxu0 %v1037
  %1541 = vmatprep.subr.bf16.mxu0 %v1042
  %1542 = vmatpush1.bf16.msra.mxu0 %v1041
  %1543 = vmatprep.subr.bf16.mxu0 %v1046
  %1544 = vmatpush1.bf16.msra.mxu0 %v1045
  %1545 = vmatprep.subr.bf16.mxu0 %v1050
  %1546 = vmatpush1.bf16.msra.mxu0 %v1049
  %1547 = vmatprep.subr.bf16.mxu0 %v1054
  %1548 = vmatpush1.bf16.msra.mxu0 %v1053
  %1549 = vmatprep.subr.bf16.mxu0 %v1058
  %1550 = vmatpush1.bf16.msra.mxu0 %v1057
  %1551 = vmatprep.subr.bf16.mxu0 %v1062
  %1552 = vmatpush1.bf16.msra.mxu0 %v1061
  %1553 = vmatprep.mubr.bf16.mxu0 %v263
  %1554 = vmatmul.mubr.bf16.gmra.mrb[0].mxu0 %v262
  %v1555 = vpop.f32.mrb[0].mxu0
  %v1556 = vadd.f32 %v1515, %v1555
  %v1557 = vpop.f32.mrb[0].mxu0
  %v1558 = vadd.f32 %v1517, %v1557
  %v1559 = vpop.f32.mrb[0].mxu0
  %v1560 = vpop.f32.mrb[0].mxu0
  %1561 = vdwg.mxu0
  %1562 = vmatprep.subr.bf16.mxu0 %v1066
  %1563 = vmatpush1.bf16.msra.mxu0 %v1065
  %1564 = vmatprep.subr.bf16.mxu0 %v1070
  %1565 = vmatpush1.bf16.msra.mxu0 %v1069
  %1566 = vmatprep.subr.bf16.mxu0 0
  %1567 = vmatpush1.bf16.msra.mxu0 0
  %1568 = vmatprep.subr.bf16.mxu0 0
  %1569 = vmatpush1.bf16.msra.mxu0 0
  %1570 = vmatprep.subr.bf16.mxu0 0
  %1571 = vmatpush1.bf16.msra.mxu0 0
  %1572 = vmatprep.subr.bf16.mxu0 0
  %1573 = vmatpush1.bf16.msra.mxu0 0
  %1574 = vmatprep.subr.bf16.mxu0 0
  %1575 = vmatpush1.bf16.msra.mxu0 0
  %1576 = vmatprep.subr.bf16.mxu0 0
  %1577 = vmatpush1.bf16.msra.mxu0 0
  %1578 = vmatprep.subr.bf16.mxu0 0
  %1579 = vmatpush1.bf16.msra.mxu0 0
  %1580 = vmatprep.subr.bf16.mxu0 0
  %1581 = vmatpush1.bf16.msra.mxu0 0
  %1582 = vmatprep.subr.bf16.mxu0 0
  %1583 = vmatpush1.bf16.msra.mxu0 0
  %1584 = vmatprep.subr.bf16.mxu0 0
  %1585 = vmatpush1.bf16.msra.mxu0 0
  %1586 = vmatprep.subr.bf16.mxu0 0
  %1587 = vmatpush1.bf16.msra.mxu0 0
  %1588 = vmatprep.subr.bf16.mxu0 0
  %1589 = vmatpush1.bf16.msra.mxu0 0
  %1590 = vmatprep.subr.bf16.mxu0 0
  %1591 = vmatpush1.bf16.msra.mxu0 0
  %1592 = vmatprep.subr.bf16.mxu0 0
  %1593 = vmatpush1.bf16.msra.mxu0 0
  %1594 = vmatprep.mubr.bf16.mxu0 0
  %1595 = vmatmul.mubr.bf16.gmra.mrb[0].mxu0 %v1273
  %v1596 = vpop.f32.mrb[0].mxu0
  %v1597 = vadd.f32 %v1556, %v1596
  %v1598 = vpop.f32.mrb[0].mxu0
  %v1599 = vadd.f32 %v1558, %v1598
  %v1600 = vpop.f32.mrb[0].mxu0
  %v1601 = vpop.f32.mrb[0].mxu0
  %1602 = vdwg.mxu0
  %v1603 = vmax.f32 %v1433, 0.0
  %v1604 = vmax.f32 %v1435, 0.0
  %v1605 = vmax.f32 %v1597, 0.0
  %v1606 = vmax.f32 %v1599, 0.0
  %v1607 = vpack.c.bf16 %v1603, %v1603
  %v1608 = vpack.c.bf16 %v1604, %v1604
  %v1609 = vpack.c.bf16 %v1605, %v1605
  %v1610 = vpack.c.bf16 %v1606, %v1606
  %v1611 = vld [vmem:[%s3] sm:$0xf]
  %v1612 = vld [vmem:[%s3 + $0x4] sm:$0xf]
  %v1613 = vld [vmem:[%s3 + $0x8] sm:$0xf]
  %v1614 = vld [vmem:[%s3 + $0xc] sm:$0xf]
  %v1615 = vld [vmem:[%s3 + $0x10] sm:$0xf]
  %v1616 = vld [vmem:[%s3 + $0x14] sm:$0xf]
  %v1617 = vld [vmem:[%s3 + $0x18] sm:$0xf]
  %v1618 = vld [vmem:[%s3 + $0x1c] sm:$0xf]
  %v1619 = vld [vmem:[%s3 + $0x20] sm:$0xf]
  %v1620 = vld [vmem:[%s3 + $0x24] sm:$0xf]
  %v1621 = vld [vmem:[%s3 + $0x28] sm:$0xf]
  %v1622 = vld [vmem:[%s3 + $0x2c] sm:$0xf]
  %v1623 = vld [vmem:[%s3 + $0x30] sm:$0xf]
  %v1624 = vld [vmem:[%s3 + $0x34] sm:$0xf]
  %v1625 = vld [vmem:[%s3 + $0x38] sm:$0xf]
  %v1626 = vld [vmem:[%s3 + $0x3c] sm:$0xf]
  %v1627 = vld [vmem:[%s3 + $0x40] sm:$0xf]
  %v1628 = vld [vmem:[%s3 + $0x44] sm:$0xf]
  %v1629 = vld [vmem:[%s3 + $0x48] sm:$0xf]
  %v1630 = vld [vmem:[%s3 + $0x4c] sm:$0xf]
  %v1631 = vld [vmem:[%s3 + $0x50] sm:$0xf]
  %v1632 = vld [vmem:[%s3 + $0x54] sm:$0xf]
  %v1633 = vld [vmem:[%s3 + $0x58] sm:$0xf]
  %v1634 = vld [vmem:[%s3 + $0x5c] sm:$0xf]
  %v1635 = vld [vmem:[%s3 + $0x60] sm:$0xf]
  %v1636 = vld [vmem:[%s3 + $0x64] sm:$0xf]
  %v1637 = vld [vmem:[%s3 + $0x68] sm:$0xf]
  %v1638 = vld [vmem:[%s3 + $0x6c] sm:$0xf]
  %v1639 = vld [vmem:[%s3 + $0x70] sm:$0xf]
  %v1640 = vld [vmem:[%s3 + $0x74] sm:$0xf]
  %v1641 = vld [vmem:[%s3 + $0x78] sm:$0xf]
  %v1642 = vld [vmem:[%s3 + $0x7c] sm:$0xf]
  %v1643 = vld [vmem:[%s3 + $0x80] sm:$0xf]
  %v1644 = vld [vmem:[%s3 + $0x84] sm:$0xf]
  %v1645 = vld [vmem:[%s3 + $0x88] sm:$0xf]
  %v1646 = vld [vmem:[%s3 + $0x8c] sm:$0xf]
  %v1647 = vld [vmem:[%s3 + $0x90] sm:$0xf]
  %v1648 = vld [vmem:[%s3 + $0x94] sm:$0xf]
  %v1649 = vld [vmem:[%s3 + $0x98] sm:$0xf]
  %v1650 = vld [vmem:[%s3 + $0x9c] sm:$0xf]
  %v1651 = vld [vmem:[%s3 + $0xa0] sm:$0xf]
  %v1652 = vld [vmem:[%s3 + $0xa4] sm:$0xf]
  %v1653 = vld [vmem:[%s3 + $0xa8] sm:$0xf]
  %v1654 = vld [vmem:[%s3 + $0xac] sm:$0xf]
  %v1655 = vld [vmem:[%s3 + $0xb0] sm:$0xf]
  %v1656 = vld [vmem:[%s3 + $0xb4] sm:$0xf]
  %v1657 = vld [vmem:[%s3 + $0xb8] sm:$0xf]
  %v1658 = vld [vmem:[%s3 + $0xbc] sm:$0xf]
  %v1659 = vld [vmem:[%s3 + $0xc0] sm:$0xf]
  %v1660 = vld [vmem:[%s3 + $0xc4] sm:$0xf]
  %v1661 = vld [vmem:[%s3 + $0xc8] sm:$0xf]
  %v1662 = vld [vmem:[%s3 + $0xcc] sm:$0xf]
  %v1663 = vld [vmem:[%s3 + $0xd0] sm:$0xf]
  %v1664 = vld [vmem:[%s3 + $0xd4] sm:$0xf]
  %v1665 = vld [vmem:[%s3 + $0xd8] sm:$0xf]
  %v1666 = vld [vmem:[%s3 + $0xdc] sm:$0xf]
  %v1667 = vld [vmem:[%s3 + $0xe0] sm:$0xf]
  %v1668 = vld [vmem:[%s3 + $0xe4] sm:$0xf]
  %v1669 = vld [vmem:[%s3 + $0xe8] sm:$0xf]
  %v1670 = vld [vmem:[%s3 + $0xec] sm:$0xf]
  %v1671 = vld [vmem:[%s3 + $0xf0] sm:$0xf]
  %v1672 = vld [vmem:[%s3 + $0xf4] sm:$0xf]
  %v1673 = vld [vmem:[%s3 + $0xf8] sm:$0xf]
  %v1674 = vld [vmem:[%s3 + $0xfc] sm:$0xf]
  %v1675 = vld [vmem:[%s4] sm:$0x1]
  %v1677 = vlaneseq
  %v1678 = vshrl.u32 %v1677, 7
  %v1679 = vsub.s32 0, %v1678
  %v1680 = vrot.slane %v1675, %v1679
  %v1746 = vunpack.c.l.b16 %v1611
  %v1747 = vunpack.c.l.b16 %v1612
  %v1748 = vunpack.c.l.b16 %v1613
  %v1749 = vunpack.c.l.b16 %v1614
  %v1750 = vunpack.c.l.b16 %v1615
  %v1751 = vunpack.c.l.b16 %v1616
  %v1752 = vunpack.c.l.b16 %v1617
  %v1753 = vunpack.c.l.b16 %v1618
  %v1754 = vunpack.c.l.b16 %v1619
  %v1755 = vunpack.c.l.b16 %v1620
  %v1756 = vunpack.c.l.b16 %v1621
  %v1757 = vunpack.c.l.b16 %v1622
  %v1758 = vunpack.c.l.b16 %v1623
  %v1759 = vunpack.c.l.b16 %v1624
  %v1760 = vunpack.c.l.b16 %v1625
  %v1761 = vunpack.c.l.b16 %v1626
  %v1762 = vunpack.c.l.b16 %v1627
  %v1763 = vunpack.c.l.b16 %v1628
  %v1764 = vunpack.c.l.b16 %v1629
  %v1765 = vunpack.c.l.b16 %v1630
  %v1766 = vunpack.c.l.b16 %v1631
  %v1767 = vunpack.c.l.b16 %v1632
  %v1768 = vunpack.c.l.b16 %v1633
  %v1769 = vunpack.c.l.b16 %v1634
  %v1770 = vunpack.c.l.b16 %v1635
  %v1771 = vunpack.c.l.b16 %v1636
  %v1772 = vunpack.c.l.b16 %v1637
  %v1773 = vunpack.c.l.b16 %v1638
  %v1774 = vunpack.c.l.b16 %v1639
  %v1775 = vunpack.c.l.b16 %v1640
  %v1776 = vunpack.c.l.b16 %v1641
  %v1777 = vunpack.c.l.b16 %v1642
  %v1778 = vunpack.c.l.b16 %v1643
  %v1779 = vunpack.c.l.b16 %v1644
  %v1780 = vunpack.c.l.b16 %v1645
  %v1781 = vunpack.c.l.b16 %v1646
  %v1782 = vunpack.c.l.b16 %v1647
  %v1783 = vunpack.c.l.b16 %v1648
  %v1784 = vunpack.c.l.b16 %v1649
  %v1785 = vunpack.c.l.b16 %v1650
  %v1786 = vunpack.c.l.b16 %v1651
  %v1787 = vunpack.c.l.b16 %v1652
  %v1788 = vunpack.c.l.b16 %v1653
  %v1789 = vunpack.c.l.b16 %v1654
  %v1790 = vunpack.c.l.b16 %v1655
  %v1791 = vunpack.c.l.b16 %v1656
  %v1792 = vunpack.c.l.b16 %v1657
  %v1793 = vunpack.c.l.b16 %v1658
  %v1794 = vunpack.c.l.b16 %v1659
  %v1795 = vunpack.c.l.b16 %v1660
  %v1796 = vunpack.c.l.b16 %v1661
  %v1797 = vunpack.c.l.b16 %v1662
  %v1798 = vunpack.c.l.b16 %v1663
  %v1799 = vunpack.c.l.b16 %v1664
  %v1800 = vunpack.c.l.b16 %v1665
  %v1801 = vunpack.c.l.b16 %v1666
  %v1802 = vunpack.c.l.b16 %v1667
  %v1803 = vunpack.c.l.b16 %v1668
  %v1804 = vunpack.c.l.b16 %v1669
  %v1805 = vunpack.c.l.b16 %v1670
  %v1806 = vunpack.c.l.b16 %v1671
  %v1807 = vunpack.c.l.b16 %v1672
  %v1808 = vunpack.c.l.b16 %v1673
  %v1809 = vunpack.c.l.b16 %v1674
  %v1810 = vpack.c.b16 %v1747, %v1746
  %v1811 = vpack.c.b16 %v1749, %v1748
  %v1812 = vpack.c.b16 %v1751, %v1750
  %v1813 = vpack.c.b16 %v1753, %v1752
  %v1814 = vpack.c.b16 %v1755, %v1754
  %v1815 = vpack.c.b16 %v1757, %v1756
  %v1816 = vpack.c.b16 %v1759, %v1758
  %v1817 = vpack.c.b16 %v1761, %v1760
  %v1818 = vpack.c.b16 %v1763, %v1762
  %v1819 = vpack.c.b16 %v1765, %v1764
  %v1820 = vpack.c.b16 %v1767, %v1766
  %v1821 = vpack.c.b16 %v1769, %v1768
  %v1822 = vpack.c.b16 %v1771, %v1770
  %v1823 = vpack.c.b16 %v1773, %v1772
  %v1824 = vpack.c.b16 %v1775, %v1774
  %v1825 = vpack.c.b16 %v1777, %v1776
  %v1826 = vpack.c.b16 %v1779, %v1778
  %v1827 = vpack.c.b16 %v1781, %v1780
  %v1828 = vpack.c.b16 %v1783, %v1782
  %v1829 = vpack.c.b16 %v1785, %v1784
  %v1830 = vpack.c.b16 %v1787, %v1786
  %v1831 = vpack.c.b16 %v1789, %v1788
  %v1832 = vpack.c.b16 %v1791, %v1790
  %v1833 = vpack.c.b16 %v1793, %v1792
  %v1834 = vpack.c.b16 %v1795, %v1794
  %v1835 = vpack.c.b16 %v1797, %v1796
  %v1836 = vpack.c.b16 %v1799, %v1798
  %v1837 = vpack.c.b16 %v1801, %v1800
  %v1838 = vpack.c.b16 %v1803, %v1802
  %v1839 = vpack.c.b16 %v1805, %v1804
  %v1840 = vpack.c.b16 %v1807, %v1806
  %v1841 = vpack.c.b16 %v1809, %v1808
  %1874 = vmatprep.subr.bf16.mxu0 0
  %1875 = vmatpush1.bf16.msra.mxu0 %v1810
  %1876 = vmatprep.subr.bf16.mxu0 0
  %1877 = vmatpush1.bf16.msra.mxu0 %v1811
  %1878 = vmatprep.subr.bf16.mxu0 0
  %1879 = vmatpush1.bf16.msra.mxu0 %v1812
  %1880 = vmatprep.subr.bf16.mxu0 0
  %1881 = vmatpush1.bf16.msra.mxu0 %v1813
  %1882 = vmatprep.subr.bf16.mxu0 0
  %1883 = vmatpush1.bf16.msra.mxu0 %v1814
  %1884 = vmatprep.subr.bf16.mxu0 0
  %1885 = vmatpush1.bf16.msra.mxu0 %v1815
  %1886 = vmatprep.subr.bf16.mxu0 0
  %1887 = vmatpush1.bf16.msra.mxu0 %v1816
  %1888 = vmatprep.subr.bf16.mxu0 0
  %1889 = vmatpush1.bf16.msra.mxu0 %v1817
  %1890 = vmatprep.subr.bf16.mxu0 0
  %1891 = vmatpush1.bf16.msra.mxu0 %v1818
  %1892 = vmatprep.subr.bf16.mxu0 0
  %1893 = vmatpush1.bf16.msra.mxu0 %v1819
  %1894 = vmatprep.subr.bf16.mxu0 0
  %1895 = vmatpush1.bf16.msra.mxu0 %v1820
  %1896 = vmatprep.subr.bf16.mxu0 0
  %1897 = vmatpush1.bf16.msra.mxu0 %v1821
  %1898 = vmatprep.subr.bf16.mxu0 0
  %1899 = vmatpush1.bf16.msra.mxu0 %v1822
  %1900 = vmatprep.subr.bf16.mxu0 0
  %1901 = vmatpush1.bf16.msra.mxu0 %v1823
  %1902 = vmatprep.subr.bf16.mxu0 0
  %1903 = vmatpush1.bf16.msra.mxu0 %v1824
  %1904 = vmatprep.subr.bf16.mxu0 0
  %1905 = vmatpush1.bf16.msra.mxu0 %v1825
  %1906 = vmatprep.mubr.bf16.mxu0 %v1608
  %1907 = vmatmul.mubr.bf16.gmra.mrb[0].mxu0 %v1607
  %v1908 = vpop.f32.mrb[0].mxu0
  %v1909 = vadd.f32 %v1680, %v1908
  %v1910 = vpop.f32.mrb[0].mxu0
  %v1911 = vpop.f32.mrb[0].mxu0
  %v1912 = vpop.f32.mrb[0].mxu0
  %1913 = vdwg.mxu0
  %1914 = vmatprep.subr.bf16.mxu0 0
  %1915 = vmatpush1.bf16.msra.mxu0 %v1826
  %1916 = vmatprep.subr.bf16.mxu0 0
  %1917 = vmatpush1.bf16.msra.mxu0 %v1827
  %1918 = vmatprep.subr.bf16.mxu0 0
  %1919 = vmatpush1.bf16.msra.mxu0 %v1828
  %1920 = vmatprep.subr.bf16.mxu0 0
  %1921 = vmatpush1.bf16.msra.mxu0 %v1829
  %1922 = vmatprep.subr.bf16.mxu0 0
  %1923 = vmatpush1.bf16.msra.mxu0 %v1830
  %1924 = vmatprep.subr.bf16.mxu0 0
  %1925 = vmatpush1.bf16.msra.mxu0 %v1831
  %1926 = vmatprep.subr.bf16.mxu0 0
  %1927 = vmatpush1.bf16.msra.mxu0 %v1832
  %1928 = vmatprep.subr.bf16.mxu0 0
  %1929 = vmatpush1.bf16.msra.mxu0 %v1833
  %1930 = vmatprep.subr.bf16.mxu0 0
  %1931 = vmatpush1.bf16.msra.mxu0 %v1834
  %1932 = vmatprep.subr.bf16.mxu0 0
  %1933 = vmatpush1.bf16.msra.mxu0 %v1835
  %1934 = vmatprep.subr.bf16.mxu0 0
  %1935 = vmatpush1.bf16.msra.mxu0 %v1836
  %1936 = vmatprep.subr.bf16.mxu0 0
  %1937 = vmatpush1.bf16.msra.mxu0 %v1837
  %1938 = vmatprep.subr.bf16.mxu0 0
  %1939 = vmatpush1.bf16.msra.mxu0 %v1838
  %1940 = vmatprep.subr.bf16.mxu0 0
  %1941 = vmatpush1.bf16.msra.mxu0 %v1839
  %1942 = vmatprep.subr.bf16.mxu0 0
  %1943 = vmatpush1.bf16.msra.mxu0 %v1840
  %1944 = vmatprep.subr.bf16.mxu0 0
  %1945 = vmatpush1.bf16.msra.mxu0 %v1841
  %1946 = vmatprep.mubr.bf16.mxu0 %v1610
  %1947 = vmatmul.mubr.bf16.gmra.mrb[0].mxu0 %v1609
  %v1948 = vpop.f32.mrb[0].mxu0
  %v1949 = vadd.f32 %v1909, %v1948
  %v1950 = vpop.f32.mrb[0].mxu0
  %v1951 = vpop.f32.mrb[0].mxu0
  %v1952 = vpop.f32.mrb[0].mxu0
  %1953 = vdwg.mxu0
  %1954 = vmax.xlane.f32.xlu0 %v1949
  %v1955 = vpop.xlane.xlu0 %1954
  %v1956 = vsub.f32 %v1949, %v1955
  %v1957 = vmul.f32 %v1956, 1.442695
  %v1958 = vpow.pop %v1957
  %1959 = vadd.xlane.f32.xlu0 %v1958
  %v1960 = vpop.xlane.xlu0 %1959
  %v1961 = vlog2.pop %v1960
  %v1962 = vmul.f32 %v1961, 0.6931472
  %v1963 = vsub.f32 %v1956, %v1962
  %1964 = vst [vmem:[%s5] sm:$0xff] %v1963
  // Predicated region
  $region22: #{net_forward.5} parent=0 // pred_check
    _
  $region23: #{net_forward.5} parent=0 // pred_check_branch
    %1966 = sbr.rel (0) target = $region25
  $region24: #{net_forward.5} parent=0 // pred_region
    _
  $region25: #{net_forward.5} parent=0 // pred_fallthru
    _
  // Predicated region
  $region26: #{net_forward.5} parent=0 // pred_check
    _
  $region27: #{net_forward.5} parent=0 // pred_check_branch
    %1968 = sbr.rel (0) target = $region29
  $region28: #{net_forward.5} parent=0 // pred_region
    _
  $region29: #{net_forward.5} parent=0 // pred_fallthru
    _

</llo_original>
